<compile_context>
chip_gen: v7x
topology: tpu7x:2x2x1
jax: 0.10.0
libtpu: 0.0.40
codegen_flags: <defaults>
</compile_context>

<pallas_src>
import functools

import jax
import jax.numpy as jnp
from jax.experimental import pallas as pl
from jax.experimental.pallas import tpu as pltpu


# explicit scoped-VMEM budget; conservative so double-buffering survives on
# v7x's 64 MiB VMEM while being a no-op on v5e/v6e (128 MiB).
_VMEM_LIMIT = 32 * 1024 * 1024


def _cparams(n_axes):
    return pltpu.CompilerParams(
        dimension_semantics=("parallel",) * n_axes,
        vmem_limit_bytes=_VMEM_LIMIT)


def _pick_tile(extent, target):
    # largest divisor of `extent` that is <= target (>= 1)
    t = max(1, min(extent, target))
    while extent % t:
        t -= 1
    return t


def _pick_rows(h, w):
    # lane-dense output tiles (full W, full C); >= 2 H-tiles when possible so
    # v7x's two TensorCores both get work even at batch 1-2; cap ~8K output
    # pixels per tile to keep (in + out) x 2 buffers well inside VMEM.
    target = max(8, min(h // 2 if h >= 16 else h, max(1, 8192 // max(w, 1))))
    return _pick_tile(h, target)


# ----------------------------------------------------------------------------
# Pallas kernels
# ----------------------------------------------------------------------------
def _pfn_kernel(x_ref, mask_ref, w_ref, bias_ref, o_ref):
    # x: (TP, M, D) padded/augmented point features (bf16), mask: (TP, M)
    x = x_ref[...] * mask_ref[...][:, :, None]
    y = jax.lax.dot_general(x, w_ref[...], (((2,), (0,)), ((), ())),
                            preferred_element_type=jnp.float32)
    y = jnp.maximum(y + bias_ref[...], 0.0)          # BN scale folded into W
    o_ref[...] = jnp.max(y, axis=1).astype(o_ref.dtype)   # max over points


def pfn_forward(feats, mask, w, bn_scale, bn_bias):
    P, M, D = feats.shape
    C = w.shape[1]
    Dp = 16                               # pad K from 10 -> 16 (lane friendlier)
    feats = jnp.pad(feats, ((0, 0), (0, 0), (0, Dp - D))).astype(jnp.bfloat16)
    w_f = (w.astype(jnp.float32) * bn_scale)          # fold BN scale (f32)
    w_f = jnp.pad(w_f, ((0, Dp - D), (0, 0))).astype(jnp.bfloat16)
    mask = mask.astype(jnp.bfloat16)
    tile_p = _pick_tile(P, 512)           # big tiles amortize per-step overhead
    return pl.pallas_call(
        _pfn_kernel,
        out_shape=jax.ShapeDtypeStruct((P, C), jnp.bfloat16),
        grid=(P // tile_p,),
        in_specs=[
            pl.BlockSpec((tile_p, M, Dp), lambda i: (i, 0, 0)),
            pl.BlockSpec((tile_p, M), lambda i: (i, 0)),
            pl.BlockSpec((Dp, C), lambda i: (0, 0)),
            pl.BlockSpec((1, C), lambda i: (0, 0)),
        ],
        out_specs=pl.BlockSpec((tile_p, C), lambda i: (i, 0)),
        compiler_params=_cparams(1),
    )(feats, mask, w_f, bn_bias)


def _conv3x3_kernel(x_ref, w_ref, bias_ref, o_ref, *, s, th, wo, relu):
    # x_ref: (1, s*s, Hp/s, Wp/s, Cin) phase-decomposed padded image; it stays
    # resident in VMEM across the H-tile grid axis (DMA'd from HBM only when
    # the agent index changes).  The nine (dy, dx) taps are unit-stride slices
    # of the phase planes; concatenated on channels they form a single
    # K = 9*Cin bf16 matmul with f32 accumulation.  BN scale is pre-folded
    # into w, so the epilogue is a single f32 bias add (+ ReLU).
    row0 = pl.multiple_of(pl.program_id(1) * th, th)
    taps = []
    for dy in range(3):
        for dx in range(3):
            p = (dy % s) * s + (dx % s)
            c0 = dx // s
            taps.append(x_ref[0, p, pl.ds(row0 + dy // s, th), c0:c0 + wo, :])
    xcat = jnp.concatenate(taps, axis=-1)                     # (th, wo, 9*Cin)
    y = jax.lax.dot_general(xcat, w_ref[...], (((2,), (0,)), ((), ())),
                            preferred_element_type=jnp.float32)
    y = y + bias_ref[...]
    if relu:
        y = jnp.maximum(y, 0.0)
    o_ref[0] = y.astype(o_ref.dtype)


def conv3x3_bn_relu(x, w, bn_scale, bn_bias, stride=1, relu=True):
    # x: (N, H, W, Cin), w: (3, 3, Cin, Cout), padding=1 (== ZeroPad2d(1)+conv)
    N, H, W, Cin = x.shape
    Cout = w.shape[-1]
    s = stride
    Ho = (H + 2 - 3) // s + 1
    Wo = (W + 2 - 3) // s + 1
    # pad to the exact window the taps read, rounded up to a multiple of s
    Hp = -(-((Ho - 1) * s + 3) // s) * s
    Wp = -(-((Wo - 1) * s + 3) // s) * s
    xp = jnp.pad(x.astype(jnp.bfloat16),
                 ((0, 0), (1, Hp - 1 - H), (1, Wp - 1 - W), (0, 0)))
    if s == 1:
        # stride-1: space-to-phase is the identity; avoid the transpose copy.
        xph = xp[:, None]                                   # (N, 1, Hp, Wp, Cin)
    else:
        # space-to-phase: tap (dy, dx) of a stride-s conv becomes a unit-stride
        # slice of phase plane (dy % s, dx % s) -- no 9x im2col slab in HBM.
        xph = xp.reshape(N, Hp // s, s, Wp // s, s, Cin)
        xph = xph.transpose(0, 2, 4, 1, 3, 5).reshape(N, s * s, Hp // s, Wp // s, Cin)
    # fold BN scale into the weights (f32) before the bf16 cast
    w9 = (w.reshape(9 * Cin, Cout).astype(jnp.float32) * bn_scale).astype(jnp.bfloat16)
    th = _pick_rows(Ho, Wo)
    kernel = functools.partial(_conv3x3_kernel, s=s, th=th, wo=Wo, relu=relu)
    return pl.pallas_call(
        kernel,
        out_shape=jax.ShapeDtypeStruct((N, Ho, Wo, Cout), jnp.bfloat16),
        grid=(N, Ho // th),
        in_specs=[
            pl.BlockSpec((1, s * s, Hp // s, Wp // s, Cin),
                         lambda n, i: (n, 0, 0, 0, 0)),
            pl.BlockSpec((9 * Cin, Cout), lambda n, i: (0, 0)),
            pl.BlockSpec((1, Cout), lambda n, i: (0, 0)),
        ],
        out_specs=pl.BlockSpec((1, th, Wo, Cout), lambda n, i: (n, i, 0, 0)),
        compiler_params=_cparams(2),
    )(xph, w9, bn_bias)


def _conv1x1_kernel(x_ref, w_ref, bias_ref, o_ref, *, relu):
    y = jax.lax.dot_general(x_ref[0], w_ref[...], (((2,), (0,)), ((), ())),
                            preferred_element_type=jnp.float32)
    y = y + bias_ref[...]
    if relu:
        y = jnp.maximum(y, 0.0)
    o_ref[0] = y.astype(o_ref.dtype)


def conv1x1(x, w, scale, bias, relu=False, out_dtype=jnp.bfloat16):
    # x: (N, H, W, Cin), w: (Cin, Cout).  scale/bias fold BN or conv bias;
    # scale is folded into w (f32) before the bf16 cast.
    N, H, W, Cin = x.shape
    Cout = w.shape[-1]
    w_f = (w.astype(jnp.float32) * scale).astype(jnp.bfloat16)
    th = _pick_rows(H, W)
    kernel = functools.partial(_conv1x1_kernel, relu=relu)
    return pl.pallas_call(
        kernel,
        out_shape=jax.ShapeDtypeStruct((N, H, W, Cout), out_dtype),
        grid=(N, H // th),
        in_specs=[
            pl.BlockSpec((1, th, W, Cin), lambda n, i: (n, i, 0, 0)),
            pl.BlockSpec((Cin, Cout), lambda n, i: (0, 0)),
            pl.BlockSpec((1, Cout), lambda n, i: (0, 0)),
        ],
        out_specs=pl.BlockSpec((1, th, W, Cout), lambda n, i: (n, i, 0, 0)),
        compiler_params=_cparams(2),
    )(x.astype(jnp.bfloat16), w_f, bias)


def _deconv2x2_kernel(x_ref, w_ref, bias_ref, o_ref):
    # ConvTranspose2d(k=2, s=2): out[2i+dy, 2j+dx] = x[i, j] @ W[dy, dx].
    # One (th*W, Cin) x (Cin, 2*Cout) matmul per output-row parity; the two row
    # phases are written to o[:, dy, :, :] so the upsample interleave is a free
    # row-major reshape in the wrapper (no HBM transpose round trip).
    for dy in range(2):
        y = jax.lax.dot_general(x_ref[0], w_ref[dy], (((2,), (0,)), ((), ())),
                                preferred_element_type=jnp.float32)
        y = jnp.maximum(y + bias_ref[...], 0.0)          # folded BN + ReLU
        o_ref[0, :, dy, :, :] = y.astype(o_ref.dtype)


def deconv2x2_bn_relu(x, w, scale, bias):
    # x: (N, H, W, Cin), w: (2, 2, Cin, Cout)
    N, H, W, Cin = x.shape
    Cout = w.shape[-1]
    # w2[dy, cin, dx*Cout + c] = w[dy, dx, cin, c]; BN scale folded in (f32).
    w2 = w.transpose(0, 2, 1, 3).reshape(2, Cin, 2 * Cout).astype(jnp.float32)
    scale2 = jnp.tile(scale, (1, 2))            # (1, 2*Cout), per-dx replicated
    bias2 = jnp.tile(bias, (1, 2))
    w2 = (w2 * scale2[None]).astype(jnp.bfloat16)
    th = _pick_rows(H, W)
    out = pl.pallas_call(
        _deconv2x2_kernel,
        out_shape=jax.ShapeDtypeStruct((N, H, 2, W, 2 * Cout), jnp.bfloat16),
        grid=(N, H // th),
        in_specs=[
            pl.BlockSpec((1, th, W, Cin), lambda n, i: (n, i, 0, 0)),
            pl.BlockSpec((2, Cin, 2 * Cout), lambda n, i: (0, 0, 0)),
            pl.BlockSpec((1, 2 * Cout), lambda n, i: (0, 0)),
        ],
        out_specs=pl.BlockSpec((1, th, 2, W, 2 * Cout),
                               lambda n, i: (n, i, 0, 0, 0)),
        compiler_params=_cparams(2),
    )(x.astype(jnp.bfloat16), w2, bias2)
    # (N, H, 2, W, 2*Cout) -> (N, 2H, 2W, Cout): pure row-major reshape (free).
    return out.reshape(N, 2 * H, 2 * W, Cout)


def _max_fusion_kernel(x_ref, o_ref):
    o_ref[...] = jnp.max(x_ref[...], axis=0)


def max_fusion_reduce(x):
    # x: (A, H, W, C) -> (H, W, C); tiled over H so DMA overlaps the VPU max.
    A, H, W, C = x.shape
    th = _pick_rows(H, W)
    return pl.pallas_call(
        _max_fusion_kernel,
        out_shape=jax.ShapeDtypeStruct((H, W, C), x.dtype),
        grid=(H // th,),
        in_specs=[pl.BlockSpec((A, th, W, C), lambda i: (0, i, 0, 0))],
        out_specs=pl.BlockSpec((th, W, C), lambda i: (i, 0, 0)),
        compiler_params=_cparams(1),
    )(x)


# ----------------------------------------------------------------------------
# Glue (plain JAX): feature augmentation, scatter, affine normalization, warp
# ----------------------------------------------------------------------------
def pillar_vfe(voxel_features, voxel_coords, voxel_num_points, params,
               voxel_size, lidar_range):
    P, M, _ = voxel_features.shape
    vx, vy, vz = voxel_size
    x_off = vx / 2.0 + lidar_range[0]
    y_off = vy / 2.0 + lidar_range[1]
    z_off = vz / 2.0 + lidar_range[2]
    npts = jnp.maximum(voxel_num_points, 1).astype(jnp.float32).reshape(P, 1, 1)
    pts_xyz = voxel_features[:, :, :3]
    points_mean = jnp.sum(pts_xyz, axis=1, keepdims=True) / npts
    f_cluster = pts_xyz - points_mean
    cx = voxel_coords[:, 3].astype(jnp.float32)[:, None]
    cy = voxel_coords[:, 2].astype(jnp.float32)[:, None]
    cz = voxel_coords[:, 1].astype(jnp.float32)[:, None]
    f_center = jnp.stack([
        voxel_features[:, :, 0] - (cx * vx + x_off),
        voxel_features[:, :, 1] - (cy * vy + y_off),
        voxel_features[:, :, 2] - (cz * vz + z_off),
    ], axis=-1)
    features = jnp.concatenate([voxel_features, f_cluster, f_center], axis=-1)
    mask = (jnp.arange(M)[None, :] < voxel_num_points[:, None]).astype(jnp.float32)
    return pfn_forward(features, mask, params['w'], params['bn_s'], params['bn_b'])


def point_pillar_scatter(pillar_features, voxel_coords, num_agents, ny, nx):
    # TODO(synk): the dense scatter (index put) stays in plain JAX.
    C = pillar_features.shape[-1]
    spatial = jnp.zeros((num_agents, ny, nx, C), pillar_features.dtype)
    return spatial.at[voxel_coords[:, 0], voxel_coords[:, 2],
                      voxel_coords[:, 3]].set(pillar_features)


def normalize_pairwise_tfm(pairwise_t_matrix, H, W, discrete_ratio, downsample_rate=1):
    t = pairwise_t_matrix[:, :, :, 0:2, :]
    t = jnp.take(t, jnp.array([0, 1, 3]), axis=-1)     # (B, L, L, 2, 3)
    t = t.at[..., 0, 1].multiply(H / W)
    t = t.at[..., 1, 0].multiply(W / H)
    t = t.at[..., 0, 2].set(t[..., 0, 2] / (downsample_rate * discrete_ratio * W) * 2)
    t = t.at[..., 1, 2].set(t[..., 1, 2] / (downsample_rate * discrete_ratio * H) * 2)
    return t


def warp_affine_simple(src, M, dsize):
    # TODO(synk): torch grid_sample-style bilinear gather (data-dependent) has
    # no clean Pallas equivalent; kept in plain JAX (interpolation in f32).
    Hd, Wd = dsize
    N, H, W, C = src.shape
    src_f = src.astype(jnp.float32)
    ys = jnp.linspace(-1.0, 1.0, Hd)
    xs = jnp.linspace(-1.0, 1.0, Wd)
    gy, gx = jnp.meshgrid(ys, xs, indexing='ij')
    base = jnp.stack([gx, gy, jnp.ones_like(gx)], axis=-1)      # (Hd, Wd, 3)
    coords = jnp.einsum('nij,hwj->nhwi', M, base)               # (N, Hd, Wd, 2)
    px = (coords[..., 0] + 1.0) * (W - 1) / 2.0
    py = (coords[..., 1] + 1.0) * (H - 1) / 2.0
    x0 = jnp.floor(px)
    y0 = jnp.floor(py)
    x1, y1 = x0 + 1.0, y0 + 1.0
    wx1, wy1 = px - x0, py - y0
    wx0, wy0 = 1.0 - wx1, 1.0 - wy1

    def sample(yy, xx):
        valid = ((yy >= 0) & (yy < H) & (xx >= 0) & (xx < W)).astype(jnp.float32)
        yc = jnp.clip(yy, 0, H - 1).astype(jnp.int32)
        xc = jnp.clip(xx, 0, W - 1).astype(jnp.int32)
        b = jnp.arange(N)[:, None, None]
        return src_f[b, yc, xc] * valid[..., None]

    out = (sample(y0, x0) * (wy0 * wx0)[..., None]
           + sample(y0, x1) * (wy0 * wx1)[..., None]
           + sample(y1, x0) * (wy1 * wx0)[..., None]
           + sample(y1, x1) * (wy1 * wx1)[..., None])
    return out.astype(src.dtype)


def max_fusion(x, record_len, norm_affine):
    # MaxFusion: warp all agents into ego frame, elementwise max across agents.
    _, H, W, _ = x.shape
    outs, offset = [], 0
    for b, n in enumerate(record_len):
        xx = x[offset:offset + n]
        t = norm_affine[b, :n, :n]
        xx = warp_affine_simple(xx, t[0], (H, W))
        outs.append(max_fusion_reduce(xx))
        offset += n
    return jnp.stack(outs, axis=0)


# ----------------------------------------------------------------------------
# Model: parameters + forward
# ----------------------------------------------------------------------------
def init_params(key, cfg):
    keys = iter(jax.random.split(key, 64))

    def nrm(shape, scale=0.05):
        return scale * jax.random.normal(next(keys), shape, jnp.float32)

    def bn(c):
        gamma = 1.0 + 0.05 * jax.random.normal(next(keys), (1, c), jnp.float32)
        beta = 0.05 * jax.random.normal(next(keys), (1, c), jnp.float32)
        scale = gamma / jnp.sqrt(1.0 + 1e-3)      # running_mean=0, running_var=1
        return scale, beta

    params = {}
    # PillarVFE: Linear(10, 64, bias=False) + BatchNorm1d(64)
    s, b = bn(64)
    params['pfn'] = {'w': nrm((10, 64)), 'bn_s': s, 'bn_b': b}

    # BaseBEVBackbone blocks (resnet=False)
    c_in = 64
    blocks = []
    for ln, cf in zip(cfg['layer_nums'], cfg['num_filters']):
        ws, ss, bs = [nrm((3, 3, c_in, cf))], [], []
        s, b = bn(cf)
        ss.append(s)
        bs.append(b)
        for _ in range(ln):
            ws.append(nrm((3, 3, cf, cf)))
            s, b = bn(cf)
            ss.append(s)
            bs.append(b)
        blocks.append({'w': ws, 'bn_s': ss, 'bn_b': bs})
        c_in = cf
    params['blocks'] = blocks

    # deblocks (ConvTranspose2d kernel=stride + BN + ReLU)
    deblocks = []
    for cf, uf, us in zip(cfg['num_filters'], cfg['num_upsample_filter'],
                          cfg['upsample_strides']):
        s, b = bn(uf)
        if us == 1:
            deblocks.append({'w': nrm((cf, uf)), 'bn_s': s, 'bn_b': b})
        else:
            deblocks.append({'w': nrm((us, us, cf, uf)), 'bn_s': s, 'bn_b': b})
    params['deblocks'] = deblocks

    out_c = sum(cfg['num_upsample_filter'])
    a = cfg['anchor_number']
    params['cls_head'] = {'w': nrm((out_c, a)),
                          's': jnp.ones((1, a), jnp.float32), 'b': nrm((1, a))}
    params['reg_head'] = {'w': nrm((out_c, 7 * a)),
                          's': jnp.ones((1, 7 * a), jnp.float32),
                          'b': nrm((1, 7 * a))}
    return params


def point_pillar_forward(data, params, cfg):
    record_len = data['record_len']          # static python list
    num_agents = sum(record_len)

    # 1. PillarVFE (Pallas: masked linear + BN + ReLU + max over points)
    pillar_feats = pillar_vfe(data['voxel_features'], data['voxel_coords'],
                              data['voxel_num_points'], params['pfn'],
                              cfg['voxel_size'], cfg['lidar_range'])

    # 2. PointPillarScatter -> BEV pseudo-image (NHWC, bf16)
    spatial_features = point_pillar_scatter(pillar_feats, data['voxel_coords'],
                                            num_agents, cfg['ny'], cfg['nx'])
    H0, W0 = spatial_features.shape[1], spatial_features.shape[2]
    norm_affine = normalize_pairwise_tfm(data['pairwise_t_matrix'], H0, W0,
                                         cfg['voxel_size'][0])

    # 3. backbone.get_multiscale_feature (Pallas fused 3x3 conv blocks)
    feats, x = [], spatial_features
    for i in range(len(cfg['layer_nums'])):
        blk = params['blocks'][i]
        x = conv3x3_bn_relu(x, blk['w'][0], blk['bn_s'][0], blk['bn_b'][0],
                            stride=cfg['layer_strides'][i])
        for j in range(cfg['layer_nums'][i]):
            x = conv3x3_bn_relu(x, blk['w'][j + 1], blk['bn_s'][j + 1],
                                blk['bn_b'][j + 1], stride=1)
        feats.append(x)

    # 4. per-scale MaxFusion across agents (Pallas H-tiled reduction)
    fused = [max_fusion(f, record_len, norm_affine) for f in feats]

    # 5. backbone.decode_multiscale_feature (Pallas deconv / 1x1 conv + concat)
    ups = []
    for i in range(len(cfg['layer_nums'])):
        db = params['deblocks'][i]
        if cfg['upsample_strides'][i] == 1:
            ups.append(conv1x1(fused[i], db['w'], db['bn_s'], db['bn_b'],
                               relu=True))
        else:
            ups.append(deconv2x2_bn_relu(fused[i], db['w'], db['bn_s'], db['bn_b']))
    fused_feature = jnp.concatenate(ups, axis=-1)

    # 6. heads: cls + reg fused into ONE 1x1 conv (halves HBM reads of the
    #    fused feature, wider lane-dim stores), split afterwards in JAX.
    a = cfg['anchor_number']
    head_w = jnp.concatenate([params['cls_head']['w'], params['reg_head']['w']],
                             axis=-1)
    head_s = jnp.concatenate([params['cls_head']['s'], params['reg_head']['s']],
                             axis=-1)
    head_b = jnp.concatenate([params['cls_head']['b'], params['reg_head']['b']],
                             axis=-1)
    preds = conv1x1(fused_feature, head_w, head_s, head_b, relu=False,
                    out_dtype=jnp.float32)
    psm, rm = preds[..., :a], preds[..., a:]

    # train_mode == 'coalign'; no shrink_header / compression configured.
    # TODO(synk): NaiveCompressor / NaiveReCompressor / DifussionFusion /
    # ScaledDotProductAttention definitions are not provided, so the
    # compression and diffusion branches are not reproduced here.
    return {'cls_preds': psm.transpose(0, 3, 1, 2),
            'reg_preds': rm.transpose(0, 3, 1, 2),
            'feature': fused_feature.astype(jnp.float32).transpose(0, 3, 1, 2)}


# ----------------------------------------------------------------------------
# main
# ----------------------------------------------------------------------------
if __name__ == "__main__":
    cfg = {
        'voxel_size': (0.4, 0.4, 4.0),
        'lidar_range': (-3.2, -3.2, -3.0, 3.2, 3.2, 1.0),
        'nx': 16, 'ny': 16,
        'layer_nums': [1, 1],
        'layer_strides': [1, 2],
        'num_filters': [64, 128],
        'upsample_strides': [1, 2],
        'num_upsample_filter': [64, 64],
        'anchor_number': 2,
    }
    key = jax.random.PRNGKey(0)
    kp, kd = jax.random.split(key)
    params = init_params(kp, cfg)

    # synthetic voxelized point cloud: 2 collaborating agents in one group
    P, M = 64, 16
    record_len = [2]
    num_agents = 2
    k1, k2, k3, k4, k5 = jax.random.split(kd, 5)
    agent_idx = jnp.repeat(jnp.arange(num_agents, dtype=jnp.int32), P // num_agents)
    cy = jax.random.randint(k1, (P,), 0, cfg['ny'], dtype=jnp.int32)
    cx = jax.random.randint(k2, (P,), 0, cfg['nx'], dtype=jnp.int32)
    voxel_coords = jnp.stack(
        [agent_idx, jnp.zeros((P,), jnp.int32), cy, cx], axis=1)
    voxel_num_points = jax.random.randint(k3, (P,), 1, M + 1, dtype=jnp.int32)
    u = jax.random.uniform(k4, (P, M, 3))
    vx, vy, vz = cfg['voxel_size']
    px = cfg['lidar_range'][0] + (cx[:, None].astype(jnp.float32) + u[..., 0]) * vx
    py = cfg['lidar_range'][1] + (cy[:, None].astype(jnp.float32) + u[..., 1]) * vy
    pz = cfg['lidar_range'][2] + u[..., 2] * (cfg['lidar_range'][5] - cfg['lidar_range'][2])
    inten = jax.random.uniform(k5, (P, M))
    voxel_features = jnp.stack([px, py, pz, inten], axis=-1)
    pad_mask = (jnp.arange(M)[None, :] < voxel_num_points[:, None]).astype(jnp.float32)
    voxel_features = voxel_features * pad_mask[..., None]   # zero padded points

    pairwise_t_matrix = jnp.tile(jnp.eye(4, dtype=jnp.float32)[None, None, None],
                                 (1, 2, 2, 1, 1))

    data = {
        'voxel_features': voxel_features,
        'voxel_coords': voxel_coords,
        'voxel_num_points': voxel_num_points,
        'record_len': record_len,
        'pairwise_t_matrix': pairwise_t_matrix,
    }

    out = point_pillar_forward(data, params, cfg)
    jax.tree_util.tree_map(jax.block_until_ready, out)
    assert out['cls_preds'].shape == (1, 2, 16, 16)
    assert out['reg_preds'].shape == (1, 14, 16, 16)
    assert out['feature'].shape == (1, 128, 16, 16)
    print("KERNEL_OK")
</pallas_src>

<mosaic_0001>
module attributes {stable_mosaic.version = 11 : i64} {
  func.func @_pfn_kernel(%arg0: i32, %arg1: memref<64x16x16xbf16, #tpu.memory_space<vmem>>, %arg2: memref<64x16xbf16, #tpu.memory_space<vmem>>, %arg3: memref<16x64xbf16, #tpu.memory_space<vmem>>, %arg4: memref<1x64xf32, #tpu.memory_space<vmem>>, %arg5: memref<64x64xbf16, #tpu.memory_space<vmem>>) attributes {dimension_semantics = [#tpu.dimension_semantics<parallel>], iteration_bounds = array<i64: 1>, scalar_prefetch = 0 : i64, scratch_operands = 0 : i64, tpu.core_type = #tpu.core_type<tc>, window_params = [{transform_indices = @transform_0, window_bounds = array<i64: 64, 16, 16>}, {transform_indices = @transform_1, window_bounds = array<i64: 64, 16>}, {pipeline_mode = #tpu.pipeline_mode<synchronous>, transform_indices = @transform_2, window_bounds = array<i64: 16, 64>}, {pipeline_mode = #tpu.pipeline_mode<synchronous>, transform_indices = @transform_3, window_bounds = array<i64: 1, 64>}, {transform_indices = @transform_4, window_bounds = array<i64: 64, 64>}]} {
    %c0 = arith.constant 0 : index
    %c0_0 = arith.constant 0 : index
    %c0_1 = arith.constant 0 : index
    %0 = vector.load %arg1[%c0, %c0_0, %c0_1] : memref<64x16x16xbf16, #tpu.memory_space<vmem>>, vector<64x16x16xbf16>
    %c0_2 = arith.constant 0 : index
    %c0_3 = arith.constant 0 : index
    %1 = vector.load %arg2[%c0_2, %c0_3] : memref<64x16xbf16, #tpu.memory_space<vmem>>, vector<64x16xbf16>
    %2 = vector.shape_cast %1 : vector<64x16xbf16> to vector<64x16x1xbf16>
    %3 = vector.broadcast %2 : vector<64x16x1xbf16> to vector<64x16x16xbf16>
    %4 = arith.mulf %0, %3 : vector<64x16x16xbf16>
    %c0_4 = arith.constant 0 : index
    %c0_5 = arith.constant 0 : index
    %5 = vector.load %arg3[%c0_4, %c0_5] : memref<16x64xbf16, #tpu.memory_space<vmem>>, vector<16x64xbf16>
    %cst = arith.constant dense<0.000000e+00> : vector<64x16x64xf32>
    %6 = tpu.matmul %4, %5, %cst {dimension_numbers = #tpu.dot_dimension_numbers<[2], [0], [0, 1], [1], [0, 0, 0, 1, 1, 1], [], []>} : vector<64x16x16xbf16>, vector<16x64xbf16>, vector<64x16x64xf32> -> vector<64x16x64xf32>
    %c0_6 = arith.constant 0 : index
    %c0_7 = arith.constant 0 : index
    %7 = vector.load %arg4[%c0_6, %c0_7] : memref<1x64xf32, #tpu.memory_space<vmem>>, vector<1x64xf32>
    %8 = vector.shape_cast %7 : vector<1x64xf32> to vector<1x1x64xf32>
    %9 = vector.broadcast %8 : vector<1x1x64xf32> to vector<64x16x64xf32>
    %10 = arith.addf %6, %9 : vector<64x16x64xf32>
    %cst_8 = arith.constant 0.000000e+00 : f32
    %11 = vector.broadcast %cst_8 : f32 to vector<64x16x64xf32>
    %12 = arith.maximumf %10, %11 : vector<64x16x64xf32>
    %cst_9 = arith.constant dense<0xFF800000> : vector<64x64xf32>
    %13 = vector.multi_reduction <maximumf>, %12, %cst_9 [1] : vector<64x16x64xf32> to vector<64x64xf32>
    %14 = arith.truncf %13 : vector<64x64xf32> to vector<64x64xbf16>
    %c0_10 = arith.constant 0 : index
    %c0_11 = arith.constant 0 : index
    %15 = vector.load %arg5[%c0_10, %c0_11] : memref<64x64xbf16, #tpu.memory_space<vmem>>, vector<64x64xbf16>
    tpu.vector_store %arg5[%c0_10, %c0_11], %14 {strides = array<i32>} : memref<64x64xbf16, #tpu.memory_space<vmem>>, vector<64x64xbf16>,
    return
  }
  func.func @transform_0(%arg0: i32) -> (i32, i32, i32) {
    %c0_i32 = arith.constant 0 : i32
    %c0_i32_0 = arith.constant 0 : i32
    %c0_i32_1 = arith.constant 0 : i32
    return %arg0, %c0_i32, %c0_i32_0 : i32, i32, i32
  }
  func.func @transform_1(%arg0: i32) -> (i32, i32) {
    %c0_i32 = arith.constant 0 : i32
    %c0_i32_0 = arith.constant 0 : i32
    return %arg0, %c0_i32 : i32, i32
  }
  func.func @transform_2(%arg0: i32) -> (i32, i32) {
    %c0_i32 = arith.constant 0 : i32
    %c0_i32_0 = arith.constant 0 : i32
    %c0_i32_1 = arith.constant 0 : i32
    return %c0_i32, %c0_i32_0 : i32, i32
  }
  func.func @transform_3(%arg0: i32) -> (i32, i32) {
    %c0_i32 = arith.constant 0 : i32
    %c0_i32_0 = arith.constant 0 : i32
    %c0_i32_1 = arith.constant 0 : i32
    return %c0_i32, %c0_i32_0 : i32, i32
  }
  func.func @transform_4(%arg0: i32) -> (i32, i32) {
    %c0_i32 = arith.constant 0 : i32
    %c0_i32_0 = arith.constant 0 : i32
    return %arg0, %c0_i32 : i32, i32
  }
}

</mosaic_0001>

<llo_original>
// kernel: tpu_custom_call.1
$region0: #{tpu_custom_call.1}
  #allocation0 [shape = 'u32[]', space=smem, size = 0x4, offset = 0x4, fixed_abs, tag = 'smem constant byte address 0x4 - core index']
  #allocation1 [shape = 'u32[144,128]{1,0:T(1,128)}', space=vmem, size = 0x12000, scoped, tag = 'internal scratch']
  %s0 = inlined_call_operand.vmem [shape: bf16[64,16,16], index: 0, kind: input, shape index: {}]
  %s1 = inlined_call_operand.vmem [shape: bf16[64,16], index: 1, kind: input, shape index: {}]
  %s2 = inlined_call_operand.vmem [shape: bf16[16,64], index: 2, kind: input, shape index: {}]
  %s3 = inlined_call_operand.vmem [shape: f32[1,64], index: 3, kind: input, shape index: {}]
  %s4 = inlined_call_operand.hbm [shape: bf16[64,64], index: 4, kind: output, shape index: {}]
  %s5 = sld [smem:[#allocation0]]
  $region26: #{tpu_custom_call.1} parent=0
    _
  %s7 = ssub.s32 1, %s5
  %s8 = scalar_select 0, %s7, %s5
  $region1: #{tpu_custom_call.1} parent=0
    #allocation2 [shape = 'u8[16384]{0}', space=vmem, size = 0x4000, scoped, tag = 'output window, operand 0, single buffered']
    #allocation3 [shape = 's32[1]{0}', space=sflag, size = 0x4, scoped, tag = 'scoped memory for tpu_custom_call.1']
    %9 = vsyncpa [#allocation3], 0
    // Predicated region
    $region2: #{tpu_custom_call.1} parent=1 // pred_check
      _
    $region3: #{tpu_custom_call.1} parent=1 // pred_check_branch
      %11 = sbr.rel (0) target = $region5
    $region4: #{tpu_custom_call.1} parent=1 // pred_region
      _
    $region5: #{tpu_custom_call.1} parent=1 // pred_fallthru
      _
    // Predicated region
    $region6: #{tpu_custom_call.1} parent=1 // pred_check
      _
    $region7: #{tpu_custom_call.1} parent=1 // pred_check_branch
      %13 = sbr.rel (0) target = $region9
    $region8: #{tpu_custom_call.1} parent=1 // pred_region
      _
    $region9: #{tpu_custom_call.1} parent=1 // pred_fallthru
      _
    // Predicated region
    $region10: #{tpu_custom_call.1} parent=1 // pred_check
      _
    $region11: #{tpu_custom_call.1} parent=1 // pred_check_branch
      %15 = sbr.rel (0) target = $region13
    $region12: #{tpu_custom_call.1} parent=1 // pred_region
      _
    $region13: #{tpu_custom_call.1} parent=1 // pred_fallthru
      _
    // Predicated region
    $region14: #{tpu_custom_call.1} parent=1 // pred_check
      _
    $region15: #{tpu_custom_call.1} parent=1 // pred_check_branch
      %17 = sbr.rel (0) target = $region17
    $region16: #{tpu_custom_call.1} parent=1 // pred_region
      _
    $region17: #{tpu_custom_call.1} parent=1 // pred_fallthru
      _
    %v19 = vld [vmem:[%s0] sm:$0xf]
    %v20 = vld [vmem:[%s0 + $0x4] sm:$0xf]
    %v21 = vld [vmem:[%s0 + $0x8] sm:$0xf]
    %v22 = vld [vmem:[%s0 + $0xc] sm:$0xf]
    %v23 = vld [vmem:[%s0 + $0x10] sm:$0xf]
    %v24 = vld [vmem:[%s0 + $0x14] sm:$0xf]
    %v25 = vld [vmem:[%s0 + $0x18] sm:$0xf]
    %v26 = vld [vmem:[%s0 + $0x1c] sm:$0xf]
    %v27 = vld [vmem:[%s0 + $0x20] sm:$0xf]
    %v28 = vld [vmem:[%s0 + $0x24] sm:$0xf]
    %v29 = vld [vmem:[%s0 + $0x28] sm:$0xf]
    %v30 = vld [vmem:[%s0 + $0x2c] sm:$0xf]
    %v31 = vld [vmem:[%s0 + $0x30] sm:$0xf]
    %v32 = vld [vmem:[%s0 + $0x34] sm:$0xf]
    %v33 = vld [vmem:[%s0 + $0x38] sm:$0xf]
    %v34 = vld [vmem:[%s0 + $0x3c] sm:$0xf]
    %v35 = vld [vmem:[%s0 + $0x40] sm:$0xf]
    %v36 = vld [vmem:[%s0 + $0x44] sm:$0xf]
    %v37 = vld [vmem:[%s0 + $0x48] sm:$0xf]
    %v38 = vld [vmem:[%s0 + $0x4c] sm:$0xf]
    %v39 = vld [vmem:[%s0 + $0x50] sm:$0xf]
    %v40 = vld [vmem:[%s0 + $0x54] sm:$0xf]
    %v41 = vld [vmem:[%s0 + $0x58] sm:$0xf]
    %v42 = vld [vmem:[%s0 + $0x5c] sm:$0xf]
    %v43 = vld [vmem:[%s0 + $0x60] sm:$0xf]
    %v44 = vld [vmem:[%s0 + $0x64] sm:$0xf]
    %v45 = vld [vmem:[%s0 + $0x68] sm:$0xf]
    %v46 = vld [vmem:[%s0 + $0x6c] sm:$0xf]
    %v47 = vld [vmem:[%s0 + $0x70] sm:$0xf]
    %v48 = vld [vmem:[%s0 + $0x74] sm:$0xf]
    %v49 = vld [vmem:[%s0 + $0x78] sm:$0xf]
    %v50 = vld [vmem:[%s0 + $0x7c] sm:$0xf]
    %v51 = vld [vmem:[%s0 + $0x80] sm:$0xf]
    %v52 = vld [vmem:[%s0 + $0x84] sm:$0xf]
    %v53 = vld [vmem:[%s0 + $0x88] sm:$0xf]
    %v54 = vld [vmem:[%s0 + $0x8c] sm:$0xf]
    %v55 = vld [vmem:[%s0 + $0x90] sm:$0xf]
    %v56 = vld [vmem:[%s0 + $0x94] sm:$0xf]
    %v57 = vld [vmem:[%s0 + $0x98] sm:$0xf]
    %v58 = vld [vmem:[%s0 + $0x9c] sm:$0xf]
    %v59 = vld [vmem:[%s0 + $0xa0] sm:$0xf]
    %v60 = vld [vmem:[%s0 + $0xa4] sm:$0xf]
    %v61 = vld [vmem:[%s0 + $0xa8] sm:$0xf]
    %v62 = vld [vmem:[%s0 + $0xac] sm:$0xf]
    %v63 = vld [vmem:[%s0 + $0xb0] sm:$0xf]
    %v64 = vld [vmem:[%s0 + $0xb4] sm:$0xf]
    %v65 = vld [vmem:[%s0 + $0xb8] sm:$0xf]
    %v66 = vld [vmem:[%s0 + $0xbc] sm:$0xf]
    %v67 = vld [vmem:[%s0 + $0xc0] sm:$0xf]
    %v68 = vld [vmem:[%s0 + $0xc4] sm:$0xf]
    %v69 = vld [vmem:[%s0 + $0xc8] sm:$0xf]
    %v70 = vld [vmem:[%s0 + $0xcc] sm:$0xf]
    %v71 = vld [vmem:[%s0 + $0xd0] sm:$0xf]
    %v72 = vld [vmem:[%s0 + $0xd4] sm:$0xf]
    %v73 = vld [vmem:[%s0 + $0xd8] sm:$0xf]
    %v74 = vld [vmem:[%s0 + $0xdc] sm:$0xf]
    %v75 = vld [vmem:[%s0 + $0xe0] sm:$0xf]
    %v76 = vld [vmem:[%s0 + $0xe4] sm:$0xf]
    %v77 = vld [vmem:[%s0 + $0xe8] sm:$0xf]
    %v78 = vld [vmem:[%s0 + $0xec] sm:$0xf]
    %v79 = vld [vmem:[%s0 + $0xf0] sm:$0xf]
    %v80 = vld [vmem:[%s0 + $0xf4] sm:$0xf]
    %v81 = vld [vmem:[%s0 + $0xf8] sm:$0xf]
    %v82 = vld [vmem:[%s0 + $0xfc] sm:$0xf]
    %v83 = vld [vmem:[%s0 + $0x100] sm:$0xf]
    %v84 = vld [vmem:[%s0 + $0x104] sm:$0xf]
    %v85 = vld [vmem:[%s0 + $0x108] sm:$0xf]
    %v86 = vld [vmem:[%s0 + $0x10c] sm:$0xf]
    %v87 = vld [vmem:[%s0 + $0x110] sm:$0xf]
    %v88 = vld [vmem:[%s0 + $0x114] sm:$0xf]
    %v89 = vld [vmem:[%s0 + $0x118] sm:$0xf]
    %v90 = vld [vmem:[%s0 + $0x11c] sm:$0xf]
    %v91 = vld [vmem:[%s0 + $0x120] sm:$0xf]
    %v92 = vld [vmem:[%s0 + $0x124] sm:$0xf]
    %v93 = vld [vmem:[%s0 + $0x128] sm:$0xf]
    %v94 = vld [vmem:[%s0 + $0x12c] sm:$0xf]
    %v95 = vld [vmem:[%s0 + $0x130] sm:$0xf]
    %v96 = vld [vmem:[%s0 + $0x134] sm:$0xf]
    %v97 = vld [vmem:[%s0 + $0x138] sm:$0xf]
    %v98 = vld [vmem:[%s0 + $0x13c] sm:$0xf]
    %v99 = vld [vmem:[%s0 + $0x140] sm:$0xf]
    %v100 = vld [vmem:[%s0 + $0x144] sm:$0xf]
    %v101 = vld [vmem:[%s0 + $0x148] sm:$0xf]
    %v102 = vld [vmem:[%s0 + $0x14c] sm:$0xf]
    %v103 = vld [vmem:[%s0 + $0x150] sm:$0xf]
    %v104 = vld [vmem:[%s0 + $0x154] sm:$0xf]
    %v105 = vld [vmem:[%s0 + $0x158] sm:$0xf]
    %v106 = vld [vmem:[%s0 + $0x15c] sm:$0xf]
    %v107 = vld [vmem:[%s0 + $0x160] sm:$0xf]
    %v108 = vld [vmem:[%s0 + $0x164] sm:$0xf]
    %v109 = vld [vmem:[%s0 + $0x168] sm:$0xf]
    %v110 = vld [vmem:[%s0 + $0x16c] sm:$0xf]
    %v111 = vld [vmem:[%s0 + $0x170] sm:$0xf]
    %v112 = vld [vmem:[%s0 + $0x174] sm:$0xf]
    %v113 = vld [vmem:[%s0 + $0x178] sm:$0xf]
    %v114 = vld [vmem:[%s0 + $0x17c] sm:$0xf]
    %v115 = vld [vmem:[%s0 + $0x180] sm:$0xf]
    %v116 = vld [vmem:[%s0 + $0x184] sm:$0xf]
    %v117 = vld [vmem:[%s0 + $0x188] sm:$0xf]
    %v118 = vld [vmem:[%s0 + $0x18c] sm:$0xf]
    %v119 = vld [vmem:[%s0 + $0x190] sm:$0xf]
    %v120 = vld [vmem:[%s0 + $0x194] sm:$0xf]
    %v121 = vld [vmem:[%s0 + $0x198] sm:$0xf]
    %v122 = vld [vmem:[%s0 + $0x19c] sm:$0xf]
    %v123 = vld [vmem:[%s0 + $0x1a0] sm:$0xf]
    %v124 = vld [vmem:[%s0 + $0x1a4] sm:$0xf]
    %v125 = vld [vmem:[%s0 + $0x1a8] sm:$0xf]
    %v126 = vld [vmem:[%s0 + $0x1ac] sm:$0xf]
    %v127 = vld [vmem:[%s0 + $0x1b0] sm:$0xf]
    %v128 = vld [vmem:[%s0 + $0x1b4] sm:$0xf]
    %v129 = vld [vmem:[%s0 + $0x1b8] sm:$0xf]
    %v130 = vld [vmem:[%s0 + $0x1bc] sm:$0xf]
    %v131 = vld [vmem:[%s0 + $0x1c0] sm:$0xf]
    %v132 = vld [vmem:[%s0 + $0x1c4] sm:$0xf]
    %v133 = vld [vmem:[%s0 + $0x1c8] sm:$0xf]
    %v134 = vld [vmem:[%s0 + $0x1cc] sm:$0xf]
    %v135 = vld [vmem:[%s0 + $0x1d0] sm:$0xf]
    %v136 = vld [vmem:[%s0 + $0x1d4] sm:$0xf]
    %v137 = vld [vmem:[%s0 + $0x1d8] sm:$0xf]
    %v138 = vld [vmem:[%s0 + $0x1dc] sm:$0xf]
    %v139 = vld [vmem:[%s0 + $0x1e0] sm:$0xf]
    %v140 = vld [vmem:[%s0 + $0x1e4] sm:$0xf]
    %v141 = vld [vmem:[%s0 + $0x1e8] sm:$0xf]
    %v142 = vld [vmem:[%s0 + $0x1ec] sm:$0xf]
    %v143 = vld [vmem:[%s0 + $0x1f0] sm:$0xf]
    %v144 = vld [vmem:[%s0 + $0x1f4] sm:$0xf]
    %v145 = vld [vmem:[%s0 + $0x1f8] sm:$0xf]
    %v146 = vld [vmem:[%s0 + $0x1fc] sm:$0xf]
    %v147 = vld [vmem:[%s1] sm:$0xf]
    %v148 = vld [vmem:[%s1 + $0x4] sm:$0xf]
    %v149 = vld [vmem:[%s1 + $0x8] sm:$0xf]
    %v150 = vld [vmem:[%s1 + $0xc] sm:$0xf]
    %v151 = vld [vmem:[%s1 + $0x10] sm:$0xf]
    %v152 = vld [vmem:[%s1 + $0x14] sm:$0xf]
    %v153 = vld [vmem:[%s1 + $0x18] sm:$0xf]
    %v154 = vld [vmem:[%s1 + $0x1c] sm:$0xf]
    %v163 = vunpack.c.l.b16 %v147
    %v164 = vunpack.c.l.b16 %v148
    %v165 = vunpack.c.l.b16 %v149
    %v166 = vunpack.c.l.b16 %v150
    %v167 = vunpack.c.l.b16 %v151
    %v168 = vunpack.c.l.b16 %v152
    %v169 = vunpack.c.l.b16 %v153
    %v170 = vunpack.c.l.b16 %v154
    %v171 = vpack.c.b16 %v164, %v163
    %v172 = vpack.c.b16 %v166, %v165
    %v173 = vpack.c.b16 %v168, %v167
    %v174 = vpack.c.b16 %v170, %v169
    %v176 = vpack.i.b16 %v171, %v171
    %v178 = vlaneseq
    %v179 = vshrl.u32 %v178, 7
    %v180 = vsub.s32 0, %v179
    %v181 = vrot.slane %v176, %v180
    %183 = vbcast.lane.c.b16.xlu0 %v181, 256
    %v184 = vpop.permute.xlu0 %183
    %v185 = vshrl.u32 %v171, 16
    %v186 = vpack.i.b16 %v185, %v185
    %v188 = vlaneseq
    %v189 = vshrl.u32 %v188, 7
    %v190 = vsub.s32 0, %v189
    %v191 = vrot.slane %v186, %v190
    %193 = vbcast.lane.c.b16.xlu0 %v191, 256
    %v194 = vpop.permute.xlu0 %193
    %v195 = vlaneseq
    %v196 = vshrl.u32 %v195, 7
    %v197 = vsub.s32 1, %v196
    %v198 = vrot.slane %v176, %v197
    %200 = vbcast.lane.c.b16.xlu0 %v198, 256
    %v201 = vpop.permute.xlu0 %200
    %v202 = vlaneseq
    %v203 = vshrl.u32 %v202, 7
    %v204 = vsub.s32 1, %v203
    %v205 = vrot.slane %v186, %v204
    %207 = vbcast.lane.c.b16.xlu0 %v205, 256
    %v208 = vpop.permute.xlu0 %207
    %v209 = vlaneseq
    %v210 = vshrl.u32 %v209, 7
    %v211 = vsub.s32 2, %v210
    %v212 = vrot.slane %v176, %v211
    %214 = vbcast.lane.c.b16.xlu0 %v212, 256
    %v215 = vpop.permute.xlu0 %214
    %v216 = vlaneseq
    %v217 = vshrl.u32 %v216, 7
    %v218 = vsub.s32 2, %v217
    %v219 = vrot.slane %v186, %v218
    %221 = vbcast.lane.c.b16.xlu0 %v219, 256
    %v222 = vpop.permute.xlu0 %221
    %v223 = vlaneseq
    %v224 = vshrl.u32 %v223, 7
    %v225 = vsub.s32 3, %v224
    %v226 = vrot.slane %v176, %v225
    %228 = vbcast.lane.c.b16.xlu0 %v226, 256
    %v229 = vpop.permute.xlu0 %228
    %v230 = vlaneseq
    %v231 = vshrl.u32 %v230, 7
    %v232 = vsub.s32 3, %v231
    %v233 = vrot.slane %v186, %v232
    %235 = vbcast.lane.c.b16.xlu0 %v233, 256
    %v236 = vpop.permute.xlu0 %235
    %v237 = vlaneseq
    %v238 = vshrl.u32 %v237, 7
    %v239 = vsub.s32 4, %v238
    %v240 = vrot.slane %v176, %v239
    %242 = vbcast.lane.c.b16.xlu0 %v240, 256
    %v243 = vpop.permute.xlu0 %242
    %v244 = vlaneseq
    %v245 = vshrl.u32 %v244, 7
    %v246 = vsub.s32 4, %v245
    %v247 = vrot.slane %v186, %v246
    %249 = vbcast.lane.c.b16.xlu0 %v247, 256
    %v250 = vpop.permute.xlu0 %249
    %v251 = vlaneseq
    %v252 = vshrl.u32 %v251, 7
    %v253 = vsub.s32 5, %v252
    %v254 = vrot.slane %v176, %v253
    %256 = vbcast.lane.c.b16.xlu0 %v254, 256
    %v257 = vpop.permute.xlu0 %256
    %v258 = vlaneseq
    %v259 = vshrl.u32 %v258, 7
    %v260 = vsub.s32 5, %v259
    %v261 = vrot.slane %v186, %v260
    %263 = vbcast.lane.c.b16.xlu0 %v261, 256
    %v264 = vpop.permute.xlu0 %263
    %v265 = vlaneseq
    %v266 = vshrl.u32 %v265, 7
    %v267 = vsub.s32 6, %v266
    %v268 = vrot.slane %v176, %v267
    %270 = vbcast.lane.c.b16.xlu0 %v268, 256
    %v271 = vpop.permute.xlu0 %270
    %v272 = vlaneseq
    %v273 = vshrl.u32 %v272, 7
    %v274 = vsub.s32 6, %v273
    %v275 = vrot.slane %v186, %v274
    %277 = vbcast.lane.c.b16.xlu0 %v275, 256
    %v278 = vpop.permute.xlu0 %277
    %v279 = vlaneseq
    %v280 = vshrl.u32 %v279, 7
    %v281 = vsub.s32 7, %v280
    %v282 = vrot.slane %v176, %v281
    %284 = vbcast.lane.c.b16.xlu0 %v282, 256
    %v285 = vpop.permute.xlu0 %284
    %v286 = vlaneseq
    %v287 = vshrl.u32 %v286, 7
    %v288 = vsub.s32 7, %v287
    %v289 = vrot.slane %v186, %v288
    %291 = vbcast.lane.c.b16.xlu0 %v289, 256
    %v292 = vpop.permute.xlu0 %291
    %v294 = vpack.i.b16 %v172, %v172
    %v296 = vlaneseq
    %v297 = vshrl.u32 %v296, 7
    %v298 = vsub.s32 0, %v297
    %v299 = vrot.slane %v294, %v298
    %301 = vbcast.lane.c.b16.xlu0 %v299, 256
    %v302 = vpop.permute.xlu0 %301
    %v303 = vshrl.u32 %v172, 16
    %v304 = vpack.i.b16 %v303, %v303
    %v306 = vlaneseq
    %v307 = vshrl.u32 %v306, 7
    %v308 = vsub.s32 0, %v307
    %v309 = vrot.slane %v304, %v308
    %311 = vbcast.lane.c.b16.xlu0 %v309, 256
    %v312 = vpop.permute.xlu0 %311
    %v313 = vlaneseq
    %v314 = vshrl.u32 %v313, 7
    %v315 = vsub.s32 1, %v314
    %v316 = vrot.slane %v294, %v315
    %318 = vbcast.lane.c.b16.xlu0 %v316, 256
    %v319 = vpop.permute.xlu0 %318
    %v320 = vlaneseq
    %v321 = vshrl.u32 %v320, 7
    %v322 = vsub.s32 1, %v321
    %v323 = vrot.slane %v304, %v322
    %325 = vbcast.lane.c.b16.xlu0 %v323, 256
    %v326 = vpop.permute.xlu0 %325
    %v327 = vlaneseq
    %v328 = vshrl.u32 %v327, 7
    %v329 = vsub.s32 2, %v328
    %v330 = vrot.slane %v294, %v329
    %332 = vbcast.lane.c.b16.xlu0 %v330, 256
    %v333 = vpop.permute.xlu0 %332
    %v334 = vlaneseq
    %v335 = vshrl.u32 %v334, 7
    %v336 = vsub.s32 2, %v335
    %v337 = vrot.slane %v304, %v336
    %339 = vbcast.lane.c.b16.xlu0 %v337, 256
    %v340 = vpop.permute.xlu0 %339
    %v341 = vlaneseq
    %v342 = vshrl.u32 %v341, 7
    %v343 = vsub.s32 3, %v342
    %v344 = vrot.slane %v294, %v343
    %346 = vbcast.lane.c.b16.xlu0 %v344, 256
    %v347 = vpop.permute.xlu0 %346
    %v348 = vlaneseq
    %v349 = vshrl.u32 %v348, 7
    %v350 = vsub.s32 3, %v349
    %v351 = vrot.slane %v304, %v350
    %353 = vbcast.lane.c.b16.xlu0 %v351, 256
    %v354 = vpop.permute.xlu0 %353
    %v355 = vlaneseq
    %v356 = vshrl.u32 %v355, 7
    %v357 = vsub.s32 4, %v356
    %v358 = vrot.slane %v294, %v357
    %360 = vbcast.lane.c.b16.xlu0 %v358, 256
    %v361 = vpop.permute.xlu0 %360
    %v362 = vlaneseq
    %v363 = vshrl.u32 %v362, 7
    %v364 = vsub.s32 4, %v363
    %v365 = vrot.slane %v304, %v364
    %367 = vbcast.lane.c.b16.xlu0 %v365, 256
    %v368 = vpop.permute.xlu0 %367
    %v369 = vlaneseq
    %v370 = vshrl.u32 %v369, 7
    %v371 = vsub.s32 5, %v370
    %v372 = vrot.slane %v294, %v371
    %374 = vbcast.lane.c.b16.xlu0 %v372, 256
    %v375 = vpop.permute.xlu0 %374
    %v376 = vlaneseq
    %v377 = vshrl.u32 %v376, 7
    %v378 = vsub.s32 5, %v377
    %v379 = vrot.slane %v304, %v378
    %381 = vbcast.lane.c.b16.xlu0 %v379, 256
    %v382 = vpop.permute.xlu0 %381
    %v383 = vlaneseq
    %v384 = vshrl.u32 %v383, 7
    %v385 = vsub.s32 6, %v384
    %v386 = vrot.slane %v294, %v385
    %388 = vbcast.lane.c.b16.xlu0 %v386, 256
    %v389 = vpop.permute.xlu0 %388
    %v390 = vlaneseq
    %v391 = vshrl.u32 %v390, 7
    %v392 = vsub.s32 6, %v391
    %v393 = vrot.slane %v304, %v392
    %395 = vbcast.lane.c.b16.xlu0 %v393, 256
    %v396 = vpop.permute.xlu0 %395
    %v397 = vlaneseq
    %v398 = vshrl.u32 %v397, 7
    %v399 = vsub.s32 7, %v398
    %v400 = vrot.slane %v294, %v399
    %402 = vbcast.lane.c.b16.xlu0 %v400, 256
    %v403 = vpop.permute.xlu0 %402
    %v404 = vlaneseq
    %v405 = vshrl.u32 %v404, 7
    %v406 = vsub.s32 7, %v405
    %v407 = vrot.slane %v304, %v406
    %409 = vbcast.lane.c.b16.xlu0 %v407, 256
    %v410 = vpop.permute.xlu0 %409
    %v412 = vpack.i.b16 %v173, %v173
    %v414 = vlaneseq
    %v415 = vshrl.u32 %v414, 7
    %v416 = vsub.s32 0, %v415
    %v417 = vrot.slane %v412, %v416
    %419 = vbcast.lane.c.b16.xlu0 %v417, 256
    %v420 = vpop.permute.xlu0 %419
    %v421 = vshrl.u32 %v173, 16
    %v422 = vpack.i.b16 %v421, %v421
    %v424 = vlaneseq
    %v425 = vshrl.u32 %v424, 7
    %v426 = vsub.s32 0, %v425
    %v427 = vrot.slane %v422, %v426
    %429 = vbcast.lane.c.b16.xlu0 %v427, 256
    %v430 = vpop.permute.xlu0 %429
    %v431 = vlaneseq
    %v432 = vshrl.u32 %v431, 7
    %v433 = vsub.s32 1, %v432
    %v434 = vrot.slane %v412, %v433
    %436 = vbcast.lane.c.b16.xlu0 %v434, 256
    %v437 = vpop.permute.xlu0 %436
    %v438 = vlaneseq
    %v439 = vshrl.u32 %v438, 7
    %v440 = vsub.s32 1, %v439
    %v441 = vrot.slane %v422, %v440
    %443 = vbcast.lane.c.b16.xlu0 %v441, 256
    %v444 = vpop.permute.xlu0 %443
    %v445 = vlaneseq
    %v446 = vshrl.u32 %v445, 7
    %v447 = vsub.s32 2, %v446
    %v448 = vrot.slane %v412, %v447
    %450 = vbcast.lane.c.b16.xlu0 %v448, 256
    %v451 = vpop.permute.xlu0 %450
    %v452 = vlaneseq
    %v453 = vshrl.u32 %v452, 7
    %v454 = vsub.s32 2, %v453
    %v455 = vrot.slane %v422, %v454
    %457 = vbcast.lane.c.b16.xlu0 %v455, 256
    %v458 = vpop.permute.xlu0 %457
    %v459 = vlaneseq
    %v460 = vshrl.u32 %v459, 7
    %v461 = vsub.s32 3, %v460
    %v462 = vrot.slane %v412, %v461
    %464 = vbcast.lane.c.b16.xlu0 %v462, 256
    %v465 = vpop.permute.xlu0 %464
    %v466 = vlaneseq
    %v467 = vshrl.u32 %v466, 7
    %v468 = vsub.s32 3, %v467
    %v469 = vrot.slane %v422, %v468
    %471 = vbcast.lane.c.b16.xlu0 %v469, 256
    %v472 = vpop.permute.xlu0 %471
    %v473 = vlaneseq
    %v474 = vshrl.u32 %v473, 7
    %v475 = vsub.s32 4, %v474
    %v476 = vrot.slane %v412, %v475
    %478 = vbcast.lane.c.b16.xlu0 %v476, 256
    %v479 = vpop.permute.xlu0 %478
    %v480 = vlaneseq
    %v481 = vshrl.u32 %v480, 7
    %v482 = vsub.s32 4, %v481
    %v483 = vrot.slane %v422, %v482
    %485 = vbcast.lane.c.b16.xlu0 %v483, 256
    %v486 = vpop.permute.xlu0 %485
    %v487 = vlaneseq
    %v488 = vshrl.u32 %v487, 7
    %v489 = vsub.s32 5, %v488
    %v490 = vrot.slane %v412, %v489
    %492 = vbcast.lane.c.b16.xlu0 %v490, 256
    %v493 = vpop.permute.xlu0 %492
    %v494 = vlaneseq
    %v495 = vshrl.u32 %v494, 7
    %v496 = vsub.s32 5, %v495
    %v497 = vrot.slane %v422, %v496
    %499 = vbcast.lane.c.b16.xlu0 %v497, 256
    %v500 = vpop.permute.xlu0 %499
    %v501 = vlaneseq
    %v502 = vshrl.u32 %v501, 7
    %v503 = vsub.s32 6, %v502
    %v504 = vrot.slane %v412, %v503
    %506 = vbcast.lane.c.b16.xlu0 %v504, 256
    %v507 = vpop.permute.xlu0 %506
    %v508 = vlaneseq
    %v509 = vshrl.u32 %v508, 7
    %v510 = vsub.s32 6, %v509
    %v511 = vrot.slane %v422, %v510
    %513 = vbcast.lane.c.b16.xlu0 %v511, 256
    %v514 = vpop.permute.xlu0 %513
    %v515 = vlaneseq
    %v516 = vshrl.u32 %v515, 7
    %v517 = vsub.s32 7, %v516
    %v518 = vrot.slane %v412, %v517
    %520 = vbcast.lane.c.b16.xlu0 %v518, 256
    %v521 = vpop.permute.xlu0 %520
    %v522 = vlaneseq
    %v523 = vshrl.u32 %v522, 7
    %v524 = vsub.s32 7, %v523
    %v525 = vrot.slane %v422, %v524
    %527 = vbcast.lane.c.b16.xlu0 %v525, 256
    %v528 = vpop.permute.xlu0 %527
    %v530 = vpack.i.b16 %v174, %v174
    %v532 = vlaneseq
    %v533 = vshrl.u32 %v532, 7
    %v534 = vsub.s32 0, %v533
    %v535 = vrot.slane %v530, %v534
    %537 = vbcast.lane.c.b16.xlu0 %v535, 256
    %v538 = vpop.permute.xlu0 %537
    %v539 = vshrl.u32 %v174, 16
    %v540 = vpack.i.b16 %v539, %v539
    %v542 = vlaneseq
    %v543 = vshrl.u32 %v542, 7
    %v544 = vsub.s32 0, %v543
    %v545 = vrot.slane %v540, %v544
    %547 = vbcast.lane.c.b16.xlu0 %v545, 256
    %v548 = vpop.permute.xlu0 %547
    %v549 = vlaneseq
    %v550 = vshrl.u32 %v549, 7
    %v551 = vsub.s32 1, %v550
    %v552 = vrot.slane %v530, %v551
    %554 = vbcast.lane.c.b16.xlu0 %v552, 256
    %v555 = vpop.permute.xlu0 %554
    %v556 = vlaneseq
    %v557 = vshrl.u32 %v556, 7
    %v558 = vsub.s32 1, %v557
    %v559 = vrot.slane %v540, %v558
    %561 = vbcast.lane.c.b16.xlu0 %v559, 256
    %v562 = vpop.permute.xlu0 %561
    %v563 = vlaneseq
    %v564 = vshrl.u32 %v563, 7
    %v565 = vsub.s32 2, %v564
    %v566 = vrot.slane %v530, %v565
    %568 = vbcast.lane.c.b16.xlu0 %v566, 256
    %v569 = vpop.permute.xlu0 %568
    %v570 = vlaneseq
    %v571 = vshrl.u32 %v570, 7
    %v572 = vsub.s32 2, %v571
    %v573 = vrot.slane %v540, %v572
    %575 = vbcast.lane.c.b16.xlu0 %v573, 256
    %v576 = vpop.permute.xlu0 %575
    %v577 = vlaneseq
    %v578 = vshrl.u32 %v577, 7
    %v579 = vsub.s32 3, %v578
    %v580 = vrot.slane %v530, %v579
    %582 = vbcast.lane.c.b16.xlu0 %v580, 256
    %v583 = vpop.permute.xlu0 %582
    %v584 = vlaneseq
    %v585 = vshrl.u32 %v584, 7
    %v586 = vsub.s32 3, %v585
    %v587 = vrot.slane %v540, %v586
    %589 = vbcast.lane.c.b16.xlu0 %v587, 256
    %v590 = vpop.permute.xlu0 %589
    %v591 = vlaneseq
    %v592 = vshrl.u32 %v591, 7
    %v593 = vsub.s32 4, %v592
    %v594 = vrot.slane %v530, %v593
    %596 = vbcast.lane.c.b16.xlu0 %v594, 256
    %v597 = vpop.permute.xlu0 %596
    %v598 = vlaneseq
    %v599 = vshrl.u32 %v598, 7
    %v600 = vsub.s32 4, %v599
    %v601 = vrot.slane %v540, %v600
    %603 = vbcast.lane.c.b16.xlu0 %v601, 256
    %v604 = vpop.permute.xlu0 %603
    %v605 = vlaneseq
    %v606 = vshrl.u32 %v605, 7
    %v607 = vsub.s32 5, %v606
    %v608 = vrot.slane %v530, %v607
    %610 = vbcast.lane.c.b16.xlu0 %v608, 256
    %v611 = vpop.permute.xlu0 %610
    %v612 = vlaneseq
    %v613 = vshrl.u32 %v612, 7
    %v614 = vsub.s32 5, %v613
    %v615 = vrot.slane %v540, %v614
    %617 = vbcast.lane.c.b16.xlu0 %v615, 256
    %v618 = vpop.permute.xlu0 %617
    %v619 = vlaneseq
    %v620 = vshrl.u32 %v619, 7
    %v621 = vsub.s32 6, %v620
    %v622 = vrot.slane %v530, %v621
    %624 = vbcast.lane.c.b16.xlu0 %v622, 256
    %v625 = vpop.permute.xlu0 %624
    %v626 = vlaneseq
    %v627 = vshrl.u32 %v626, 7
    %v628 = vsub.s32 6, %v627
    %v629 = vrot.slane %v540, %v628
    %631 = vbcast.lane.c.b16.xlu0 %v629, 256
    %v632 = vpop.permute.xlu0 %631
    %v633 = vlaneseq
    %v634 = vshrl.u32 %v633, 7
    %v635 = vsub.s32 7, %v634
    %v636 = vrot.slane %v530, %v635
    %638 = vbcast.lane.c.b16.xlu0 %v636, 256
    %v639 = vpop.permute.xlu0 %638
    %v640 = vlaneseq
    %v641 = vshrl.u32 %v640, 7
    %v642 = vsub.s32 7, %v641
    %v643 = vrot.slane %v540, %v642
    %645 = vbcast.lane.c.b16.xlu0 %v643, 256
    %v646 = vpop.permute.xlu0 %645
    %v712 = vunpack.c.l.s4 839922192
    %v713 = vunpack.c.0.s8 %v712
    %v714 = vlaneseq
    %v715 = vshrl.u32 %v714, 7
    %v716 = vsub.s32 %v713, %v715
    %v717 = vrot.slane %v184, %v716
    %v719 = vunpack.c.l.s4 1985246804
    %v720 = vunpack.c.0.s8 %v719
    %v721 = vlaneseq
    %v722 = vshrl.u32 %v721, 7
    %v723 = vsub.s32 %v720, %v722
    %v724 = vrot.slane %v184, %v723
    %v726 = vunpack.c.l.s4 839922192
    %v727 = vunpack.c.0.s8 %v726
    %v728 = vlaneseq
    %v729 = vshrl.u32 %v728, 7
    %v730 = vsub.s32 %v727, %v729
    %v731 = vrot.slane %v194, %v730
    %v733 = vunpack.c.l.s4 1985246804
    %v734 = vunpack.c.0.s8 %v733
    %v735 = vlaneseq
    %v736 = vshrl.u32 %v735, 7
    %v737 = vsub.s32 %v734, %v736
    %v738 = vrot.slane %v194, %v737
    %v740 = vunpack.c.l.s4 839922192
    %v741 = vunpack.c.0.s8 %v740
    %v742 = vlaneseq
    %v743 = vshrl.u32 %v742, 7
    %v744 = vsub.s32 %v741, %v743
    %v745 = vrot.slane %v201, %v744
    %v747 = vunpack.c.l.s4 1985246804
    %v748 = vunpack.c.0.s8 %v747
    %v749 = vlaneseq
    %v750 = vshrl.u32 %v749, 7
    %v751 = vsub.s32 %v748, %v750
    %v752 = vrot.slane %v201, %v751
    %v754 = vunpack.c.l.s4 839922192
    %v755 = vunpack.c.0.s8 %v754
    %v756 = vlaneseq
    %v757 = vshrl.u32 %v756, 7
    %v758 = vsub.s32 %v755, %v757
    %v759 = vrot.slane %v208, %v758
    %v761 = vunpack.c.l.s4 1985246804
    %v762 = vunpack.c.0.s8 %v761
    %v763 = vlaneseq
    %v764 = vshrl.u32 %v763, 7
    %v765 = vsub.s32 %v762, %v764
    %v766 = vrot.slane %v208, %v765
    %v768 = vunpack.c.l.s4 839922192
    %v769 = vunpack.c.0.s8 %v768
    %v770 = vlaneseq
    %v771 = vshrl.u32 %v770, 7
    %v772 = vsub.s32 %v769, %v771
    %v773 = vrot.slane %v215, %v772
    %v775 = vunpack.c.l.s4 1985246804
    %v776 = vunpack.c.0.s8 %v775
    %v777 = vlaneseq
    %v778 = vshrl.u32 %v777, 7
    %v779 = vsub.s32 %v776, %v778
    %v780 = vrot.slane %v215, %v779
    %v782 = vunpack.c.l.s4 839922192
    %v783 = vunpack.c.0.s8 %v782
    %v784 = vlaneseq
    %v785 = vshrl.u32 %v784, 7
    %v786 = vsub.s32 %v783, %v785
    %v787 = vrot.slane %v222, %v786
    %v789 = vunpack.c.l.s4 1985246804
    %v790 = vunpack.c.0.s8 %v789
    %v791 = vlaneseq
    %v792 = vshrl.u32 %v791, 7
    %v793 = vsub.s32 %v790, %v792
    %v794 = vrot.slane %v222, %v793
    %v796 = vunpack.c.l.s4 839922192
    %v797 = vunpack.c.0.s8 %v796
    %v798 = vlaneseq
    %v799 = vshrl.u32 %v798, 7
    %v800 = vsub.s32 %v797, %v799
    %v801 = vrot.slane %v229, %v800
    %v803 = vunpack.c.l.s4 1985246804
    %v804 = vunpack.c.0.s8 %v803
    %v805 = vlaneseq
    %v806 = vshrl.u32 %v805, 7
    %v807 = vsub.s32 %v804, %v806
    %v808 = vrot.slane %v229, %v807
    %v810 = vunpack.c.l.s4 839922192
    %v811 = vunpack.c.0.s8 %v810
    %v812 = vlaneseq
    %v813 = vshrl.u32 %v812, 7
    %v814 = vsub.s32 %v811, %v813
    %v815 = vrot.slane %v236, %v814
    %v817 = vunpack.c.l.s4 1985246804
    %v818 = vunpack.c.0.s8 %v817
    %v819 = vlaneseq
    %v820 = vshrl.u32 %v819, 7
    %v821 = vsub.s32 %v818, %v820
    %v822 = vrot.slane %v236, %v821
    %v824 = vunpack.c.l.s4 839922192
    %v825 = vunpack.c.0.s8 %v824
    %v826 = vlaneseq
    %v827 = vshrl.u32 %v826, 7
    %v828 = vsub.s32 %v825, %v827
    %v829 = vrot.slane %v243, %v828
    %v831 = vunpack.c.l.s4 1985246804
    %v832 = vunpack.c.0.s8 %v831
    %v833 = vlaneseq
    %v834 = vshrl.u32 %v833, 7
    %v835 = vsub.s32 %v832, %v834
    %v836 = vrot.slane %v243, %v835
    %v838 = vunpack.c.l.s4 839922192
    %v839 = vunpack.c.0.s8 %v838
    %v840 = vlaneseq
    %v841 = vshrl.u32 %v840, 7
    %v842 = vsub.s32 %v839, %v841
    %v843 = vrot.slane %v250, %v842
    %v845 = vunpack.c.l.s4 1985246804
    %v846 = vunpack.c.0.s8 %v845
    %v847 = vlaneseq
    %v848 = vshrl.u32 %v847, 7
    %v849 = vsub.s32 %v846, %v848
    %v850 = vrot.slane %v250, %v849
    %v852 = vunpack.c.l.s4 839922192
    %v853 = vunpack.c.0.s8 %v852
    %v854 = vlaneseq
    %v855 = vshrl.u32 %v854, 7
    %v856 = vsub.s32 %v853, %v855
    %v857 = vrot.slane %v257, %v856
    %v859 = vunpack.c.l.s4 1985246804
    %v860 = vunpack.c.0.s8 %v859
    %v861 = vlaneseq
    %v862 = vshrl.u32 %v861, 7
    %v863 = vsub.s32 %v860, %v862
    %v864 = vrot.slane %v257, %v863
    %v866 = vunpack.c.l.s4 839922192
    %v867 = vunpack.c.0.s8 %v866
    %v868 = vlaneseq
    %v869 = vshrl.u32 %v868, 7
    %v870 = vsub.s32 %v867, %v869
    %v871 = vrot.slane %v264, %v870
    %v873 = vunpack.c.l.s4 1985246804
    %v874 = vunpack.c.0.s8 %v873
    %v875 = vlaneseq
    %v876 = vshrl.u32 %v875, 7
    %v877 = vsub.s32 %v874, %v876
    %v878 = vrot.slane %v264, %v877
    %v880 = vunpack.c.l.s4 839922192
    %v881 = vunpack.c.0.s8 %v880
    %v882 = vlaneseq
    %v883 = vshrl.u32 %v882, 7
    %v884 = vsub.s32 %v881, %v883
    %v885 = vrot.slane %v271, %v884
    %v887 = vunpack.c.l.s4 1985246804
    %v888 = vunpack.c.0.s8 %v887
    %v889 = vlaneseq
    %v890 = vshrl.u32 %v889, 7
    %v891 = vsub.s32 %v888, %v890
    %v892 = vrot.slane %v271, %v891
    %v894 = vunpack.c.l.s4 839922192
    %v895 = vunpack.c.0.s8 %v894
    %v896 = vlaneseq
    %v897 = vshrl.u32 %v896, 7
    %v898 = vsub.s32 %v895, %v897
    %v899 = vrot.slane %v278, %v898
    %v901 = vunpack.c.l.s4 1985246804
    %v902 = vunpack.c.0.s8 %v901
    %v903 = vlaneseq
    %v904 = vshrl.u32 %v903, 7
    %v905 = vsub.s32 %v902, %v904
    %v906 = vrot.slane %v278, %v905
    %v908 = vunpack.c.l.s4 839922192
    %v909 = vunpack.c.0.s8 %v908
    %v910 = vlaneseq
    %v911 = vshrl.u32 %v910, 7
    %v912 = vsub.s32 %v909, %v911
    %v913 = vrot.slane %v285, %v912
    %v915 = vunpack.c.l.s4 1985246804
    %v916 = vunpack.c.0.s8 %v915
    %v917 = vlaneseq
    %v918 = vshrl.u32 %v917, 7
    %v919 = vsub.s32 %v916, %v918
    %v920 = vrot.slane %v285, %v919
    %v922 = vunpack.c.l.s4 839922192
    %v923 = vunpack.c.0.s8 %v922
    %v924 = vlaneseq
    %v925 = vshrl.u32 %v924, 7
    %v926 = vsub.s32 %v923, %v925
    %v927 = vrot.slane %v292, %v926
    %v929 = vunpack.c.l.s4 1985246804
    %v930 = vunpack.c.0.s8 %v929
    %v931 = vlaneseq
    %v932 = vshrl.u32 %v931, 7
    %v933 = vsub.s32 %v930, %v932
    %v934 = vrot.slane %v292, %v933
    %v936 = vunpack.c.l.s4 839922192
    %v937 = vunpack.c.0.s8 %v936
    %v938 = vlaneseq
    %v939 = vshrl.u32 %v938, 7
    %v940 = vsub.s32 %v937, %v939
    %v941 = vrot.slane %v302, %v940
    %v943 = vunpack.c.l.s4 1985246804
    %v944 = vunpack.c.0.s8 %v943
    %v945 = vlaneseq
    %v946 = vshrl.u32 %v945, 7
    %v947 = vsub.s32 %v944, %v946
    %v948 = vrot.slane %v302, %v947
    %v950 = vunpack.c.l.s4 839922192
    %v951 = vunpack.c.0.s8 %v950
    %v952 = vlaneseq
    %v953 = vshrl.u32 %v952, 7
    %v954 = vsub.s32 %v951, %v953
    %v955 = vrot.slane %v312, %v954
    %v957 = vunpack.c.l.s4 1985246804
    %v958 = vunpack.c.0.s8 %v957
    %v959 = vlaneseq
    %v960 = vshrl.u32 %v959, 7
    %v961 = vsub.s32 %v958, %v960
    %v962 = vrot.slane %v312, %v961
    %v964 = vunpack.c.l.s4 839922192
    %v965 = vunpack.c.0.s8 %v964
    %v966 = vlaneseq
    %v967 = vshrl.u32 %v966, 7
    %v968 = vsub.s32 %v965, %v967
    %v969 = vrot.slane %v319, %v968
    %v971 = vunpack.c.l.s4 1985246804
    %v972 = vunpack.c.0.s8 %v971
    %v973 = vlaneseq
    %v974 = vshrl.u32 %v973, 7
    %v975 = vsub.s32 %v972, %v974
    %v976 = vrot.slane %v319, %v975
    %v978 = vunpack.c.l.s4 839922192
    %v979 = vunpack.c.0.s8 %v978
    %v980 = vlaneseq
    %v981 = vshrl.u32 %v980, 7
    %v982 = vsub.s32 %v979, %v981
    %v983 = vrot.slane %v326, %v982
    %v985 = vunpack.c.l.s4 1985246804
    %v986 = vunpack.c.0.s8 %v985
    %v987 = vlaneseq
    %v988 = vshrl.u32 %v987, 7
    %v989 = vsub.s32 %v986, %v988
    %v990 = vrot.slane %v326, %v989
    %v992 = vunpack.c.l.s4 839922192
    %v993 = vunpack.c.0.s8 %v992
    %v994 = vlaneseq
    %v995 = vshrl.u32 %v994, 7
    %v996 = vsub.s32 %v993, %v995
    %v997 = vrot.slane %v333, %v996
    %v999 = vunpack.c.l.s4 1985246804
    %v1000 = vunpack.c.0.s8 %v999
    %v1001 = vlaneseq
    %v1002 = vshrl.u32 %v1001, 7
    %v1003 = vsub.s32 %v1000, %v1002
    %v1004 = vrot.slane %v333, %v1003
    %v1006 = vunpack.c.l.s4 839922192
    %v1007 = vunpack.c.0.s8 %v1006
    %v1008 = vlaneseq
    %v1009 = vshrl.u32 %v1008, 7
    %v1010 = vsub.s32 %v1007, %v1009
    %v1011 = vrot.slane %v340, %v1010
    %v1013 = vunpack.c.l.s4 1985246804
    %v1014 = vunpack.c.0.s8 %v1013
    %v1015 = vlaneseq
    %v1016 = vshrl.u32 %v1015, 7
    %v1017 = vsub.s32 %v1014, %v1016
    %v1018 = vrot.slane %v340, %v1017
    %v1020 = vunpack.c.l.s4 839922192
    %v1021 = vunpack.c.0.s8 %v1020
    %v1022 = vlaneseq
    %v1023 = vshrl.u32 %v1022, 7
    %v1024 = vsub.s32 %v1021, %v1023
    %v1025 = vrot.slane %v347, %v1024
    %v1027 = vunpack.c.l.s4 1985246804
    %v1028 = vunpack.c.0.s8 %v1027
    %v1029 = vlaneseq
    %v1030 = vshrl.u32 %v1029, 7
    %v1031 = vsub.s32 %v1028, %v1030
    %v1032 = vrot.slane %v347, %v1031
    %v1034 = vunpack.c.l.s4 839922192
    %v1035 = vunpack.c.0.s8 %v1034
    %v1036 = vlaneseq
    %v1037 = vshrl.u32 %v1036, 7
    %v1038 = vsub.s32 %v1035, %v1037
    %v1039 = vrot.slane %v354, %v1038
    %v1041 = vunpack.c.l.s4 1985246804
    %v1042 = vunpack.c.0.s8 %v1041
    %v1043 = vlaneseq
    %v1044 = vshrl.u32 %v1043, 7
    %v1045 = vsub.s32 %v1042, %v1044
    %v1046 = vrot.slane %v354, %v1045
    %v1048 = vunpack.c.l.s4 839922192
    %v1049 = vunpack.c.0.s8 %v1048
    %v1050 = vlaneseq
    %v1051 = vshrl.u32 %v1050, 7
    %v1052 = vsub.s32 %v1049, %v1051
    %v1053 = vrot.slane %v361, %v1052
    %v1055 = vunpack.c.l.s4 1985246804
    %v1056 = vunpack.c.0.s8 %v1055
    %v1057 = vlaneseq
    %v1058 = vshrl.u32 %v1057, 7
    %v1059 = vsub.s32 %v1056, %v1058
    %v1060 = vrot.slane %v361, %v1059
    %v1062 = vunpack.c.l.s4 839922192
    %v1063 = vunpack.c.0.s8 %v1062
    %v1064 = vlaneseq
    %v1065 = vshrl.u32 %v1064, 7
    %v1066 = vsub.s32 %v1063, %v1065
    %v1067 = vrot.slane %v368, %v1066
    %v1069 = vunpack.c.l.s4 1985246804
    %v1070 = vunpack.c.0.s8 %v1069
    %v1071 = vlaneseq
    %v1072 = vshrl.u32 %v1071, 7
    %v1073 = vsub.s32 %v1070, %v1072
    %v1074 = vrot.slane %v368, %v1073
    %v1076 = vunpack.c.l.s4 839922192
    %v1077 = vunpack.c.0.s8 %v1076
    %v1078 = vlaneseq
    %v1079 = vshrl.u32 %v1078, 7
    %v1080 = vsub.s32 %v1077, %v1079
    %v1081 = vrot.slane %v375, %v1080
    %v1083 = vunpack.c.l.s4 1985246804
    %v1084 = vunpack.c.0.s8 %v1083
    %v1085 = vlaneseq
    %v1086 = vshrl.u32 %v1085, 7
    %v1087 = vsub.s32 %v1084, %v1086
    %v1088 = vrot.slane %v375, %v1087
    %v1090 = vunpack.c.l.s4 839922192
    %v1091 = vunpack.c.0.s8 %v1090
    %v1092 = vlaneseq
    %v1093 = vshrl.u32 %v1092, 7
    %v1094 = vsub.s32 %v1091, %v1093
    %v1095 = vrot.slane %v382, %v1094
    %v1097 = vunpack.c.l.s4 1985246804
    %v1098 = vunpack.c.0.s8 %v1097
    %v1099 = vlaneseq
    %v1100 = vshrl.u32 %v1099, 7
    %v1101 = vsub.s32 %v1098, %v1100
    %v1102 = vrot.slane %v382, %v1101
    %v1104 = vunpack.c.l.s4 839922192
    %v1105 = vunpack.c.0.s8 %v1104
    %v1106 = vlaneseq
    %v1107 = vshrl.u32 %v1106, 7
    %v1108 = vsub.s32 %v1105, %v1107
    %v1109 = vrot.slane %v389, %v1108
    %v1111 = vunpack.c.l.s4 1985246804
    %v1112 = vunpack.c.0.s8 %v1111
    %v1113 = vlaneseq
    %v1114 = vshrl.u32 %v1113, 7
    %v1115 = vsub.s32 %v1112, %v1114
    %v1116 = vrot.slane %v389, %v1115
    %v1118 = vunpack.c.l.s4 839922192
    %v1119 = vunpack.c.0.s8 %v1118
    %v1120 = vlaneseq
    %v1121 = vshrl.u32 %v1120, 7
    %v1122 = vsub.s32 %v1119, %v1121
    %v1123 = vrot.slane %v396, %v1122
    %v1125 = vunpack.c.l.s4 1985246804
    %v1126 = vunpack.c.0.s8 %v1125
    %v1127 = vlaneseq
    %v1128 = vshrl.u32 %v1127, 7
    %v1129 = vsub.s32 %v1126, %v1128
    %v1130 = vrot.slane %v396, %v1129
    %v1132 = vunpack.c.l.s4 839922192
    %v1133 = vunpack.c.0.s8 %v1132
    %v1134 = vlaneseq
    %v1135 = vshrl.u32 %v1134, 7
    %v1136 = vsub.s32 %v1133, %v1135
    %v1137 = vrot.slane %v403, %v1136
    %v1139 = vunpack.c.l.s4 1985246804
    %v1140 = vunpack.c.0.s8 %v1139
    %v1141 = vlaneseq
    %v1142 = vshrl.u32 %v1141, 7
    %v1143 = vsub.s32 %v1140, %v1142
    %v1144 = vrot.slane %v403, %v1143
    %v1146 = vunpack.c.l.s4 839922192
    %v1147 = vunpack.c.0.s8 %v1146
    %v1148 = vlaneseq
    %v1149 = vshrl.u32 %v1148, 7
    %v1150 = vsub.s32 %v1147, %v1149
    %v1151 = vrot.slane %v410, %v1150
    %v1153 = vunpack.c.l.s4 1985246804
    %v1154 = vunpack.c.0.s8 %v1153
    %v1155 = vlaneseq
    %v1156 = vshrl.u32 %v1155, 7
    %v1157 = vsub.s32 %v1154, %v1156
    %v1158 = vrot.slane %v410, %v1157
    %v1160 = vunpack.c.l.s4 839922192
    %v1161 = vunpack.c.0.s8 %v1160
    %v1162 = vlaneseq
    %v1163 = vshrl.u32 %v1162, 7
    %v1164 = vsub.s32 %v1161, %v1163
    %v1165 = vrot.slane %v420, %v1164
    %v1167 = vunpack.c.l.s4 1985246804
    %v1168 = vunpack.c.0.s8 %v1167
    %v1169 = vlaneseq
    %v1170 = vshrl.u32 %v1169, 7
    %v1171 = vsub.s32 %v1168, %v1170
    %v1172 = vrot.slane %v420, %v1171
    %v1174 = vunpack.c.l.s4 839922192
    %v1175 = vunpack.c.0.s8 %v1174
    %v1176 = vlaneseq
    %v1177 = vshrl.u32 %v1176, 7
    %v1178 = vsub.s32 %v1175, %v1177
    %v1179 = vrot.slane %v430, %v1178
    %v1181 = vunpack.c.l.s4 1985246804
    %v1182 = vunpack.c.0.s8 %v1181
    %v1183 = vlaneseq
    %v1184 = vshrl.u32 %v1183, 7
    %v1185 = vsub.s32 %v1182, %v1184
    %v1186 = vrot.slane %v430, %v1185
    %v1188 = vunpack.c.l.s4 839922192
    %v1189 = vunpack.c.0.s8 %v1188
    %v1190 = vlaneseq
    %v1191 = vshrl.u32 %v1190, 7
    %v1192 = vsub.s32 %v1189, %v1191
    %v1193 = vrot.slane %v437, %v1192
    %v1195 = vunpack.c.l.s4 1985246804
    %v1196 = vunpack.c.0.s8 %v1195
    %v1197 = vlaneseq
    %v1198 = vshrl.u32 %v1197, 7
    %v1199 = vsub.s32 %v1196, %v1198
    %v1200 = vrot.slane %v437, %v1199
    %v1202 = vunpack.c.l.s4 839922192
    %v1203 = vunpack.c.0.s8 %v1202
    %v1204 = vlaneseq
    %v1205 = vshrl.u32 %v1204, 7
    %v1206 = vsub.s32 %v1203, %v1205
    %v1207 = vrot.slane %v444, %v1206
    %v1209 = vunpack.c.l.s4 1985246804
    %v1210 = vunpack.c.0.s8 %v1209
    %v1211 = vlaneseq
    %v1212 = vshrl.u32 %v1211, 7
    %v1213 = vsub.s32 %v1210, %v1212
    %v1214 = vrot.slane %v444, %v1213
    %v1216 = vunpack.c.l.s4 839922192
    %v1217 = vunpack.c.0.s8 %v1216
    %v1218 = vlaneseq
    %v1219 = vshrl.u32 %v1218, 7
    %v1220 = vsub.s32 %v1217, %v1219
    %v1221 = vrot.slane %v451, %v1220
    %v1223 = vunpack.c.l.s4 1985246804
    %v1224 = vunpack.c.0.s8 %v1223
    %v1225 = vlaneseq
    %v1226 = vshrl.u32 %v1225, 7
    %v1227 = vsub.s32 %v1224, %v1226
    %v1228 = vrot.slane %v451, %v1227
    %v1230 = vunpack.c.l.s4 839922192
    %v1231 = vunpack.c.0.s8 %v1230
    %v1232 = vlaneseq
    %v1233 = vshrl.u32 %v1232, 7
    %v1234 = vsub.s32 %v1231, %v1233
    %v1235 = vrot.slane %v458, %v1234
    %v1237 = vunpack.c.l.s4 1985246804
    %v1238 = vunpack.c.0.s8 %v1237
    %v1239 = vlaneseq
    %v1240 = vshrl.u32 %v1239, 7
    %v1241 = vsub.s32 %v1238, %v1240
    %v1242 = vrot.slane %v458, %v1241
    %v1244 = vunpack.c.l.s4 839922192
    %v1245 = vunpack.c.0.s8 %v1244
    %v1246 = vlaneseq
    %v1247 = vshrl.u32 %v1246, 7
    %v1248 = vsub.s32 %v1245, %v1247
    %v1249 = vrot.slane %v465, %v1248
    %v1251 = vunpack.c.l.s4 1985246804
    %v1252 = vunpack.c.0.s8 %v1251
    %v1253 = vlaneseq
    %v1254 = vshrl.u32 %v1253, 7
    %v1255 = vsub.s32 %v1252, %v1254
    %v1256 = vrot.slane %v465, %v1255
    %v1258 = vunpack.c.l.s4 839922192
    %v1259 = vunpack.c.0.s8 %v1258
    %v1260 = vlaneseq
    %v1261 = vshrl.u32 %v1260, 7
    %v1262 = vsub.s32 %v1259, %v1261
    %v1263 = vrot.slane %v472, %v1262
    %v1265 = vunpack.c.l.s4 1985246804
    %v1266 = vunpack.c.0.s8 %v1265
    %v1267 = vlaneseq
    %v1268 = vshrl.u32 %v1267, 7
    %v1269 = vsub.s32 %v1266, %v1268
    %v1270 = vrot.slane %v472, %v1269
    %v1272 = vunpack.c.l.s4 839922192
    %v1273 = vunpack.c.0.s8 %v1272
    %v1274 = vlaneseq
    %v1275 = vshrl.u32 %v1274, 7
    %v1276 = vsub.s32 %v1273, %v1275
    %v1277 = vrot.slane %v479, %v1276
    %v1279 = vunpack.c.l.s4 1985246804
    %v1280 = vunpack.c.0.s8 %v1279
    %v1281 = vlaneseq
    %v1282 = vshrl.u32 %v1281, 7
    %v1283 = vsub.s32 %v1280, %v1282
    %v1284 = vrot.slane %v479, %v1283
    %v1286 = vunpack.c.l.s4 839922192
    %v1287 = vunpack.c.0.s8 %v1286
    %v1288 = vlaneseq
    %v1289 = vshrl.u32 %v1288, 7
    %v1290 = vsub.s32 %v1287, %v1289
    %v1291 = vrot.slane %v486, %v1290
    %v1293 = vunpack.c.l.s4 1985246804
    %v1294 = vunpack.c.0.s8 %v1293
    %v1295 = vlaneseq
    %v1296 = vshrl.u32 %v1295, 7
    %v1297 = vsub.s32 %v1294, %v1296
    %v1298 = vrot.slane %v486, %v1297
    %v1300 = vunpack.c.l.s4 839922192
    %v1301 = vunpack.c.0.s8 %v1300
    %v1302 = vlaneseq
    %v1303 = vshrl.u32 %v1302, 7
    %v1304 = vsub.s32 %v1301, %v1303
    %v1305 = vrot.slane %v493, %v1304
    %v1307 = vunpack.c.l.s4 1985246804
    %v1308 = vunpack.c.0.s8 %v1307
    %v1309 = vlaneseq
    %v1310 = vshrl.u32 %v1309, 7
    %v1311 = vsub.s32 %v1308, %v1310
    %v1312 = vrot.slane %v493, %v1311
    %v1314 = vunpack.c.l.s4 839922192
    %v1315 = vunpack.c.0.s8 %v1314
    %v1316 = vlaneseq
    %v1317 = vshrl.u32 %v1316, 7
    %v1318 = vsub.s32 %v1315, %v1317
    %v1319 = vrot.slane %v500, %v1318
    %v1321 = vunpack.c.l.s4 1985246804
    %v1322 = vunpack.c.0.s8 %v1321
    %v1323 = vlaneseq
    %v1324 = vshrl.u32 %v1323, 7
    %v1325 = vsub.s32 %v1322, %v1324
    %v1326 = vrot.slane %v500, %v1325
    %v1328 = vunpack.c.l.s4 839922192
    %v1329 = vunpack.c.0.s8 %v1328
    %v1330 = vlaneseq
    %v1331 = vshrl.u32 %v1330, 7
    %v1332 = vsub.s32 %v1329, %v1331
    %v1333 = vrot.slane %v507, %v1332
    %v1335 = vunpack.c.l.s4 1985246804
    %v1336 = vunpack.c.0.s8 %v1335
    %v1337 = vlaneseq
    %v1338 = vshrl.u32 %v1337, 7
    %v1339 = vsub.s32 %v1336, %v1338
    %v1340 = vrot.slane %v507, %v1339
    %v1342 = vunpack.c.l.s4 839922192
    %v1343 = vunpack.c.0.s8 %v1342
    %v1344 = vlaneseq
    %v1345 = vshrl.u32 %v1344, 7
    %v1346 = vsub.s32 %v1343, %v1345
    %v1347 = vrot.slane %v514, %v1346
    %v1349 = vunpack.c.l.s4 1985246804
    %v1350 = vunpack.c.0.s8 %v1349
    %v1351 = vlaneseq
    %v1352 = vshrl.u32 %v1351, 7
    %v1353 = vsub.s32 %v1350, %v1352
    %v1354 = vrot.slane %v514, %v1353
    %v1356 = vunpack.c.l.s4 839922192
    %v1357 = vunpack.c.0.s8 %v1356
    %v1358 = vlaneseq
    %v1359 = vshrl.u32 %v1358, 7
    %v1360 = vsub.s32 %v1357, %v1359
    %v1361 = vrot.slane %v521, %v1360
    %v1363 = vunpack.c.l.s4 1985246804
    %v1364 = vunpack.c.0.s8 %v1363
    %v1365 = vlaneseq
    %v1366 = vshrl.u32 %v1365, 7
    %v1367 = vsub.s32 %v1364, %v1366
    %v1368 = vrot.slane %v521, %v1367
    %v1370 = vunpack.c.l.s4 839922192
    %v1371 = vunpack.c.0.s8 %v1370
    %v1372 = vlaneseq
    %v1373 = vshrl.u32 %v1372, 7
    %v1374 = vsub.s32 %v1371, %v1373
    %v1375 = vrot.slane %v528, %v1374
    %v1377 = vunpack.c.l.s4 1985246804
    %v1378 = vunpack.c.0.s8 %v1377
    %v1379 = vlaneseq
    %v1380 = vshrl.u32 %v1379, 7
    %v1381 = vsub.s32 %v1378, %v1380
    %v1382 = vrot.slane %v528, %v1381
    %v1384 = vunpack.c.l.s4 839922192
    %v1385 = vunpack.c.0.s8 %v1384
    %v1386 = vlaneseq
    %v1387 = vshrl.u32 %v1386, 7
    %v1388 = vsub.s32 %v1385, %v1387
    %v1389 = vrot.slane %v538, %v1388
    %v1391 = vunpack.c.l.s4 1985246804
    %v1392 = vunpack.c.0.s8 %v1391
    %v1393 = vlaneseq
    %v1394 = vshrl.u32 %v1393, 7
    %v1395 = vsub.s32 %v1392, %v1394
    %v1396 = vrot.slane %v538, %v1395
    %v1398 = vunpack.c.l.s4 839922192
    %v1399 = vunpack.c.0.s8 %v1398
    %v1400 = vlaneseq
    %v1401 = vshrl.u32 %v1400, 7
    %v1402 = vsub.s32 %v1399, %v1401
    %v1403 = vrot.slane %v548, %v1402
    %v1405 = vunpack.c.l.s4 1985246804
    %v1406 = vunpack.c.0.s8 %v1405
    %v1407 = vlaneseq
    %v1408 = vshrl.u32 %v1407, 7
    %v1409 = vsub.s32 %v1406, %v1408
    %v1410 = vrot.slane %v548, %v1409
    %v1412 = vunpack.c.l.s4 839922192
    %v1413 = vunpack.c.0.s8 %v1412
    %v1414 = vlaneseq
    %v1415 = vshrl.u32 %v1414, 7
    %v1416 = vsub.s32 %v1413, %v1415
    %v1417 = vrot.slane %v555, %v1416
    %v1419 = vunpack.c.l.s4 1985246804
    %v1420 = vunpack.c.0.s8 %v1419
    %v1421 = vlaneseq
    %v1422 = vshrl.u32 %v1421, 7
    %v1423 = vsub.s32 %v1420, %v1422
    %v1424 = vrot.slane %v555, %v1423
    %v1426 = vunpack.c.l.s4 839922192
    %v1427 = vunpack.c.0.s8 %v1426
    %v1428 = vlaneseq
    %v1429 = vshrl.u32 %v1428, 7
    %v1430 = vsub.s32 %v1427, %v1429
    %v1431 = vrot.slane %v562, %v1430
    %v1433 = vunpack.c.l.s4 1985246804
    %v1434 = vunpack.c.0.s8 %v1433
    %v1435 = vlaneseq
    %v1436 = vshrl.u32 %v1435, 7
    %v1437 = vsub.s32 %v1434, %v1436
    %v1438 = vrot.slane %v562, %v1437
    %v1440 = vunpack.c.l.s4 839922192
    %v1441 = vunpack.c.0.s8 %v1440
    %v1442 = vlaneseq
    %v1443 = vshrl.u32 %v1442, 7
    %v1444 = vsub.s32 %v1441, %v1443
    %v1445 = vrot.slane %v569, %v1444
    %v1447 = vunpack.c.l.s4 1985246804
    %v1448 = vunpack.c.0.s8 %v1447
    %v1449 = vlaneseq
    %v1450 = vshrl.u32 %v1449, 7
    %v1451 = vsub.s32 %v1448, %v1450
    %v1452 = vrot.slane %v569, %v1451
    %v1454 = vunpack.c.l.s4 839922192
    %v1455 = vunpack.c.0.s8 %v1454
    %v1456 = vlaneseq
    %v1457 = vshrl.u32 %v1456, 7
    %v1458 = vsub.s32 %v1455, %v1457
    %v1459 = vrot.slane %v576, %v1458
    %v1461 = vunpack.c.l.s4 1985246804
    %v1462 = vunpack.c.0.s8 %v1461
    %v1463 = vlaneseq
    %v1464 = vshrl.u32 %v1463, 7
    %v1465 = vsub.s32 %v1462, %v1464
    %v1466 = vrot.slane %v576, %v1465
    %v1468 = vunpack.c.l.s4 839922192
    %v1469 = vunpack.c.0.s8 %v1468
    %v1470 = vlaneseq
    %v1471 = vshrl.u32 %v1470, 7
    %v1472 = vsub.s32 %v1469, %v1471
    %v1473 = vrot.slane %v583, %v1472
    %v1475 = vunpack.c.l.s4 1985246804
    %v1476 = vunpack.c.0.s8 %v1475
    %v1477 = vlaneseq
    %v1478 = vshrl.u32 %v1477, 7
    %v1479 = vsub.s32 %v1476, %v1478
    %v1480 = vrot.slane %v583, %v1479
    %v1482 = vunpack.c.l.s4 839922192
    %v1483 = vunpack.c.0.s8 %v1482
    %v1484 = vlaneseq
    %v1485 = vshrl.u32 %v1484, 7
    %v1486 = vsub.s32 %v1483, %v1485
    %v1487 = vrot.slane %v590, %v1486
    %v1489 = vunpack.c.l.s4 1985246804
    %v1490 = vunpack.c.0.s8 %v1489
    %v1491 = vlaneseq
    %v1492 = vshrl.u32 %v1491, 7
    %v1493 = vsub.s32 %v1490, %v1492
    %v1494 = vrot.slane %v590, %v1493
    %v1496 = vunpack.c.l.s4 839922192
    %v1497 = vunpack.c.0.s8 %v1496
    %v1498 = vlaneseq
    %v1499 = vshrl.u32 %v1498, 7
    %v1500 = vsub.s32 %v1497, %v1499
    %v1501 = vrot.slane %v597, %v1500
    %v1503 = vunpack.c.l.s4 1985246804
    %v1504 = vunpack.c.0.s8 %v1503
    %v1505 = vlaneseq
    %v1506 = vshrl.u32 %v1505, 7
    %v1507 = vsub.s32 %v1504, %v1506
    %v1508 = vrot.slane %v597, %v1507
    %v1510 = vunpack.c.l.s4 839922192
    %v1511 = vunpack.c.0.s8 %v1510
    %v1512 = vlaneseq
    %v1513 = vshrl.u32 %v1512, 7
    %v1514 = vsub.s32 %v1511, %v1513
    %v1515 = vrot.slane %v604, %v1514
    %v1517 = vunpack.c.l.s4 1985246804
    %v1518 = vunpack.c.0.s8 %v1517
    %v1519 = vlaneseq
    %v1520 = vshrl.u32 %v1519, 7
    %v1521 = vsub.s32 %v1518, %v1520
    %v1522 = vrot.slane %v604, %v1521
    %v1524 = vunpack.c.l.s4 839922192
    %v1525 = vunpack.c.0.s8 %v1524
    %v1526 = vlaneseq
    %v1527 = vshrl.u32 %v1526, 7
    %v1528 = vsub.s32 %v1525, %v1527
    %v1529 = vrot.slane %v611, %v1528
    %v1531 = vunpack.c.l.s4 1985246804
    %v1532 = vunpack.c.0.s8 %v1531
    %v1533 = vlaneseq
    %v1534 = vshrl.u32 %v1533, 7
    %v1535 = vsub.s32 %v1532, %v1534
    %v1536 = vrot.slane %v611, %v1535
    %v1538 = vunpack.c.l.s4 839922192
    %v1539 = vunpack.c.0.s8 %v1538
    %v1540 = vlaneseq
    %v1541 = vshrl.u32 %v1540, 7
    %v1542 = vsub.s32 %v1539, %v1541
    %v1543 = vrot.slane %v618, %v1542
    %v1545 = vunpack.c.l.s4 1985246804
    %v1546 = vunpack.c.0.s8 %v1545
    %v1547 = vlaneseq
    %v1548 = vshrl.u32 %v1547, 7
    %v1549 = vsub.s32 %v1546, %v1548
    %v1550 = vrot.slane %v618, %v1549
    %v1552 = vunpack.c.l.s4 839922192
    %v1553 = vunpack.c.0.s8 %v1552
    %v1554 = vlaneseq
    %v1555 = vshrl.u32 %v1554, 7
    %v1556 = vsub.s32 %v1553, %v1555
    %v1557 = vrot.slane %v625, %v1556
    %v1559 = vunpack.c.l.s4 1985246804
    %v1560 = vunpack.c.0.s8 %v1559
    %v1561 = vlaneseq
    %v1562 = vshrl.u32 %v1561, 7
    %v1563 = vsub.s32 %v1560, %v1562
    %v1564 = vrot.slane %v625, %v1563
    %v1566 = vunpack.c.l.s4 839922192
    %v1567 = vunpack.c.0.s8 %v1566
    %v1568 = vlaneseq
    %v1569 = vshrl.u32 %v1568, 7
    %v1570 = vsub.s32 %v1567, %v1569
    %v1571 = vrot.slane %v632, %v1570
    %v1573 = vunpack.c.l.s4 1985246804
    %v1574 = vunpack.c.0.s8 %v1573
    %v1575 = vlaneseq
    %v1576 = vshrl.u32 %v1575, 7
    %v1577 = vsub.s32 %v1574, %v1576
    %v1578 = vrot.slane %v632, %v1577
    %v1580 = vunpack.c.l.s4 839922192
    %v1581 = vunpack.c.0.s8 %v1580
    %v1582 = vlaneseq
    %v1583 = vshrl.u32 %v1582, 7
    %v1584 = vsub.s32 %v1581, %v1583
    %v1585 = vrot.slane %v639, %v1584
    %v1587 = vunpack.c.l.s4 1985246804
    %v1588 = vunpack.c.0.s8 %v1587
    %v1589 = vlaneseq
    %v1590 = vshrl.u32 %v1589, 7
    %v1591 = vsub.s32 %v1588, %v1590
    %v1592 = vrot.slane %v639, %v1591
    %v1594 = vunpack.c.l.s4 839922192
    %v1595 = vunpack.c.0.s8 %v1594
    %v1596 = vlaneseq
    %v1597 = vshrl.u32 %v1596, 7
    %v1598 = vsub.s32 %v1595, %v1597
    %v1599 = vrot.slane %v646, %v1598
    %v1601 = vunpack.c.l.s4 1985246804
    %v1602 = vunpack.c.0.s8 %v1601
    %v1603 = vlaneseq
    %v1604 = vshrl.u32 %v1603, 7
    %v1605 = vsub.s32 %v1602, %v1604
    %v1606 = vrot.slane %v646, %v1605
    %v1735 = vmul.bf16 %v19, %v717
    %v1736 = vmul.bf16 %v20, %v724
    %v1737 = vmul.bf16 %v21, %v731
    %v1738 = vmul.bf16 %v22, %v738
    %v1739 = vmul.bf16 %v23, %v745
    %v1740 = vmul.bf16 %v24, %v752
    %v1741 = vmul.bf16 %v25, %v759
    %v1742 = vmul.bf16 %v26, %v766
    %v1743 = vmul.bf16 %v27, %v773
    %v1744 = vmul.bf16 %v28, %v780
    %v1745 = vmul.bf16 %v29, %v787
    %v1746 = vmul.bf16 %v30, %v794
    %v1747 = vmul.bf16 %v31, %v801
    %v1748 = vmul.bf16 %v32, %v808
    %v1749 = vmul.bf16 %v33, %v815
    %v1750 = vmul.bf16 %v34, %v822
    %v1751 = vmul.bf16 %v35, %v829
    %v1752 = vmul.bf16 %v36, %v836
    %v1753 = vmul.bf16 %v37, %v843
    %v1754 = vmul.bf16 %v38, %v850
    %v1755 = vmul.bf16 %v39, %v857
    %v1756 = vmul.bf16 %v40, %v864
    %v1757 = vmul.bf16 %v41, %v871
    %v1758 = vmul.bf16 %v42, %v878
    %v1759 = vmul.bf16 %v43, %v885
    %v1760 = vmul.bf16 %v44, %v892
    %v1761 = vmul.bf16 %v45, %v899
    %v1762 = vmul.bf16 %v46, %v906
    %v1763 = vmul.bf16 %v47, %v913
    %v1764 = vmul.bf16 %v48, %v920
    %v1765 = vmul.bf16 %v49, %v927
    %v1766 = vmul.bf16 %v50, %v934
    %v1767 = vmul.bf16 %v51, %v941
    %v1768 = vmul.bf16 %v52, %v948
    %v1769 = vmul.bf16 %v53, %v955
    %v1770 = vmul.bf16 %v54, %v962
    %v1771 = vmul.bf16 %v55, %v969
    %v1772 = vmul.bf16 %v56, %v976
    %v1773 = vmul.bf16 %v57, %v983
    %v1774 = vmul.bf16 %v58, %v990
    %v1775 = vmul.bf16 %v59, %v997
    %v1776 = vmul.bf16 %v60, %v1004
    %v1777 = vmul.bf16 %v61, %v1011
    %v1778 = vmul.bf16 %v62, %v1018
    %v1779 = vmul.bf16 %v63, %v1025
    %v1780 = vmul.bf16 %v64, %v1032
    %v1781 = vmul.bf16 %v65, %v1039
    %v1782 = vmul.bf16 %v66, %v1046
    %v1783 = vmul.bf16 %v67, %v1053
    %v1784 = vmul.bf16 %v68, %v1060
    %v1785 = vmul.bf16 %v69, %v1067
    %v1786 = vmul.bf16 %v70, %v1074
    %v1787 = vmul.bf16 %v71, %v1081
    %v1788 = vmul.bf16 %v72, %v1088
    %v1789 = vmul.bf16 %v73, %v1095
    %v1790 = vmul.bf16 %v74, %v1102
    %v1791 = vmul.bf16 %v75, %v1109
    %v1792 = vmul.bf16 %v76, %v1116
    %v1793 = vmul.bf16 %v77, %v1123
    %v1794 = vmul.bf16 %v78, %v1130
    %v1795 = vmul.bf16 %v79, %v1137
    %v1796 = vmul.bf16 %v80, %v1144
    %v1797 = vmul.bf16 %v81, %v1151
    %v1798 = vmul.bf16 %v82, %v1158
    %v1799 = vmul.bf16 %v83, %v1165
    %v1800 = vmul.bf16 %v84, %v1172
    %v1801 = vmul.bf16 %v85, %v1179
    %v1802 = vmul.bf16 %v86, %v1186
    %v1803 = vmul.bf16 %v87, %v1193
    %v1804 = vmul.bf16 %v88, %v1200
    %v1805 = vmul.bf16 %v89, %v1207
    %v1806 = vmul.bf16 %v90, %v1214
    %v1807 = vmul.bf16 %v91, %v1221
    %v1808 = vmul.bf16 %v92, %v1228
    %v1809 = vmul.bf16 %v93, %v1235
    %v1810 = vmul.bf16 %v94, %v1242
    %v1811 = vmul.bf16 %v95, %v1249
    %v1812 = vmul.bf16 %v96, %v1256
    %v1813 = vmul.bf16 %v97, %v1263
    %v1814 = vmul.bf16 %v98, %v1270
    %v1815 = vmul.bf16 %v99, %v1277
    %v1816 = vmul.bf16 %v100, %v1284
    %v1817 = vmul.bf16 %v101, %v1291
    %v1818 = vmul.bf16 %v102, %v1298
    %v1819 = vmul.bf16 %v103, %v1305
    %v1820 = vmul.bf16 %v104, %v1312
    %v1821 = vmul.bf16 %v105, %v1319
    %v1822 = vmul.bf16 %v106, %v1326
    %v1823 = vmul.bf16 %v107, %v1333
    %v1824 = vmul.bf16 %v108, %v1340
    %v1825 = vmul.bf16 %v109, %v1347
    %v1826 = vmul.bf16 %v110, %v1354
    %v1827 = vmul.bf16 %v111, %v1361
    %v1828 = vmul.bf16 %v112, %v1368
    %v1829 = vmul.bf16 %v113, %v1375
    %v1830 = vmul.bf16 %v114, %v1382
    %v1831 = vmul.bf16 %v115, %v1389
    %v1832 = vmul.bf16 %v116, %v1396
    %v1833 = vmul.bf16 %v117, %v1403
    %v1834 = vmul.bf16 %v118, %v1410
    %v1835 = vmul.bf16 %v119, %v1417
    %v1836 = vmul.bf16 %v120, %v1424
    %v1837 = vmul.bf16 %v121, %v1431
    %v1838 = vmul.bf16 %v122, %v1438
    %v1839 = vmul.bf16 %v123, %v1445
    %v1840 = vmul.bf16 %v124, %v1452
    %v1841 = vmul.bf16 %v125, %v1459
    %v1842 = vmul.bf16 %v126, %v1466
    %v1843 = vmul.bf16 %v127, %v1473
    %v1844 = vmul.bf16 %v128, %v1480
    %v1845 = vmul.bf16 %v129, %v1487
    %v1846 = vmul.bf16 %v130, %v1494
    %v1847 = vmul.bf16 %v131, %v1501
    %v1848 = vmul.bf16 %v132, %v1508
    %v1849 = vmul.bf16 %v133, %v1515
    %v1850 = vmul.bf16 %v134, %v1522
    %v1851 = vmul.bf16 %v135, %v1529
    %v1852 = vmul.bf16 %v136, %v1536
    %v1853 = vmul.bf16 %v137, %v1543
    %v1854 = vmul.bf16 %v138, %v1550
    %v1855 = vmul.bf16 %v139, %v1557
    %v1856 = vmul.bf16 %v140, %v1564
    %v1857 = vmul.bf16 %v141, %v1571
    %v1858 = vmul.bf16 %v142, %v1578
    %v1859 = vmul.bf16 %v143, %v1585
    %v1860 = vmul.bf16 %v144, %v1592
    %v1861 = vmul.bf16 %v145, %v1599
    %v1862 = vmul.bf16 %v146, %v1606
    %v1863 = vld [vmem:[%s2] sm:$0xf]
    %v1864 = vld [vmem:[%s2 + $0x4] sm:$0xf]
    %v1865 = vld [vmem:[%s3] sm:$0x1]
    %v1867 = vlaneseq
    %v1868 = vshrl.u32 %v1867, 7
    %v1869 = vsub.s32 0, %v1868
    %v1870 = vrot.slane %v1865, %v1869
    %v2000 = vunpack.c.l.b16 %v1735
    %v2001 = vunpack.c.l.b16 %v1736
    %v2002 = vunpack.c.l.b16 %v1737
    %v2003 = vunpack.c.l.b16 %v1738
    %v2004 = vunpack.c.l.b16 %v1739
    %v2005 = vunpack.c.l.b16 %v1740
    %v2006 = vunpack.c.l.b16 %v1741
    %v2007 = vunpack.c.l.b16 %v1742
    %v2008 = vunpack.c.l.b16 %v1743
    %v2009 = vunpack.c.l.b16 %v1744
    %v2010 = vunpack.c.l.b16 %v1745
    %v2011 = vunpack.c.l.b16 %v1746
    %v2012 = vunpack.c.l.b16 %v1747
    %v2013 = vunpack.c.l.b16 %v1748
    %v2014 = vunpack.c.l.b16 %v1749
    %v2015 = vunpack.c.l.b16 %v1750
    %v2016 = vunpack.c.l.b16 %v1751
    %v2017 = vunpack.c.l.b16 %v1752
    %v2018 = vunpack.c.l.b16 %v1753
    %v2019 = vunpack.c.l.b16 %v1754
    %v2020 = vunpack.c.l.b16 %v1755
    %v2021 = vunpack.c.l.b16 %v1756
    %v2022 = vunpack.c.l.b16 %v1757
    %v2023 = vunpack.c.l.b16 %v1758
    %v2024 = vunpack.c.l.b16 %v1759
    %v2025 = vunpack.c.l.b16 %v1760
    %v2026 = vunpack.c.l.b16 %v1761
    %v2027 = vunpack.c.l.b16 %v1762
    %v2028 = vunpack.c.l.b16 %v1763
    %v2029 = vunpack.c.l.b16 %v1764
    %v2030 = vunpack.c.l.b16 %v1765
    %v2031 = vunpack.c.l.b16 %v1766
    %v2032 = vunpack.c.l.b16 %v1767
    %v2033 = vunpack.c.l.b16 %v1768
    %v2034 = vunpack.c.l.b16 %v1769
    %v2035 = vunpack.c.l.b16 %v1770
    %v2036 = vunpack.c.l.b16 %v1771
    %v2037 = vunpack.c.l.b16 %v1772
    %v2038 = vunpack.c.l.b16 %v1773
    %v2039 = vunpack.c.l.b16 %v1774
    %v2040 = vunpack.c.l.b16 %v1775
    %v2041 = vunpack.c.l.b16 %v1776
    %v2042 = vunpack.c.l.b16 %v1777
    %v2043 = vunpack.c.l.b16 %v1778
    %v2044 = vunpack.c.l.b16 %v1779
    %v2045 = vunpack.c.l.b16 %v1780
    %v2046 = vunpack.c.l.b16 %v1781
    %v2047 = vunpack.c.l.b16 %v1782
    %v2048 = vunpack.c.l.b16 %v1783
    %v2049 = vunpack.c.l.b16 %v1784
    %v2050 = vunpack.c.l.b16 %v1785
    %v2051 = vunpack.c.l.b16 %v1786
    %v2052 = vunpack.c.l.b16 %v1787
    %v2053 = vunpack.c.l.b16 %v1788
    %v2054 = vunpack.c.l.b16 %v1789
    %v2055 = vunpack.c.l.b16 %v1790
    %v2056 = vunpack.c.l.b16 %v1791
    %v2057 = vunpack.c.l.b16 %v1792
    %v2058 = vunpack.c.l.b16 %v1793
    %v2059 = vunpack.c.l.b16 %v1794
    %v2060 = vunpack.c.l.b16 %v1795
    %v2061 = vunpack.c.l.b16 %v1796
    %v2062 = vunpack.c.l.b16 %v1797
    %v2063 = vunpack.c.l.b16 %v1798
    %v2064 = vunpack.c.l.b16 %v1799
    %v2065 = vunpack.c.l.b16 %v1800
    %v2066 = vunpack.c.l.b16 %v1801
    %v2067 = vunpack.c.l.b16 %v1802
    %v2068 = vunpack.c.l.b16 %v1803
    %v2069 = vunpack.c.l.b16 %v1804
    %v2070 = vunpack.c.l.b16 %v1805
    %v2071 = vunpack.c.l.b16 %v1806
    %v2072 = vunpack.c.l.b16 %v1807
    %v2073 = vunpack.c.l.b16 %v1808
    %v2074 = vunpack.c.l.b16 %v1809
    %v2075 = vunpack.c.l.b16 %v1810
    %v2076 = vunpack.c.l.b16 %v1811
    %v2077 = vunpack.c.l.b16 %v1812
    %v2078 = vunpack.c.l.b16 %v1813
    %v2079 = vunpack.c.l.b16 %v1814
    %v2080 = vunpack.c.l.b16 %v1815
    %v2081 = vunpack.c.l.b16 %v1816
    %v2082 = vunpack.c.l.b16 %v1817
    %v2083 = vunpack.c.l.b16 %v1818
    %v2084 = vunpack.c.l.b16 %v1819
    %v2085 = vunpack.c.l.b16 %v1820
    %v2086 = vunpack.c.l.b16 %v1821
    %v2087 = vunpack.c.l.b16 %v1822
    %v2088 = vunpack.c.l.b16 %v1823
    %v2089 = vunpack.c.l.b16 %v1824
    %v2090 = vunpack.c.l.b16 %v1825
    %v2091 = vunpack.c.l.b16 %v1826
    %v2092 = vunpack.c.l.b16 %v1827
    %v2093 = vunpack.c.l.b16 %v1828
    %v2094 = vunpack.c.l.b16 %v1829
    %v2095 = vunpack.c.l.b16 %v1830
    %v2096 = vunpack.c.l.b16 %v1831
    %v2097 = vunpack.c.l.b16 %v1832
    %v2098 = vunpack.c.l.b16 %v1833
    %v2099 = vunpack.c.l.b16 %v1834
    %v2100 = vunpack.c.l.b16 %v1835
    %v2101 = vunpack.c.l.b16 %v1836
    %v2102 = vunpack.c.l.b16 %v1837
    %v2103 = vunpack.c.l.b16 %v1838
    %v2104 = vunpack.c.l.b16 %v1839
    %v2105 = vunpack.c.l.b16 %v1840
    %v2106 = vunpack.c.l.b16 %v1841
    %v2107 = vunpack.c.l.b16 %v1842
    %v2108 = vunpack.c.l.b16 %v1843
    %v2109 = vunpack.c.l.b16 %v1844
    %v2110 = vunpack.c.l.b16 %v1845
    %v2111 = vunpack.c.l.b16 %v1846
    %v2112 = vunpack.c.l.b16 %v1847
    %v2113 = vunpack.c.l.b16 %v1848
    %v2114 = vunpack.c.l.b16 %v1849
    %v2115 = vunpack.c.l.b16 %v1850
    %v2116 = vunpack.c.l.b16 %v1851
    %v2117 = vunpack.c.l.b16 %v1852
    %v2118 = vunpack.c.l.b16 %v1853
    %v2119 = vunpack.c.l.b16 %v1854
    %v2120 = vunpack.c.l.b16 %v1855
    %v2121 = vunpack.c.l.b16 %v1856
    %v2122 = vunpack.c.l.b16 %v1857
    %v2123 = vunpack.c.l.b16 %v1858
    %v2124 = vunpack.c.l.b16 %v1859
    %v2125 = vunpack.c.l.b16 %v1860
    %v2126 = vunpack.c.l.b16 %v1861
    %v2127 = vunpack.c.l.b16 %v1862
    %v2128 = vpack.c.b16 %v2001, %v2000
    %v2129 = vpack.c.b16 %v2003, %v2002
    %v2130 = vpack.c.b16 %v2005, %v2004
    %v2131 = vpack.c.b16 %v2007, %v2006
    %v2132 = vpack.c.b16 %v2009, %v2008
    %v2133 = vpack.c.b16 %v2011, %v2010
    %v2134 = vpack.c.b16 %v2013, %v2012
    %v2135 = vpack.c.b16 %v2015, %v2014
    %v2136 = vpack.c.b16 %v2017, %v2016
    %v2137 = vpack.c.b16 %v2019, %v2018
    %v2138 = vpack.c.b16 %v2021, %v2020
    %v2139 = vpack.c.b16 %v2023, %v2022
    %v2140 = vpack.c.b16 %v2025, %v2024
    %v2141 = vpack.c.b16 %v2027, %v2026
    %v2142 = vpack.c.b16 %v2029, %v2028
    %v2143 = vpack.c.b16 %v2031, %v2030
    %v2144 = vpack.c.b16 %v2033, %v2032
    %v2145 = vpack.c.b16 %v2035, %v2034
    %v2146 = vpack.c.b16 %v2037, %v2036
    %v2147 = vpack.c.b16 %v2039, %v2038
    %v2148 = vpack.c.b16 %v2041, %v2040
    %v2149 = vpack.c.b16 %v2043, %v2042
    %v2150 = vpack.c.b16 %v2045, %v2044
    %v2151 = vpack.c.b16 %v2047, %v2046
    %v2152 = vpack.c.b16 %v2049, %v2048
    %v2153 = vpack.c.b16 %v2051, %v2050
    %v2154 = vpack.c.b16 %v2053, %v2052
    %v2155 = vpack.c.b16 %v2055, %v2054
    %v2156 = vpack.c.b16 %v2057, %v2056
    %v2157 = vpack.c.b16 %v2059, %v2058
    %v2158 = vpack.c.b16 %v2061, %v2060
    %v2159 = vpack.c.b16 %v2063, %v2062
    %v2160 = vpack.c.b16 %v2065, %v2064
    %v2161 = vpack.c.b16 %v2067, %v2066
    %v2162 = vpack.c.b16 %v2069, %v2068
    %v2163 = vpack.c.b16 %v2071, %v2070
    %v2164 = vpack.c.b16 %v2073, %v2072
    %v2165 = vpack.c.b16 %v2075, %v2074
    %v2166 = vpack.c.b16 %v2077, %v2076
    %v2167 = vpack.c.b16 %v2079, %v2078
    %v2168 = vpack.c.b16 %v2081, %v2080
    %v2169 = vpack.c.b16 %v2083, %v2082
    %v2170 = vpack.c.b16 %v2085, %v2084
    %v2171 = vpack.c.b16 %v2087, %v2086
    %v2172 = vpack.c.b16 %v2089, %v2088
    %v2173 = vpack.c.b16 %v2091, %v2090
    %v2174 = vpack.c.b16 %v2093, %v2092
    %v2175 = vpack.c.b16 %v2095, %v2094
    %v2176 = vpack.c.b16 %v2097, %v2096
    %v2177 = vpack.c.b16 %v2099, %v2098
    %v2178 = vpack.c.b16 %v2101, %v2100
    %v2179 = vpack.c.b16 %v2103, %v2102
    %v2180 = vpack.c.b16 %v2105, %v2104
    %v2181 = vpack.c.b16 %v2107, %v2106
    %v2182 = vpack.c.b16 %v2109, %v2108
    %v2183 = vpack.c.b16 %v2111, %v2110
    %v2184 = vpack.c.b16 %v2113, %v2112
    %v2185 = vpack.c.b16 %v2115, %v2114
    %v2186 = vpack.c.b16 %v2117, %v2116
    %v2187 = vpack.c.b16 %v2119, %v2118
    %v2188 = vpack.c.b16 %v2121, %v2120
    %v2189 = vpack.c.b16 %v2123, %v2122
    %v2190 = vpack.c.b16 %v2125, %v2124
    %v2191 = vpack.c.b16 %v2127, %v2126
    %v2194 = vunpack.c.l.b16 %v1863
    %v2195 = vunpack.c.l.b16 %v1864
    %v2196 = vpack.c.b16 %v2195, %v2194
    %vm2198 = vcmask 130048
    %v2200 = vsel %vm2198, %v2128, 0
    %v2203 = vsel %vm2198, %v2129, 0
    %v2206 = vsel %vm2198, %v2130, 0
    %v2209 = vsel %vm2198, %v2131, 0
    %v2212 = vsel %vm2198, %v2132, 0
    %v2215 = vsel %vm2198, %v2133, 0
    %v2218 = vsel %vm2198, %v2134, 0
    %v2221 = vsel %vm2198, %v2135, 0
    %v2224 = vsel %vm2198, %v2136, 0
    %v2227 = vsel %vm2198, %v2137, 0
    %v2230 = vsel %vm2198, %v2138, 0
    %v2233 = vsel %vm2198, %v2139, 0
    %v2236 = vsel %vm2198, %v2140, 0
    %v2239 = vsel %vm2198, %v2141, 0
    %v2242 = vsel %vm2198, %v2142, 0
    %v2245 = vsel %vm2198, %v2143, 0
    %v2248 = vsel %vm2198, %v2144, 0
    %v2251 = vsel %vm2198, %v2145, 0
    %v2254 = vsel %vm2198, %v2146, 0
    %v2257 = vsel %vm2198, %v2147, 0
    %v2260 = vsel %vm2198, %v2148, 0
    %v2263 = vsel %vm2198, %v2149, 0
    %v2266 = vsel %vm2198, %v2150, 0
    %v2269 = vsel %vm2198, %v2151, 0
    %v2272 = vsel %vm2198, %v2152, 0
    %v2275 = vsel %vm2198, %v2153, 0
    %v2278 = vsel %vm2198, %v2154, 0
    %v2281 = vsel %vm2198, %v2155, 0
    %v2284 = vsel %vm2198, %v2156, 0
    %v2287 = vsel %vm2198, %v2157, 0
    %v2290 = vsel %vm2198, %v2158, 0
    %v2293 = vsel %vm2198, %v2159, 0
    %v2296 = vsel %vm2198, %v2160, 0
    %v2299 = vsel %vm2198, %v2161, 0
    %v2302 = vsel %vm2198, %v2162, 0
    %v2305 = vsel %vm2198, %v2163, 0
    %v2308 = vsel %vm2198, %v2164, 0
    %v2311 = vsel %vm2198, %v2165, 0
    %v2314 = vsel %vm2198, %v2166, 0
    %v2317 = vsel %vm2198, %v2167, 0
    %v2320 = vsel %vm2198, %v2168, 0
    %v2323 = vsel %vm2198, %v2169, 0
    %v2326 = vsel %vm2198, %v2170, 0
    %v2329 = vsel %vm2198, %v2171, 0
    %v2332 = vsel %vm2198, %v2172, 0
    %v2335 = vsel %vm2198, %v2173, 0
    %v2338 = vsel %vm2198, %v2174, 0
    %v2341 = vsel %vm2198, %v2175, 0
    %v2344 = vsel %vm2198, %v2176, 0
    %v2347 = vsel %vm2198, %v2177, 0
    %v2350 = vsel %vm2198, %v2178, 0
    %v2353 = vsel %vm2198, %v2179, 0
    %v2356 = vsel %vm2198, %v2180, 0
    %v2359 = vsel %vm2198, %v2181, 0
    %v2362 = vsel %vm2198, %v2182, 0
    %v2365 = vsel %vm2198, %v2183, 0
    %v2368 = vsel %vm2198, %v2184, 0
    %v2371 = vsel %vm2198, %v2185, 0
    %v2374 = vsel %vm2198, %v2186, 0
    %v2377 = vsel %vm2198, %v2187, 0
    %v2380 = vsel %vm2198, %v2188, 0
    %v2383 = vsel %vm2198, %v2189, 0
    %v2386 = vsel %vm2198, %v2190, 0
    %v2389 = vsel %vm2198, %v2191, 0
    %2391 = vmatprep.subr.bf16.mxu0 0
    %2392 = vmatpush1.bf16.msra.mxu0 %v2196
    %2393 = vmatprep.subr.bf16.mxu0 0
    %2394 = vmatpush1.bf16.msra.mxu0 0
    %2395 = vmatprep.subr.bf16.mxu0 0
    %2396 = vmatpush1.bf16.msra.mxu0 0
    %2397 = vmatprep.subr.bf16.mxu0 0
    %2398 = vmatpush1.bf16.msra.mxu0 0
    %2399 = vmatprep.subr.bf16.mxu0 0
    %2400 = vmatpush1.bf16.msra.mxu0 0
    %2401 = vmatprep.subr.bf16.mxu0 0
    %2402 = vmatpush1.bf16.msra.mxu0 0
    %2403 = vmatprep.subr.bf16.mxu0 0
    %2404 = vmatpush1.bf16.msra.mxu0 0
    %2405 = vmatprep.subr.bf16.mxu0 0
    %2406 = vmatpush1.bf16.msra.mxu0 0
    %2407 = vmatprep.subr.bf16.mxu0 0
    %2408 = vmatpush1.bf16.msra.mxu0 0
    %2409 = vmatprep.subr.bf16.mxu0 0
    %2410 = vmatpush1.bf16.msra.mxu0 0
    %2411 = vmatprep.subr.bf16.mxu0 0
    %2412 = vmatpush1.bf16.msra.mxu0 0
    %2413 = vmatprep.subr.bf16.mxu0 0
    %2414 = vmatpush1.bf16.msra.mxu0 0
    %2415 = vmatprep.subr.bf16.mxu0 0
    %2416 = vmatpush1.bf16.msra.mxu0 0
    %2417 = vmatprep.subr.bf16.mxu0 0
    %2418 = vmatpush1.bf16.msra.mxu0 0
    %2419 = vmatprep.subr.bf16.mxu0 0
    %2420 = vmatpush1.bf16.msra.mxu0 0
    %2421 = vmatprep.subr.bf16.mxu0 0
    %2422 = vmatpush1.bf16.msra.mxu0 0
    %2423 = vmatprep.mubr.bf16.mxu0 0
    %2424 = vmatmul.mubr.bf16.gmra.mrb[0].mxu0 %v2200
    %v2425 = vpop.f32.mrb[0].mxu0
    %v2426 = vadd.f32 %v1870, %v2425
    %v2427 = vpop.f32.mrb[0].mxu0
    %v2428 = vpop.f32.mrb[0].mxu0
    %v2429 = vadd.f32 %v1870, %v2428
    %v2430 = vpop.f32.mrb[0].mxu0
    %2431 = vmatprep.mubr.bf16.mxu0 0
    %2432 = vmatmul.mubr.bf16.gmra.mrb[0].mxu0 %v2203
    %v2433 = vpop.f32.mrb[0].mxu0
    %v2434 = vadd.f32 %v1870, %v2433
    %v2435 = vpop.f32.mrb[0].mxu0
    %v2436 = vpop.f32.mrb[0].mxu0
    %v2437 = vadd.f32 %v1870, %v2436
    %v2438 = vpop.f32.mrb[0].mxu0
    %2439 = vmatprep.mubr.bf16.mxu0 0
    %2440 = vmatmul.mubr.bf16.gmra.mrb[0].mxu0 %v2206
    %v2441 = vpop.f32.mrb[0].mxu0
    %v2442 = vadd.f32 %v1870, %v2441
    %v2443 = vpop.f32.mrb[0].mxu0
    %v2444 = vpop.f32.mrb[0].mxu0
    %v2445 = vadd.f32 %v1870, %v2444
    %v2446 = vpop.f32.mrb[0].mxu0
    %2447 = vmatprep.mubr.bf16.mxu0 0
    %2448 = vmatmul.mubr.bf16.gmra.mrb[0].mxu0 %v2209
    %v2449 = vpop.f32.mrb[0].mxu0
    %v2450 = vadd.f32 %v1870, %v2449
    %v2451 = vpop.f32.mrb[0].mxu0
    %v2452 = vpop.f32.mrb[0].mxu0
    %v2453 = vadd.f32 %v1870, %v2452
    %v2454 = vpop.f32.mrb[0].mxu0
    %2455 = vmatprep.mubr.bf16.mxu0 0
    %2456 = vmatmul.mubr.bf16.gmra.mrb[0].mxu0 %v2212
    %v2457 = vpop.f32.mrb[0].mxu0
    %v2458 = vadd.f32 %v1870, %v2457
    %v2459 = vpop.f32.mrb[0].mxu0
    %v2460 = vpop.f32.mrb[0].mxu0
    %v2461 = vadd.f32 %v1870, %v2460
    %v2462 = vpop.f32.mrb[0].mxu0
    %2463 = vmatprep.mubr.bf16.mxu0 0
    %2464 = vmatmul.mubr.bf16.gmra.mrb[0].mxu0 %v2215
    %v2465 = vpop.f32.mrb[0].mxu0
    %v2466 = vadd.f32 %v1870, %v2465
    %v2467 = vpop.f32.mrb[0].mxu0
    %v2468 = vpop.f32.mrb[0].mxu0
    %v2469 = vadd.f32 %v1870, %v2468
    %v2470 = vpop.f32.mrb[0].mxu0
    %2471 = vmatprep.mubr.bf16.mxu0 0
    %2472 = vmatmul.mubr.bf16.gmra.mrb[0].mxu0 %v2218
    %v2473 = vpop.f32.mrb[0].mxu0
    %v2474 = vadd.f32 %v1870, %v2473
    %v2475 = vpop.f32.mrb[0].mxu0
    %v2476 = vpop.f32.mrb[0].mxu0
    %v2477 = vadd.f32 %v1870, %v2476
    %v2478 = vpop.f32.mrb[0].mxu0
    %2479 = vmatprep.mubr.bf16.mxu0 0
    %2480 = vmatmul.mubr.bf16.gmra.mrb[0].mxu0 %v2221
    %v2481 = vpop.f32.mrb[0].mxu0
    %v2482 = vadd.f32 %v1870, %v2481
    %v2483 = vpop.f32.mrb[0].mxu0
    %v2484 = vpop.f32.mrb[0].mxu0
    %v2485 = vadd.f32 %v1870, %v2484
    %v2486 = vpop.f32.mrb[0].mxu0
    %2487 = vmatprep.mubr.bf16.mxu0 0
    %2488 = vmatmul.mubr.bf16.gmra.mrb[0].mxu0 %v2224
    %v2489 = vpop.f32.mrb[0].mxu0
    %v2490 = vadd.f32 %v1870, %v2489
    %v2491 = vpop.f32.mrb[0].mxu0
    %v2492 = vpop.f32.mrb[0].mxu0
    %v2493 = vadd.f32 %v1870, %v2492
    %v2494 = vpop.f32.mrb[0].mxu0
    %2495 = vmatprep.mubr.bf16.mxu0 0
    %2496 = vmatmul.mubr.bf16.gmra.mrb[0].mxu0 %v2227
    %v2497 = vpop.f32.mrb[0].mxu0
    %v2498 = vadd.f32 %v1870, %v2497
    %v2499 = vpop.f32.mrb[0].mxu0
    %v2500 = vpop.f32.mrb[0].mxu0
    %v2501 = vadd.f32 %v1870, %v2500
    %v2502 = vpop.f32.mrb[0].mxu0
    %2503 = vmatprep.mubr.bf16.mxu0 0
    %2504 = vmatmul.mubr.bf16.gmra.mrb[0].mxu0 %v2230
    %v2505 = vpop.f32.mrb[0].mxu0
    %v2506 = vadd.f32 %v1870, %v2505
    %v2507 = vpop.f32.mrb[0].mxu0
    %v2508 = vpop.f32.mrb[0].mxu0
    %v2509 = vadd.f32 %v1870, %v2508
    %v2510 = vpop.f32.mrb[0].mxu0
    %2511 = vmatprep.mubr.bf16.mxu0 0
    %2512 = vmatmul.mubr.bf16.gmra.mrb[0].mxu0 %v2233
    %v2513 = vpop.f32.mrb[0].mxu0
    %v2514 = vadd.f32 %v1870, %v2513
    %v2515 = vpop.f32.mrb[0].mxu0
    %v2516 = vpop.f32.mrb[0].mxu0
    %v2517 = vadd.f32 %v1870, %v2516
    %v2518 = vpop.f32.mrb[0].mxu0
    %2519 = vmatprep.mubr.bf16.mxu0 0
    %2520 = vmatmul.mubr.bf16.gmra.mrb[0].mxu0 %v2236
    %v2521 = vpop.f32.mrb[0].mxu0
    %v2522 = vadd.f32 %v1870, %v2521
    %v2523 = vpop.f32.mrb[0].mxu0
    %v2524 = vpop.f32.mrb[0].mxu0
    %v2525 = vadd.f32 %v1870, %v2524
    %v2526 = vpop.f32.mrb[0].mxu0
    %2527 = vmatprep.mubr.bf16.mxu0 0
    %2528 = vmatmul.mubr.bf16.gmra.mrb[0].mxu0 %v2239
    %v2529 = vpop.f32.mrb[0].mxu0
    %v2530 = vadd.f32 %v1870, %v2529
    %v2531 = vpop.f32.mrb[0].mxu0
    %v2532 = vpop.f32.mrb[0].mxu0
    %v2533 = vadd.f32 %v1870, %v2532
    %v2534 = vpop.f32.mrb[0].mxu0
    %2535 = vmatprep.mubr.bf16.mxu0 0
    %2536 = vmatmul.mubr.bf16.gmra.mrb[0].mxu0 %v2242
    %v2537 = vpop.f32.mrb[0].mxu0
    %v2538 = vadd.f32 %v1870, %v2537
    %v2539 = vpop.f32.mrb[0].mxu0
    %v2540 = vpop.f32.mrb[0].mxu0
    %v2541 = vadd.f32 %v1870, %v2540
    %v2542 = vpop.f32.mrb[0].mxu0
    %2543 = vmatprep.mubr.bf16.mxu0 0
    %2544 = vmatmul.mubr.bf16.gmra.mrb[0].mxu0 %v2245
    %v2545 = vpop.f32.mrb[0].mxu0
    %v2546 = vadd.f32 %v1870, %v2545
    %v2547 = vpop.f32.mrb[0].mxu0
    %v2548 = vpop.f32.mrb[0].mxu0
    %v2549 = vadd.f32 %v1870, %v2548
    %v2550 = vpop.f32.mrb[0].mxu0
    %2551 = vmatprep.mubr.bf16.mxu0 0
    %2552 = vmatmul.mubr.bf16.gmra.mrb[0].mxu0 %v2248
    %v2553 = vpop.f32.mrb[0].mxu0
    %v2554 = vadd.f32 %v1870, %v2553
    %v2555 = vpop.f32.mrb[0].mxu0
    %v2556 = vpop.f32.mrb[0].mxu0
    %v2557 = vadd.f32 %v1870, %v2556
    %v2558 = vpop.f32.mrb[0].mxu0
    %2559 = vmatprep.mubr.bf16.mxu0 0
    %2560 = vmatmul.mubr.bf16.gmra.mrb[0].mxu0 %v2251
    %v2561 = vpop.f32.mrb[0].mxu0
    %v2562 = vadd.f32 %v1870, %v2561
    %v2563 = vpop.f32.mrb[0].mxu0
    %v2564 = vpop.f32.mrb[0].mxu0
    %v2565 = vadd.f32 %v1870, %v2564
    %v2566 = vpop.f32.mrb[0].mxu0
    %2567 = vmatprep.mubr.bf16.mxu0 0
    %2568 = vmatmul.mubr.bf16.gmra.mrb[0].mxu0 %v2254
    %v2569 = vpop.f32.mrb[0].mxu0
    %v2570 = vadd.f32 %v1870, %v2569
    %v2571 = vpop.f32.mrb[0].mxu0
    %v2572 = vpop.f32.mrb[0].mxu0
    %v2573 = vadd.f32 %v1870, %v2572
    %v2574 = vpop.f32.mrb[0].mxu0
    %2575 = vmatprep.mubr.bf16.mxu0 0
    %2576 = vmatmul.mubr.bf16.gmra.mrb[0].mxu0 %v2257
    %v2577 = vpop.f32.mrb[0].mxu0
    %v2578 = vadd.f32 %v1870, %v2577
    %v2579 = vpop.f32.mrb[0].mxu0
    %v2580 = vpop.f32.mrb[0].mxu0
    %v2581 = vadd.f32 %v1870, %v2580
    %v2582 = vpop.f32.mrb[0].mxu0
    %2583 = vmatprep.mubr.bf16.mxu0 0
    %2584 = vmatmul.mubr.bf16.gmra.mrb[0].mxu0 %v2260
    %v2585 = vpop.f32.mrb[0].mxu0
    %v2586 = vadd.f32 %v1870, %v2585
    %v2587 = vpop.f32.mrb[0].mxu0
    %v2588 = vpop.f32.mrb[0].mxu0
    %v2589 = vadd.f32 %v1870, %v2588
    %v2590 = vpop.f32.mrb[0].mxu0
    %2591 = vmatprep.mubr.bf16.mxu0 0
    %2592 = vmatmul.mubr.bf16.gmra.mrb[0].mxu0 %v2263
    %v2593 = vpop.f32.mrb[0].mxu0
    %v2594 = vadd.f32 %v1870, %v2593
    %v2595 = vpop.f32.mrb[0].mxu0
    %v2596 = vpop.f32.mrb[0].mxu0
    %v2597 = vadd.f32 %v1870, %v2596
    %v2598 = vpop.f32.mrb[0].mxu0
    %2599 = vmatprep.mubr.bf16.mxu0 0
    %2600 = vmatmul.mubr.bf16.gmra.mrb[0].mxu0 %v2266
    %v2601 = vpop.f32.mrb[0].mxu0
    %v2602 = vadd.f32 %v1870, %v2601
    %v2603 = vpop.f32.mrb[0].mxu0
    %v2604 = vpop.f32.mrb[0].mxu0
    %v2605 = vadd.f32 %v1870, %v2604
    %v2606 = vpop.f32.mrb[0].mxu0
    %2607 = vmatprep.mubr.bf16.mxu0 0
    %2608 = vmatmul.mubr.bf16.gmra.mrb[0].mxu0 %v2269
    %v2609 = vpop.f32.mrb[0].mxu0
    %v2610 = vadd.f32 %v1870, %v2609
    %v2611 = vpop.f32.mrb[0].mxu0
    %v2612 = vpop.f32.mrb[0].mxu0
    %v2613 = vadd.f32 %v1870, %v2612
    %v2614 = vpop.f32.mrb[0].mxu0
    %2615 = vmatprep.mubr.bf16.mxu0 0
    %2616 = vmatmul.mubr.bf16.gmra.mrb[0].mxu0 %v2272
    %v2617 = vpop.f32.mrb[0].mxu0
    %v2618 = vadd.f32 %v1870, %v2617
    %v2619 = vpop.f32.mrb[0].mxu0
    %v2620 = vpop.f32.mrb[0].mxu0
    %v2621 = vadd.f32 %v1870, %v2620
    %v2622 = vpop.f32.mrb[0].mxu0
    %2623 = vmatprep.mubr.bf16.mxu0 0
    %2624 = vmatmul.mubr.bf16.gmra.mrb[0].mxu0 %v2275
    %v2625 = vpop.f32.mrb[0].mxu0
    %v2626 = vadd.f32 %v1870, %v2625
    %v2627 = vpop.f32.mrb[0].mxu0
    %v2628 = vpop.f32.mrb[0].mxu0
    %v2629 = vadd.f32 %v1870, %v2628
    %v2630 = vpop.f32.mrb[0].mxu0
    %2631 = vmatprep.mubr.bf16.mxu0 0
    %2632 = vmatmul.mubr.bf16.gmra.mrb[0].mxu0 %v2278
    %v2633 = vpop.f32.mrb[0].mxu0
    %v2634 = vadd.f32 %v1870, %v2633
    %v2635 = vpop.f32.mrb[0].mxu0
    %v2636 = vpop.f32.mrb[0].mxu0
    %v2637 = vadd.f32 %v1870, %v2636
    %v2638 = vpop.f32.mrb[0].mxu0
    %2639 = vmatprep.mubr.bf16.mxu0 0
    %2640 = vmatmul.mubr.bf16.gmra.mrb[0].mxu0 %v2281
    %v2641 = vpop.f32.mrb[0].mxu0
    %v2642 = vadd.f32 %v1870, %v2641
    %v2643 = vpop.f32.mrb[0].mxu0
    %v2644 = vpop.f32.mrb[0].mxu0
    %v2645 = vadd.f32 %v1870, %v2644
    %v2646 = vpop.f32.mrb[0].mxu0
    %2647 = vmatprep.mubr.bf16.mxu0 0
    %2648 = vmatmul.mubr.bf16.gmra.mrb[0].mxu0 %v2284
    %v2649 = vpop.f32.mrb[0].mxu0
    %v2650 = vadd.f32 %v1870, %v2649
    %v2651 = vpop.f32.mrb[0].mxu0
    %v2652 = vpop.f32.mrb[0].mxu0
    %v2653 = vadd.f32 %v1870, %v2652
    %v2654 = vpop.f32.mrb[0].mxu0
    %2655 = vmatprep.mubr.bf16.mxu0 0
    %2656 = vmatmul.mubr.bf16.gmra.mrb[0].mxu0 %v2287
    %v2657 = vpop.f32.mrb[0].mxu0
    %v2658 = vadd.f32 %v1870, %v2657
    %v2659 = vpop.f32.mrb[0].mxu0
    %v2660 = vpop.f32.mrb[0].mxu0
    %v2661 = vadd.f32 %v1870, %v2660
    %v2662 = vpop.f32.mrb[0].mxu0
    %2663 = vmatprep.mubr.bf16.mxu0 0
    %2664 = vmatmul.mubr.bf16.gmra.mrb[0].mxu0 %v2290
    %v2665 = vpop.f32.mrb[0].mxu0
    %v2666 = vadd.f32 %v1870, %v2665
    %v2667 = vpop.f32.mrb[0].mxu0
    %v2668 = vpop.f32.mrb[0].mxu0
    %v2669 = vadd.f32 %v1870, %v2668
    %v2670 = vpop.f32.mrb[0].mxu0
    %2671 = vmatprep.mubr.bf16.mxu0 0
    %2672 = vmatmul.mubr.bf16.gmra.mrb[0].mxu0 %v2293
    %v2673 = vpop.f32.mrb[0].mxu0
    %v2674 = vadd.f32 %v1870, %v2673
    %v2675 = vpop.f32.mrb[0].mxu0
    %v2676 = vpop.f32.mrb[0].mxu0
    %v2677 = vadd.f32 %v1870, %v2676
    %v2678 = vpop.f32.mrb[0].mxu0
    %2679 = vmatprep.mubr.bf16.mxu0 0
    %2680 = vmatmul.mubr.bf16.gmra.mrb[0].mxu0 %v2296
    %v2681 = vpop.f32.mrb[0].mxu0
    %v2682 = vadd.f32 %v1870, %v2681
    %v2683 = vpop.f32.mrb[0].mxu0
    %v2684 = vpop.f32.mrb[0].mxu0
    %v2685 = vadd.f32 %v1870, %v2684
    %v2686 = vpop.f32.mrb[0].mxu0
    %2687 = vmatprep.mubr.bf16.mxu0 0
    %2688 = vmatmul.mubr.bf16.gmra.mrb[0].mxu0 %v2299
    %v2689 = vpop.f32.mrb[0].mxu0
    %v2690 = vadd.f32 %v1870, %v2689
    %v2691 = vpop.f32.mrb[0].mxu0
    %v2692 = vpop.f32.mrb[0].mxu0
    %v2693 = vadd.f32 %v1870, %v2692
    %v2694 = vpop.f32.mrb[0].mxu0
    %2695 = vmatprep.mubr.bf16.mxu0 0
    %2696 = vmatmul.mubr.bf16.gmra.mrb[0].mxu0 %v2302
    %v2697 = vpop.f32.mrb[0].mxu0
    %v2698 = vadd.f32 %v1870, %v2697
    %v2699 = vpop.f32.mrb[0].mxu0
    %v2700 = vpop.f32.mrb[0].mxu0
    %v2701 = vadd.f32 %v1870, %v2700
    %v2702 = vpop.f32.mrb[0].mxu0
    %2703 = vmatprep.mubr.bf16.mxu0 0
    %2704 = vmatmul.mubr.bf16.gmra.mrb[0].mxu0 %v2305
    %v2705 = vpop.f32.mrb[0].mxu0
    %v2706 = vadd.f32 %v1870, %v2705
    %v2707 = vpop.f32.mrb[0].mxu0
    %v2708 = vpop.f32.mrb[0].mxu0
    %v2709 = vadd.f32 %v1870, %v2708
    %v2710 = vpop.f32.mrb[0].mxu0
    %2711 = vmatprep.mubr.bf16.mxu0 0
    %2712 = vmatmul.mubr.bf16.gmra.mrb[0].mxu0 %v2308
    %v2713 = vpop.f32.mrb[0].mxu0
    %v2714 = vadd.f32 %v1870, %v2713
    %v2715 = vpop.f32.mrb[0].mxu0
    %v2716 = vpop.f32.mrb[0].mxu0
    %v2717 = vadd.f32 %v1870, %v2716
    %v2718 = vpop.f32.mrb[0].mxu0
    %2719 = vmatprep.mubr.bf16.mxu0 0
    %2720 = vmatmul.mubr.bf16.gmra.mrb[0].mxu0 %v2311
    %v2721 = vpop.f32.mrb[0].mxu0
    %v2722 = vadd.f32 %v1870, %v2721
    %v2723 = vpop.f32.mrb[0].mxu0
    %v2724 = vpop.f32.mrb[0].mxu0
    %v2725 = vadd.f32 %v1870, %v2724
    %v2726 = vpop.f32.mrb[0].mxu0
    %2727 = vmatprep.mubr.bf16.mxu0 0
    %2728 = vmatmul.mubr.bf16.gmra.mrb[0].mxu0 %v2314
    %v2729 = vpop.f32.mrb[0].mxu0
    %v2730 = vadd.f32 %v1870, %v2729
    %v2731 = vpop.f32.mrb[0].mxu0
    %v2732 = vpop.f32.mrb[0].mxu0
    %v2733 = vadd.f32 %v1870, %v2732
    %v2734 = vpop.f32.mrb[0].mxu0
    %2735 = vmatprep.mubr.bf16.mxu0 0
    %2736 = vmatmul.mubr.bf16.gmra.mrb[0].mxu0 %v2317
    %v2737 = vpop.f32.mrb[0].mxu0
    %v2738 = vadd.f32 %v1870, %v2737
    %v2739 = vpop.f32.mrb[0].mxu0
    %v2740 = vpop.f32.mrb[0].mxu0
    %v2741 = vadd.f32 %v1870, %v2740
    %v2742 = vpop.f32.mrb[0].mxu0
    %2743 = vmatprep.mubr.bf16.mxu0 0
    %2744 = vmatmul.mubr.bf16.gmra.mrb[0].mxu0 %v2320
    %v2745 = vpop.f32.mrb[0].mxu0
    %v2746 = vadd.f32 %v1870, %v2745
    %v2747 = vpop.f32.mrb[0].mxu0
    %v2748 = vpop.f32.mrb[0].mxu0
    %v2749 = vadd.f32 %v1870, %v2748
    %v2750 = vpop.f32.mrb[0].mxu0
    %2751 = vmatprep.mubr.bf16.mxu0 0
    %2752 = vmatmul.mubr.bf16.gmra.mrb[0].mxu0 %v2323
    %v2753 = vpop.f32.mrb[0].mxu0
    %v2754 = vadd.f32 %v1870, %v2753
    %v2755 = vpop.f32.mrb[0].mxu0
    %v2756 = vpop.f32.mrb[0].mxu0
    %v2757 = vadd.f32 %v1870, %v2756
    %v2758 = vpop.f32.mrb[0].mxu0
    %2759 = vmatprep.mubr.bf16.mxu0 0
    %2760 = vmatmul.mubr.bf16.gmra.mrb[0].mxu0 %v2326
    %v2761 = vpop.f32.mrb[0].mxu0
    %v2762 = vadd.f32 %v1870, %v2761
    %v2763 = vpop.f32.mrb[0].mxu0
    %v2764 = vpop.f32.mrb[0].mxu0
    %v2765 = vadd.f32 %v1870, %v2764
    %v2766 = vpop.f32.mrb[0].mxu0
    %2767 = vmatprep.mubr.bf16.mxu0 0
    %2768 = vmatmul.mubr.bf16.gmra.mrb[0].mxu0 %v2329
    %v2769 = vpop.f32.mrb[0].mxu0
    %v2770 = vadd.f32 %v1870, %v2769
    %v2771 = vpop.f32.mrb[0].mxu0
    %v2772 = vpop.f32.mrb[0].mxu0
    %v2773 = vadd.f32 %v1870, %v2772
    %v2774 = vpop.f32.mrb[0].mxu0
    %2775 = vmatprep.mubr.bf16.mxu0 0
    %2776 = vmatmul.mubr.bf16.gmra.mrb[0].mxu0 %v2332
    %v2777 = vpop.f32.mrb[0].mxu0
    %v2778 = vadd.f32 %v1870, %v2777
    %v2779 = vpop.f32.mrb[0].mxu0
    %v2780 = vpop.f32.mrb[0].mxu0
    %v2781 = vadd.f32 %v1870, %v2780
    %v2782 = vpop.f32.mrb[0].mxu0
    %2783 = vmatprep.mubr.bf16.mxu0 0
    %2784 = vmatmul.mubr.bf16.gmra.mrb[0].mxu0 %v2335
    %v2785 = vpop.f32.mrb[0].mxu0
    %v2786 = vadd.f32 %v1870, %v2785
    %v2787 = vpop.f32.mrb[0].mxu0
    %v2788 = vpop.f32.mrb[0].mxu0
    %v2789 = vadd.f32 %v1870, %v2788
    %v2790 = vpop.f32.mrb[0].mxu0
    %2791 = vmatprep.mubr.bf16.mxu0 0
    %2792 = vmatmul.mubr.bf16.gmra.mrb[0].mxu0 %v2338
    %v2793 = vpop.f32.mrb[0].mxu0
    %v2794 = vadd.f32 %v1870, %v2793
    %v2795 = vpop.f32.mrb[0].mxu0
    %v2796 = vpop.f32.mrb[0].mxu0
    %v2797 = vadd.f32 %v1870, %v2796
    %v2798 = vpop.f32.mrb[0].mxu0
    %2799 = vmatprep.mubr.bf16.mxu0 0
    %2800 = vmatmul.mubr.bf16.gmra.mrb[0].mxu0 %v2341
    %v2801 = vpop.f32.mrb[0].mxu0
    %v2802 = vadd.f32 %v1870, %v2801
    %v2803 = vpop.f32.mrb[0].mxu0
    %v2804 = vpop.f32.mrb[0].mxu0
    %v2805 = vadd.f32 %v1870, %v2804
    %v2806 = vpop.f32.mrb[0].mxu0
    %2807 = vmatprep.mubr.bf16.mxu0 0
    %2808 = vmatmul.mubr.bf16.gmra.mrb[0].mxu0 %v2344
    %v2809 = vpop.f32.mrb[0].mxu0
    %v2810 = vadd.f32 %v1870, %v2809
    %v2811 = vpop.f32.mrb[0].mxu0
    %v2812 = vpop.f32.mrb[0].mxu0
    %v2813 = vadd.f32 %v1870, %v2812
    %v2814 = vpop.f32.mrb[0].mxu0
    %2815 = vmatprep.mubr.bf16.mxu0 0
    %2816 = vmatmul.mubr.bf16.gmra.mrb[0].mxu0 %v2347
    %v2817 = vpop.f32.mrb[0].mxu0
    %v2818 = vadd.f32 %v1870, %v2817
    %v2819 = vpop.f32.mrb[0].mxu0
    %v2820 = vpop.f32.mrb[0].mxu0
    %v2821 = vadd.f32 %v1870, %v2820
    %v2822 = vpop.f32.mrb[0].mxu0
    %2823 = vmatprep.mubr.bf16.mxu0 0
    %2824 = vmatmul.mubr.bf16.gmra.mrb[0].mxu0 %v2350
    %v2825 = vpop.f32.mrb[0].mxu0
    %v2826 = vadd.f32 %v1870, %v2825
    %v2827 = vpop.f32.mrb[0].mxu0
    %v2828 = vpop.f32.mrb[0].mxu0
    %v2829 = vadd.f32 %v1870, %v2828
    %v2830 = vpop.f32.mrb[0].mxu0
    %2831 = vmatprep.mubr.bf16.mxu0 0
    %2832 = vmatmul.mubr.bf16.gmra.mrb[0].mxu0 %v2353
    %v2833 = vpop.f32.mrb[0].mxu0
    %v2834 = vadd.f32 %v1870, %v2833
    %v2835 = vpop.f32.mrb[0].mxu0
    %v2836 = vpop.f32.mrb[0].mxu0
    %v2837 = vadd.f32 %v1870, %v2836
    %v2838 = vpop.f32.mrb[0].mxu0
    %2839 = vmatprep.mubr.bf16.mxu0 0
    %2840 = vmatmul.mubr.bf16.gmra.mrb[0].mxu0 %v2356
    %v2841 = vpop.f32.mrb[0].mxu0
    %v2842 = vadd.f32 %v1870, %v2841
    %v2843 = vpop.f32.mrb[0].mxu0
    %v2844 = vpop.f32.mrb[0].mxu0
    %v2845 = vadd.f32 %v1870, %v2844
    %v2846 = vpop.f32.mrb[0].mxu0
    %2847 = vmatprep.mubr.bf16.mxu0 0
    %2848 = vmatmul.mubr.bf16.gmra.mrb[0].mxu0 %v2359
    %v2849 = vpop.f32.mrb[0].mxu0
    %v2850 = vadd.f32 %v1870, %v2849
    %v2851 = vpop.f32.mrb[0].mxu0
    %v2852 = vpop.f32.mrb[0].mxu0
    %v2853 = vadd.f32 %v1870, %v2852
    %v2854 = vpop.f32.mrb[0].mxu0
    %2855 = vmatprep.mubr.bf16.mxu0 0
    %2856 = vmatmul.mubr.bf16.gmra.mrb[0].mxu0 %v2362
    %v2857 = vpop.f32.mrb[0].mxu0
    %v2858 = vadd.f32 %v1870, %v2857
    %v2859 = vpop.f32.mrb[0].mxu0
    %v2860 = vpop.f32.mrb[0].mxu0
    %v2861 = vadd.f32 %v1870, %v2860
    %v2862 = vpop.f32.mrb[0].mxu0
    %2863 = vmatprep.mubr.bf16.mxu0 0
    %2864 = vmatmul.mubr.bf16.gmra.mrb[0].mxu0 %v2365
    %v2865 = vpop.f32.mrb[0].mxu0
    %v2866 = vadd.f32 %v1870, %v2865
    %v2867 = vpop.f32.mrb[0].mxu0
    %v2868 = vpop.f32.mrb[0].mxu0
    %v2869 = vadd.f32 %v1870, %v2868
    %v2870 = vpop.f32.mrb[0].mxu0
    %2871 = vmatprep.mubr.bf16.mxu0 0
    %2872 = vmatmul.mubr.bf16.gmra.mrb[0].mxu0 %v2368
    %v2873 = vpop.f32.mrb[0].mxu0
    %v2874 = vadd.f32 %v1870, %v2873
    %v2875 = vpop.f32.mrb[0].mxu0
    %v2876 = vpop.f32.mrb[0].mxu0
    %v2877 = vadd.f32 %v1870, %v2876
    %v2878 = vpop.f32.mrb[0].mxu0
    %2879 = vmatprep.mubr.bf16.mxu0 0
    %2880 = vmatmul.mubr.bf16.gmra.mrb[0].mxu0 %v2371
    %v2881 = vpop.f32.mrb[0].mxu0
    %v2882 = vadd.f32 %v1870, %v2881
    %v2883 = vpop.f32.mrb[0].mxu0
    %v2884 = vpop.f32.mrb[0].mxu0
    %v2885 = vadd.f32 %v1870, %v2884
    %v2886 = vpop.f32.mrb[0].mxu0
    %2887 = vmatprep.mubr.bf16.mxu0 0
    %2888 = vmatmul.mubr.bf16.gmra.mrb[0].mxu0 %v2374
    %v2889 = vpop.f32.mrb[0].mxu0
    %v2890 = vadd.f32 %v1870, %v2889
    %v2891 = vpop.f32.mrb[0].mxu0
    %v2892 = vpop.f32.mrb[0].mxu0
    %v2893 = vadd.f32 %v1870, %v2892
    %v2894 = vpop.f32.mrb[0].mxu0
    %2895 = vmatprep.mubr.bf16.mxu0 0
    %2896 = vmatmul.mubr.bf16.gmra.mrb[0].mxu0 %v2377
    %v2897 = vpop.f32.mrb[0].mxu0
    %v2898 = vadd.f32 %v1870, %v2897
    %v2899 = vpop.f32.mrb[0].mxu0
    %v2900 = vpop.f32.mrb[0].mxu0
    %v2901 = vadd.f32 %v1870, %v2900
    %v2902 = vpop.f32.mrb[0].mxu0
    %2903 = vmatprep.mubr.bf16.mxu0 0
    %2904 = vmatmul.mubr.bf16.gmra.mrb[0].mxu0 %v2380
    %v2905 = vpop.f32.mrb[0].mxu0
    %v2906 = vadd.f32 %v1870, %v2905
    %v2907 = vpop.f32.mrb[0].mxu0
    %v2908 = vpop.f32.mrb[0].mxu0
    %v2909 = vadd.f32 %v1870, %v2908
    %v2910 = vpop.f32.mrb[0].mxu0
    %2911 = vmatprep.mubr.bf16.mxu0 0
    %2912 = vmatmul.mubr.bf16.gmra.mrb[0].mxu0 %v2383
    %v2913 = vpop.f32.mrb[0].mxu0
    %v2914 = vadd.f32 %v1870, %v2913
    %v2915 = vpop.f32.mrb[0].mxu0
    %v2916 = vpop.f32.mrb[0].mxu0
    %v2917 = vadd.f32 %v1870, %v2916
    %v2918 = vpop.f32.mrb[0].mxu0
    %2919 = vmatprep.mubr.bf16.mxu0 0
    %2920 = vmatmul.mubr.bf16.gmra.mrb[0].mxu0 %v2386
    %v2921 = vpop.f32.mrb[0].mxu0
    %v2922 = vadd.f32 %v1870, %v2921
    %v2923 = vpop.f32.mrb[0].mxu0
    %v2924 = vpop.f32.mrb[0].mxu0
    %v2925 = vadd.f32 %v1870, %v2924
    %v2926 = vpop.f32.mrb[0].mxu0
    %2927 = vmatprep.mubr.bf16.mxu0 0
    %2928 = vmatmul.mubr.bf16.gmra.mrb[0].mxu0 %v2389
    %v2929 = vpop.f32.mrb[0].mxu0
    %v2930 = vadd.f32 %v1870, %v2929
    %v2931 = vpop.f32.mrb[0].mxu0
    %v2932 = vpop.f32.mrb[0].mxu0
    %v2933 = vadd.f32 %v1870, %v2932
    %v2934 = vpop.f32.mrb[0].mxu0
    %2935 = vdwg.mxu0
    %v2936 = vmax.f32 %v2426, 0.0
    %v2937 = vmax.f32 %v2429, 0.0
    %v2938 = vmax.f32 %v2434, 0.0
    %v2939 = vmax.f32 %v2437, 0.0
    %v2940 = vmax.f32 %v2442, 0.0
    %v2941 = vmax.f32 %v2445, 0.0
    %v2942 = vmax.f32 %v2450, 0.0
    %v2943 = vmax.f32 %v2453, 0.0
    %v2944 = vmax.f32 %v2458, 0.0
    %v2945 = vmax.f32 %v2461, 0.0
    %v2946 = vmax.f32 %v2466, 0.0
    %v2947 = vmax.f32 %v2469, 0.0
    %v2948 = vmax.f32 %v2474, 0.0
    %v2949 = vmax.f32 %v2477, 0.0
    %v2950 = vmax.f32 %v2482, 0.0
    %v2951 = vmax.f32 %v2485, 0.0
    %v2952 = vmax.f32 %v2490, 0.0
    %v2953 = vmax.f32 %v2493, 0.0
    %v2954 = vmax.f32 %v2498, 0.0
    %v2955 = vmax.f32 %v2501, 0.0
    %v2956 = vmax.f32 %v2506, 0.0
    %v2957 = vmax.f32 %v2509, 0.0
    %v2958 = vmax.f32 %v2514, 0.0
    %v2959 = vmax.f32 %v2517, 0.0
    %v2960 = vmax.f32 %v2522, 0.0
    %v2961 = vmax.f32 %v2525, 0.0
    %v2962 = vmax.f32 %v2530, 0.0
    %v2963 = vmax.f32 %v2533, 0.0
    %v2964 = vmax.f32 %v2538, 0.0
    %v2965 = vmax.f32 %v2541, 0.0
    %v2966 = vmax.f32 %v2546, 0.0
    %v2967 = vmax.f32 %v2549, 0.0
    %v2968 = vmax.f32 %v2554, 0.0
    %v2969 = vmax.f32 %v2557, 0.0
    %v2970 = vmax.f32 %v2562, 0.0
    %v2971 = vmax.f32 %v2565, 0.0
    %v2972 = vmax.f32 %v2570, 0.0
    %v2973 = vmax.f32 %v2573, 0.0
    %v2974 = vmax.f32 %v2578, 0.0
    %v2975 = vmax.f32 %v2581, 0.0
    %v2976 = vmax.f32 %v2586, 0.0
    %v2977 = vmax.f32 %v2589, 0.0
    %v2978 = vmax.f32 %v2594, 0.0
    %v2979 = vmax.f32 %v2597, 0.0
    %v2980 = vmax.f32 %v2602, 0.0
    %v2981 = vmax.f32 %v2605, 0.0
    %v2982 = vmax.f32 %v2610, 0.0
    %v2983 = vmax.f32 %v2613, 0.0
    %v2984 = vmax.f32 %v2618, 0.0
    %v2985 = vmax.f32 %v2621, 0.0
    %v2986 = vmax.f32 %v2626, 0.0
    %v2987 = vmax.f32 %v2629, 0.0
    %v2988 = vmax.f32 %v2634, 0.0
    %v2989 = vmax.f32 %v2637, 0.0
    %v2990 = vmax.f32 %v2642, 0.0
    %v2991 = vmax.f32 %v2645, 0.0
    %v2992 = vmax.f32 %v2650, 0.0
    %v2993 = vmax.f32 %v2653, 0.0
    %v2994 = vmax.f32 %v2658, 0.0
    %v2995 = vmax.f32 %v2661, 0.0
    %v2996 = vmax.f32 %v2666, 0.0
    %v2997 = vmax.f32 %v2669, 0.0
    %v2998 = vmax.f32 %v2674, 0.0
    %v2999 = vmax.f32 %v2677, 0.0
    %v3000 = vmax.f32 %v2682, 0.0
    %v3001 = vmax.f32 %v2685, 0.0
    %v3002 = vmax.f32 %v2690, 0.0
    %v3003 = vmax.f32 %v2693, 0.0
    %v3004 = vmax.f32 %v2698, 0.0
    %v3005 = vmax.f32 %v2701, 0.0
    %v3006 = vmax.f32 %v2706, 0.0
    %v3007 = vmax.f32 %v2709, 0.0
    %v3008 = vmax.f32 %v2714, 0.0
    %v3009 = vmax.f32 %v2717, 0.0
    %v3010 = vmax.f32 %v2722, 0.0
    %v3011 = vmax.f32 %v2725, 0.0
    %v3012 = vmax.f32 %v2730, 0.0
    %v3013 = vmax.f32 %v2733, 0.0
    %v3014 = vmax.f32 %v2738, 0.0
    %v3015 = vmax.f32 %v2741, 0.0
    %v3016 = vmax.f32 %v2746, 0.0
    %v3017 = vmax.f32 %v2749, 0.0
    %v3018 = vmax.f32 %v2754, 0.0
    %v3019 = vmax.f32 %v2757, 0.0
    %v3020 = vmax.f32 %v2762, 0.0
    %v3021 = vmax.f32 %v2765, 0.0
    %v3022 = vmax.f32 %v2770, 0.0
    %v3023 = vmax.f32 %v2773, 0.0
    %v3024 = vmax.f32 %v2778, 0.0
    %v3025 = vmax.f32 %v2781, 0.0
    %v3026 = vmax.f32 %v2786, 0.0
    %v3027 = vmax.f32 %v2789, 0.0
    %v3028 = vmax.f32 %v2794, 0.0
    %v3029 = vmax.f32 %v2797, 0.0
    %v3030 = vmax.f32 %v2802, 0.0
    %v3031 = vmax.f32 %v2805, 0.0
    %v3032 = vmax.f32 %v2810, 0.0
    %v3033 = vmax.f32 %v2813, 0.0
    %v3034 = vmax.f32 %v2818, 0.0
    %v3035 = vmax.f32 %v2821, 0.0
    %v3036 = vmax.f32 %v2826, 0.0
    %v3037 = vmax.f32 %v2829, 0.0
    %v3038 = vmax.f32 %v2834, 0.0
    %v3039 = vmax.f32 %v2837, 0.0
    %v3040 = vmax.f32 %v2842, 0.0
    %v3041 = vmax.f32 %v2845, 0.0
    %v3042 = vmax.f32 %v2850, 0.0
    %v3043 = vmax.f32 %v2853, 0.0
    %v3044 = vmax.f32 %v2858, 0.0
    %v3045 = vmax.f32 %v2861, 0.0
    %v3046 = vmax.f32 %v2866, 0.0
    %v3047 = vmax.f32 %v2869, 0.0
    %v3048 = vmax.f32 %v2874, 0.0
    %v3049 = vmax.f32 %v2877, 0.0
    %v3050 = vmax.f32 %v2882, 0.0
    %v3051 = vmax.f32 %v2885, 0.0
    %v3052 = vmax.f32 %v2890, 0.0
    %v3053 = vmax.f32 %v2893, 0.0
    %v3054 = vmax.f32 %v2898, 0.0
    %v3055 = vmax.f32 %v2901, 0.0
    %v3056 = vmax.f32 %v2906, 0.0
    %v3057 = vmax.f32 %v2909, 0.0
    %v3058 = vmax.f32 %v2914, 0.0
    %v3059 = vmax.f32 %v2917, 0.0
    %v3060 = vmax.f32 %v2922, 0.0
    %v3061 = vmax.f32 %v2925, 0.0
    %v3062 = vmax.f32 %v2930, 0.0
    %v3063 = vmax.f32 %v2933, 0.0
    %vm3064 = vcmask 523264
    %v3065 = vsel %vm3064, %v2936, -inf
    %v3066 = vsel %vm3064, %v2937, -inf
    %v3067 = vmax.f32 %v3065, %v3066
    %v3068 = vrot.slane %v3067, 4
    %v3069 = vmax.f32 %v3067, %v3068
    %v3070 = vrot.slane %v3069, 2
    %v3071 = vmax.f32 %v3069, %v3070
    %v3072 = vrot.slane %v3071, 1
    %v3073 = vmax.f32 %v3071, %v3072
    %v3074 = vsel %vm3064, %v2938, -inf
    %v3075 = vsel %vm3064, %v2939, -inf
    %v3076 = vmax.f32 %v3074, %v3075
    %v3077 = vrot.slane %v3076, 4
    %v3078 = vmax.f32 %v3076, %v3077
    %v3079 = vrot.slane %v3078, 2
    %v3080 = vmax.f32 %v3078, %v3079
    %v3081 = vrot.slane %v3080, 1
    %v3082 = vmax.f32 %v3080, %v3081
    %v3083 = vsel %vm3064, %v2940, -inf
    %v3084 = vsel %vm3064, %v2941, -inf
    %v3085 = vmax.f32 %v3083, %v3084
    %v3086 = vrot.slane %v3085, 4
    %v3087 = vmax.f32 %v3085, %v3086
    %v3088 = vrot.slane %v3087, 2
    %v3089 = vmax.f32 %v3087, %v3088
    %v3090 = vrot.slane %v3089, 1
    %v3091 = vmax.f32 %v3089, %v3090
    %v3092 = vsel %vm3064, %v2942, -inf
    %v3093 = vsel %vm3064, %v2943, -inf
    %v3094 = vmax.f32 %v3092, %v3093
    %v3095 = vrot.slane %v3094, 4
    %v3096 = vmax.f32 %v3094, %v3095
    %v3097 = vrot.slane %v3096, 2
    %v3098 = vmax.f32 %v3096, %v3097
    %v3099 = vrot.slane %v3098, 1
    %v3100 = vmax.f32 %v3098, %v3099
    %v3101 = vsel %vm3064, %v2944, -inf
    %v3102 = vsel %vm3064, %v2945, -inf
    %v3103 = vmax.f32 %v3101, %v3102
    %v3104 = vrot.slane %v3103, 4
    %v3105 = vmax.f32 %v3103, %v3104
    %v3106 = vrot.slane %v3105, 2
    %v3107 = vmax.f32 %v3105, %v3106
    %v3108 = vrot.slane %v3107, 1
    %v3109 = vmax.f32 %v3107, %v3108
    %v3110 = vsel %vm3064, %v2946, -inf
    %v3111 = vsel %vm3064, %v2947, -inf
    %v3112 = vmax.f32 %v3110, %v3111
    %v3113 = vrot.slane %v3112, 4
    %v3114 = vmax.f32 %v3112, %v3113
    %v3115 = vrot.slane %v3114, 2
    %v3116 = vmax.f32 %v3114, %v3115
    %v3117 = vrot.slane %v3116, 1
    %v3118 = vmax.f32 %v3116, %v3117
    %v3119 = vsel %vm3064, %v2948, -inf
    %v3120 = vsel %vm3064, %v2949, -inf
    %v3121 = vmax.f32 %v3119, %v3120
    %v3122 = vrot.slane %v3121, 4
    %v3123 = vmax.f32 %v3121, %v3122
    %v3124 = vrot.slane %v3123, 2
    %v3125 = vmax.f32 %v3123, %v3124
    %v3126 = vrot.slane %v3125, 1
    %v3127 = vmax.f32 %v3125, %v3126
    %v3128 = vsel %vm3064, %v2950, -inf
    %v3129 = vsel %vm3064, %v2951, -inf
    %v3130 = vmax.f32 %v3128, %v3129
    %v3131 = vrot.slane %v3130, 4
    %v3132 = vmax.f32 %v3130, %v3131
    %v3133 = vrot.slane %v3132, 2
    %v3134 = vmax.f32 %v3132, %v3133
    %v3135 = vrot.slane %v3134, 1
    %v3136 = vmax.f32 %v3134, %v3135
    %v3137 = vsel %vm3064, %v2952, -inf
    %v3138 = vsel %vm3064, %v2953, -inf
    %v3139 = vmax.f32 %v3137, %v3138
    %v3140 = vrot.slane %v3139, 4
    %v3141 = vmax.f32 %v3139, %v3140
    %v3142 = vrot.slane %v3141, 2
    %v3143 = vmax.f32 %v3141, %v3142
    %v3144 = vrot.slane %v3143, 1
    %v3145 = vmax.f32 %v3143, %v3144
    %v3146 = vsel %vm3064, %v2954, -inf
    %v3147 = vsel %vm3064, %v2955, -inf
    %v3148 = vmax.f32 %v3146, %v3147
    %v3149 = vrot.slane %v3148, 4
    %v3150 = vmax.f32 %v3148, %v3149
    %v3151 = vrot.slane %v3150, 2
    %v3152 = vmax.f32 %v3150, %v3151
    %v3153 = vrot.slane %v3152, 1
    %v3154 = vmax.f32 %v3152, %v3153
    %v3155 = vsel %vm3064, %v2956, -inf
    %v3156 = vsel %vm3064, %v2957, -inf
    %v3157 = vmax.f32 %v3155, %v3156
    %v3158 = vrot.slane %v3157, 4
    %v3159 = vmax.f32 %v3157, %v3158
    %v3160 = vrot.slane %v3159, 2
    %v3161 = vmax.f32 %v3159, %v3160
    %v3162 = vrot.slane %v3161, 1
    %v3163 = vmax.f32 %v3161, %v3162
    %v3164 = vsel %vm3064, %v2958, -inf
    %v3165 = vsel %vm3064, %v2959, -inf
    %v3166 = vmax.f32 %v3164, %v3165
    %v3167 = vrot.slane %v3166, 4
    %v3168 = vmax.f32 %v3166, %v3167
    %v3169 = vrot.slane %v3168, 2
    %v3170 = vmax.f32 %v3168, %v3169
    %v3171 = vrot.slane %v3170, 1
    %v3172 = vmax.f32 %v3170, %v3171
    %v3173 = vsel %vm3064, %v2960, -inf
    %v3174 = vsel %vm3064, %v2961, -inf
    %v3175 = vmax.f32 %v3173, %v3174
    %v3176 = vrot.slane %v3175, 4
    %v3177 = vmax.f32 %v3175, %v3176
    %v3178 = vrot.slane %v3177, 2
    %v3179 = vmax.f32 %v3177, %v3178
    %v3180 = vrot.slane %v3179, 1
    %v3181 = vmax.f32 %v3179, %v3180
    %v3182 = vsel %vm3064, %v2962, -inf
    %v3183 = vsel %vm3064, %v2963, -inf
    %v3184 = vmax.f32 %v3182, %v3183
    %v3185 = vrot.slane %v3184, 4
    %v3186 = vmax.f32 %v3184, %v3185
    %v3187 = vrot.slane %v3186, 2
    %v3188 = vmax.f32 %v3186, %v3187
    %v3189 = vrot.slane %v3188, 1
    %v3190 = vmax.f32 %v3188, %v3189
    %v3191 = vsel %vm3064, %v2964, -inf
    %v3192 = vsel %vm3064, %v2965, -inf
    %v3193 = vmax.f32 %v3191, %v3192
    %v3194 = vrot.slane %v3193, 4
    %v3195 = vmax.f32 %v3193, %v3194
    %v3196 = vrot.slane %v3195, 2
    %v3197 = vmax.f32 %v3195, %v3196
    %v3198 = vrot.slane %v3197, 1
    %v3199 = vmax.f32 %v3197, %v3198
    %v3200 = vsel %vm3064, %v2966, -inf
    %v3201 = vsel %vm3064, %v2967, -inf
    %v3202 = vmax.f32 %v3200, %v3201
    %v3203 = vrot.slane %v3202, 4
    %v3204 = vmax.f32 %v3202, %v3203
    %v3205 = vrot.slane %v3204, 2
    %v3206 = vmax.f32 %v3204, %v3205
    %v3207 = vrot.slane %v3206, 1
    %v3208 = vmax.f32 %v3206, %v3207
    %v3209 = vsel %vm3064, %v2968, -inf
    %v3210 = vsel %vm3064, %v2969, -inf
    %v3211 = vmax.f32 %v3209, %v3210
    %v3212 = vrot.slane %v3211, 4
    %v3213 = vmax.f32 %v3211, %v3212
    %v3214 = vrot.slane %v3213, 2
    %v3215 = vmax.f32 %v3213, %v3214
    %v3216 = vrot.slane %v3215, 1
    %v3217 = vmax.f32 %v3215, %v3216
    %v3218 = vsel %vm3064, %v2970, -inf
    %v3219 = vsel %vm3064, %v2971, -inf
    %v3220 = vmax.f32 %v3218, %v3219
    %v3221 = vrot.slane %v3220, 4
    %v3222 = vmax.f32 %v3220, %v3221
    %v3223 = vrot.slane %v3222, 2
    %v3224 = vmax.f32 %v3222, %v3223
    %v3225 = vrot.slane %v3224, 1
    %v3226 = vmax.f32 %v3224, %v3225
    %v3227 = vsel %vm3064, %v2972, -inf
    %v3228 = vsel %vm3064, %v2973, -inf
    %v3229 = vmax.f32 %v3227, %v3228
    %v3230 = vrot.slane %v3229, 4
    %v3231 = vmax.f32 %v3229, %v3230
    %v3232 = vrot.slane %v3231, 2
    %v3233 = vmax.f32 %v3231, %v3232
    %v3234 = vrot.slane %v3233, 1
    %v3235 = vmax.f32 %v3233, %v3234
    %v3236 = vsel %vm3064, %v2974, -inf
    %v3237 = vsel %vm3064, %v2975, -inf
    %v3238 = vmax.f32 %v3236, %v3237
    %v3239 = vrot.slane %v3238, 4
    %v3240 = vmax.f32 %v3238, %v3239
    %v3241 = vrot.slane %v3240, 2
    %v3242 = vmax.f32 %v3240, %v3241
    %v3243 = vrot.slane %v3242, 1
    %v3244 = vmax.f32 %v3242, %v3243
    %v3245 = vsel %vm3064, %v2976, -inf
    %v3246 = vsel %vm3064, %v2977, -inf
    %v3247 = vmax.f32 %v3245, %v3246
    %v3248 = vrot.slane %v3247, 4
    %v3249 = vmax.f32 %v3247, %v3248
    %v3250 = vrot.slane %v3249, 2
    %v3251 = vmax.f32 %v3249, %v3250
    %v3252 = vrot.slane %v3251, 1
    %v3253 = vmax.f32 %v3251, %v3252
    %v3254 = vsel %vm3064, %v2978, -inf
    %v3255 = vsel %vm3064, %v2979, -inf
    %v3256 = vmax.f32 %v3254, %v3255
    %v3257 = vrot.slane %v3256, 4
    %v3258 = vmax.f32 %v3256, %v3257
    %v3259 = vrot.slane %v3258, 2
    %v3260 = vmax.f32 %v3258, %v3259
    %v3261 = vrot.slane %v3260, 1
    %v3262 = vmax.f32 %v3260, %v3261
    %v3263 = vsel %vm3064, %v2980, -inf
    %v3264 = vsel %vm3064, %v2981, -inf
    %v3265 = vmax.f32 %v3263, %v3264
    %v3266 = vrot.slane %v3265, 4
    %v3267 = vmax.f32 %v3265, %v3266
    %v3268 = vrot.slane %v3267, 2
    %v3269 = vmax.f32 %v3267, %v3268
    %v3270 = vrot.slane %v3269, 1
    %v3271 = vmax.f32 %v3269, %v3270
    %v3272 = vsel %vm3064, %v2982, -inf
    %v3273 = vsel %vm3064, %v2983, -inf
    %v3274 = vmax.f32 %v3272, %v3273
    %v3275 = vrot.slane %v3274, 4
    %v3276 = vmax.f32 %v3274, %v3275
    %v3277 = vrot.slane %v3276, 2
    %v3278 = vmax.f32 %v3276, %v3277
    %v3279 = vrot.slane %v3278, 1
    %v3280 = vmax.f32 %v3278, %v3279
    %v3281 = vsel %vm3064, %v2984, -inf
    %v3282 = vsel %vm3064, %v2985, -inf
    %v3283 = vmax.f32 %v3281, %v3282
    %v3284 = vrot.slane %v3283, 4
    %v3285 = vmax.f32 %v3283, %v3284
    %v3286 = vrot.slane %v3285, 2
    %v3287 = vmax.f32 %v3285, %v3286
    %v3288 = vrot.slane %v3287, 1
    %v3289 = vmax.f32 %v3287, %v3288
    %v3290 = vsel %vm3064, %v2986, -inf
    %v3291 = vsel %vm3064, %v2987, -inf
    %v3292 = vmax.f32 %v3290, %v3291
    %v3293 = vrot.slane %v3292, 4
    %v3294 = vmax.f32 %v3292, %v3293
    %v3295 = vrot.slane %v3294, 2
    %v3296 = vmax.f32 %v3294, %v3295
    %v3297 = vrot.slane %v3296, 1
    %v3298 = vmax.f32 %v3296, %v3297
    %v3299 = vsel %vm3064, %v2988, -inf
    %v3300 = vsel %vm3064, %v2989, -inf
    %v3301 = vmax.f32 %v3299, %v3300
    %v3302 = vrot.slane %v3301, 4
    %v3303 = vmax.f32 %v3301, %v3302
    %v3304 = vrot.slane %v3303, 2
    %v3305 = vmax.f32 %v3303, %v3304
    %v3306 = vrot.slane %v3305, 1
    %v3307 = vmax.f32 %v3305, %v3306
    %v3308 = vsel %vm3064, %v2990, -inf
    %v3309 = vsel %vm3064, %v2991, -inf
    %v3310 = vmax.f32 %v3308, %v3309
    %v3311 = vrot.slane %v3310, 4
    %v3312 = vmax.f32 %v3310, %v3311
    %v3313 = vrot.slane %v3312, 2
    %v3314 = vmax.f32 %v3312, %v3313
    %v3315 = vrot.slane %v3314, 1
    %v3316 = vmax.f32 %v3314, %v3315
    %v3317 = vsel %vm3064, %v2992, -inf
    %v3318 = vsel %vm3064, %v2993, -inf
    %v3319 = vmax.f32 %v3317, %v3318
    %v3320 = vrot.slane %v3319, 4
    %v3321 = vmax.f32 %v3319, %v3320
    %v3322 = vrot.slane %v3321, 2
    %v3323 = vmax.f32 %v3321, %v3322
    %v3324 = vrot.slane %v3323, 1
    %v3325 = vmax.f32 %v3323, %v3324
    %v3326 = vsel %vm3064, %v2994, -inf
    %v3327 = vsel %vm3064, %v2995, -inf
    %v3328 = vmax.f32 %v3326, %v3327
    %v3329 = vrot.slane %v3328, 4
    %v3330 = vmax.f32 %v3328, %v3329
    %v3331 = vrot.slane %v3330, 2
    %v3332 = vmax.f32 %v3330, %v3331
    %v3333 = vrot.slane %v3332, 1
    %v3334 = vmax.f32 %v3332, %v3333
    %v3335 = vsel %vm3064, %v2996, -inf
    %v3336 = vsel %vm3064, %v2997, -inf
    %v3337 = vmax.f32 %v3335, %v3336
    %v3338 = vrot.slane %v3337, 4
    %v3339 = vmax.f32 %v3337, %v3338
    %v3340 = vrot.slane %v3339, 2
    %v3341 = vmax.f32 %v3339, %v3340
    %v3342 = vrot.slane %v3341, 1
    %v3343 = vmax.f32 %v3341, %v3342
    %v3344 = vsel %vm3064, %v2998, -inf
    %v3345 = vsel %vm3064, %v2999, -inf
    %v3346 = vmax.f32 %v3344, %v3345
    %v3347 = vrot.slane %v3346, 4
    %v3348 = vmax.f32 %v3346, %v3347
    %v3349 = vrot.slane %v3348, 2
    %v3350 = vmax.f32 %v3348, %v3349
    %v3351 = vrot.slane %v3350, 1
    %v3352 = vmax.f32 %v3350, %v3351
    %v3353 = vsel %vm3064, %v3000, -inf
    %v3354 = vsel %vm3064, %v3001, -inf
    %v3355 = vmax.f32 %v3353, %v3354
    %v3356 = vrot.slane %v3355, 4
    %v3357 = vmax.f32 %v3355, %v3356
    %v3358 = vrot.slane %v3357, 2
    %v3359 = vmax.f32 %v3357, %v3358
    %v3360 = vrot.slane %v3359, 1
    %v3361 = vmax.f32 %v3359, %v3360
    %v3362 = vsel %vm3064, %v3002, -inf
    %v3363 = vsel %vm3064, %v3003, -inf
    %v3364 = vmax.f32 %v3362, %v3363
    %v3365 = vrot.slane %v3364, 4
    %v3366 = vmax.f32 %v3364, %v3365
    %v3367 = vrot.slane %v3366, 2
    %v3368 = vmax.f32 %v3366, %v3367
    %v3369 = vrot.slane %v3368, 1
    %v3370 = vmax.f32 %v3368, %v3369
    %v3371 = vsel %vm3064, %v3004, -inf
    %v3372 = vsel %vm3064, %v3005, -inf
    %v3373 = vmax.f32 %v3371, %v3372
    %v3374 = vrot.slane %v3373, 4
    %v3375 = vmax.f32 %v3373, %v3374
    %v3376 = vrot.slane %v3375, 2
    %v3377 = vmax.f32 %v3375, %v3376
    %v3378 = vrot.slane %v3377, 1
    %v3379 = vmax.f32 %v3377, %v3378
    %v3380 = vsel %vm3064, %v3006, -inf
    %v3381 = vsel %vm3064, %v3007, -inf
    %v3382 = vmax.f32 %v3380, %v3381
    %v3383 = vrot.slane %v3382, 4
    %v3384 = vmax.f32 %v3382, %v3383
    %v3385 = vrot.slane %v3384, 2
    %v3386 = vmax.f32 %v3384, %v3385
    %v3387 = vrot.slane %v3386, 1
    %v3388 = vmax.f32 %v3386, %v3387
    %v3389 = vsel %vm3064, %v3008, -inf
    %v3390 = vsel %vm3064, %v3009, -inf
    %v3391 = vmax.f32 %v3389, %v3390
    %v3392 = vrot.slane %v3391, 4
    %v3393 = vmax.f32 %v3391, %v3392
    %v3394 = vrot.slane %v3393, 2
    %v3395 = vmax.f32 %v3393, %v3394
    %v3396 = vrot.slane %v3395, 1
    %v3397 = vmax.f32 %v3395, %v3396
    %v3398 = vsel %vm3064, %v3010, -inf
    %v3399 = vsel %vm3064, %v3011, -inf
    %v3400 = vmax.f32 %v3398, %v3399
    %v3401 = vrot.slane %v3400, 4
    %v3402 = vmax.f32 %v3400, %v3401
    %v3403 = vrot.slane %v3402, 2
    %v3404 = vmax.f32 %v3402, %v3403
    %v3405 = vrot.slane %v3404, 1
    %v3406 = vmax.f32 %v3404, %v3405
    %v3407 = vsel %vm3064, %v3012, -inf
    %v3408 = vsel %vm3064, %v3013, -inf
    %v3409 = vmax.f32 %v3407, %v3408
    %v3410 = vrot.slane %v3409, 4
    %v3411 = vmax.f32 %v3409, %v3410
    %v3412 = vrot.slane %v3411, 2
    %v3413 = vmax.f32 %v3411, %v3412
    %v3414 = vrot.slane %v3413, 1
    %v3415 = vmax.f32 %v3413, %v3414
    %v3416 = vsel %vm3064, %v3014, -inf
    %v3417 = vsel %vm3064, %v3015, -inf
    %v3418 = vmax.f32 %v3416, %v3417
    %v3419 = vrot.slane %v3418, 4
    %v3420 = vmax.f32 %v3418, %v3419
    %v3421 = vrot.slane %v3420, 2
    %v3422 = vmax.f32 %v3420, %v3421
    %v3423 = vrot.slane %v3422, 1
    %v3424 = vmax.f32 %v3422, %v3423
    %v3425 = vsel %vm3064, %v3016, -inf
    %v3426 = vsel %vm3064, %v3017, -inf
    %v3427 = vmax.f32 %v3425, %v3426
    %v3428 = vrot.slane %v3427, 4
    %v3429 = vmax.f32 %v3427, %v3428
    %v3430 = vrot.slane %v3429, 2
    %v3431 = vmax.f32 %v3429, %v3430
    %v3432 = vrot.slane %v3431, 1
    %v3433 = vmax.f32 %v3431, %v3432
    %v3434 = vsel %vm3064, %v3018, -inf
    %v3435 = vsel %vm3064, %v3019, -inf
    %v3436 = vmax.f32 %v3434, %v3435
    %v3437 = vrot.slane %v3436, 4
    %v3438 = vmax.f32 %v3436, %v3437
    %v3439 = vrot.slane %v3438, 2
    %v3440 = vmax.f32 %v3438, %v3439
    %v3441 = vrot.slane %v3440, 1
    %v3442 = vmax.f32 %v3440, %v3441
    %v3443 = vsel %vm3064, %v3020, -inf
    %v3444 = vsel %vm3064, %v3021, -inf
    %v3445 = vmax.f32 %v3443, %v3444
    %v3446 = vrot.slane %v3445, 4
    %v3447 = vmax.f32 %v3445, %v3446
    %v3448 = vrot.slane %v3447, 2
    %v3449 = vmax.f32 %v3447, %v3448
    %v3450 = vrot.slane %v3449, 1
    %v3451 = vmax.f32 %v3449, %v3450
    %v3452 = vsel %vm3064, %v3022, -inf
    %v3453 = vsel %vm3064, %v3023, -inf
    %v3454 = vmax.f32 %v3452, %v3453
    %v3455 = vrot.slane %v3454, 4
    %v3456 = vmax.f32 %v3454, %v3455
    %v3457 = vrot.slane %v3456, 2
    %v3458 = vmax.f32 %v3456, %v3457
    %v3459 = vrot.slane %v3458, 1
    %v3460 = vmax.f32 %v3458, %v3459
    %v3461 = vsel %vm3064, %v3024, -inf
    %v3462 = vsel %vm3064, %v3025, -inf
    %v3463 = vmax.f32 %v3461, %v3462
    %v3464 = vrot.slane %v3463, 4
    %v3465 = vmax.f32 %v3463, %v3464
    %v3466 = vrot.slane %v3465, 2
    %v3467 = vmax.f32 %v3465, %v3466
    %v3468 = vrot.slane %v3467, 1
    %v3469 = vmax.f32 %v3467, %v3468
    %v3470 = vsel %vm3064, %v3026, -inf
    %v3471 = vsel %vm3064, %v3027, -inf
    %v3472 = vmax.f32 %v3470, %v3471
    %v3473 = vrot.slane %v3472, 4
    %v3474 = vmax.f32 %v3472, %v3473
    %v3475 = vrot.slane %v3474, 2
    %v3476 = vmax.f32 %v3474, %v3475
    %v3477 = vrot.slane %v3476, 1
    %v3478 = vmax.f32 %v3476, %v3477
    %v3479 = vsel %vm3064, %v3028, -inf
    %v3480 = vsel %vm3064, %v3029, -inf
    %v3481 = vmax.f32 %v3479, %v3480
    %v3482 = vrot.slane %v3481, 4
    %v3483 = vmax.f32 %v3481, %v3482
    %v3484 = vrot.slane %v3483, 2
    %v3485 = vmax.f32 %v3483, %v3484
    %v3486 = vrot.slane %v3485, 1
    %v3487 = vmax.f32 %v3485, %v3486
    %v3488 = vsel %vm3064, %v3030, -inf
    %v3489 = vsel %vm3064, %v3031, -inf
    %v3490 = vmax.f32 %v3488, %v3489
    %v3491 = vrot.slane %v3490, 4
    %v3492 = vmax.f32 %v3490, %v3491
    %v3493 = vrot.slane %v3492, 2
    %v3494 = vmax.f32 %v3492, %v3493
    %v3495 = vrot.slane %v3494, 1
    %v3496 = vmax.f32 %v3494, %v3495
    %v3497 = vsel %vm3064, %v3032, -inf
    %v3498 = vsel %vm3064, %v3033, -inf
    %v3499 = vmax.f32 %v3497, %v3498
    %v3500 = vrot.slane %v3499, 4
    %v3501 = vmax.f32 %v3499, %v3500
    %v3502 = vrot.slane %v3501, 2
    %v3503 = vmax.f32 %v3501, %v3502
    %v3504 = vrot.slane %v3503, 1
    %v3505 = vmax.f32 %v3503, %v3504
    %v3506 = vsel %vm3064, %v3034, -inf
    %v3507 = vsel %vm3064, %v3035, -inf
    %v3508 = vmax.f32 %v3506, %v3507
    %v3509 = vrot.slane %v3508, 4
    %v3510 = vmax.f32 %v3508, %v3509
    %v3511 = vrot.slane %v3510, 2
    %v3512 = vmax.f32 %v3510, %v3511
    %v3513 = vrot.slane %v3512, 1
    %v3514 = vmax.f32 %v3512, %v3513
    %v3515 = vsel %vm3064, %v3036, -inf
    %v3516 = vsel %vm3064, %v3037, -inf
    %v3517 = vmax.f32 %v3515, %v3516
    %v3518 = vrot.slane %v3517, 4
    %v3519 = vmax.f32 %v3517, %v3518
    %v3520 = vrot.slane %v3519, 2
    %v3521 = vmax.f32 %v3519, %v3520
    %v3522 = vrot.slane %v3521, 1
    %v3523 = vmax.f32 %v3521, %v3522
    %v3524 = vsel %vm3064, %v3038, -inf
    %v3525 = vsel %vm3064, %v3039, -inf
    %v3526 = vmax.f32 %v3524, %v3525
    %v3527 = vrot.slane %v3526, 4
    %v3528 = vmax.f32 %v3526, %v3527
    %v3529 = vrot.slane %v3528, 2
    %v3530 = vmax.f32 %v3528, %v3529
    %v3531 = vrot.slane %v3530, 1
    %v3532 = vmax.f32 %v3530, %v3531
    %v3533 = vsel %vm3064, %v3040, -inf
    %v3534 = vsel %vm3064, %v3041, -inf
    %v3535 = vmax.f32 %v3533, %v3534
    %v3536 = vrot.slane %v3535, 4
    %v3537 = vmax.f32 %v3535, %v3536
    %v3538 = vrot.slane %v3537, 2
    %v3539 = vmax.f32 %v3537, %v3538
    %v3540 = vrot.slane %v3539, 1
    %v3541 = vmax.f32 %v3539, %v3540
    %v3542 = vsel %vm3064, %v3042, -inf
    %v3543 = vsel %vm3064, %v3043, -inf
    %v3544 = vmax.f32 %v3542, %v3543
    %v3545 = vrot.slane %v3544, 4
    %v3546 = vmax.f32 %v3544, %v3545
    %v3547 = vrot.slane %v3546, 2
    %v3548 = vmax.f32 %v3546, %v3547
    %v3549 = vrot.slane %v3548, 1
    %v3550 = vmax.f32 %v3548, %v3549
    %v3551 = vsel %vm3064, %v3044, -inf
    %v3552 = vsel %vm3064, %v3045, -inf
    %v3553 = vmax.f32 %v3551, %v3552
    %v3554 = vrot.slane %v3553, 4
    %v3555 = vmax.f32 %v3553, %v3554
    %v3556 = vrot.slane %v3555, 2
    %v3557 = vmax.f32 %v3555, %v3556
    %v3558 = vrot.slane %v3557, 1
    %v3559 = vmax.f32 %v3557, %v3558
    %v3560 = vsel %vm3064, %v3046, -inf
    %v3561 = vsel %vm3064, %v3047, -inf
    %v3562 = vmax.f32 %v3560, %v3561
    %v3563 = vrot.slane %v3562, 4
    %v3564 = vmax.f32 %v3562, %v3563
    %v3565 = vrot.slane %v3564, 2
    %v3566 = vmax.f32 %v3564, %v3565
    %v3567 = vrot.slane %v3566, 1
    %v3568 = vmax.f32 %v3566, %v3567
    %v3569 = vsel %vm3064, %v3048, -inf
    %v3570 = vsel %vm3064, %v3049, -inf
    %v3571 = vmax.f32 %v3569, %v3570
    %v3572 = vrot.slane %v3571, 4
    %v3573 = vmax.f32 %v3571, %v3572
    %v3574 = vrot.slane %v3573, 2
    %v3575 = vmax.f32 %v3573, %v3574
    %v3576 = vrot.slane %v3575, 1
    %v3577 = vmax.f32 %v3575, %v3576
    %v3578 = vsel %vm3064, %v3050, -inf
    %v3579 = vsel %vm3064, %v3051, -inf
    %v3580 = vmax.f32 %v3578, %v3579
    %v3581 = vrot.slane %v3580, 4
    %v3582 = vmax.f32 %v3580, %v3581
    %v3583 = vrot.slane %v3582, 2
    %v3584 = vmax.f32 %v3582, %v3583
    %v3585 = vrot.slane %v3584, 1
    %v3586 = vmax.f32 %v3584, %v3585
    %v3587 = vsel %vm3064, %v3052, -inf
    %v3588 = vsel %vm3064, %v3053, -inf
    %v3589 = vmax.f32 %v3587, %v3588
    %v3590 = vrot.slane %v3589, 4
    %v3591 = vmax.f32 %v3589, %v3590
    %v3592 = vrot.slane %v3591, 2
    %v3593 = vmax.f32 %v3591, %v3592
    %v3594 = vrot.slane %v3593, 1
    %v3595 = vmax.f32 %v3593, %v3594
    %v3596 = vsel %vm3064, %v3054, -inf
    %v3597 = vsel %vm3064, %v3055, -inf
    %v3598 = vmax.f32 %v3596, %v3597
    %v3599 = vrot.slane %v3598, 4
    %v3600 = vmax.f32 %v3598, %v3599
    %v3601 = vrot.slane %v3600, 2
    %v3602 = vmax.f32 %v3600, %v3601
    %v3603 = vrot.slane %v3602, 1
    %v3604 = vmax.f32 %v3602, %v3603
    %v3605 = vsel %vm3064, %v3056, -inf
    %v3606 = vsel %vm3064, %v3057, -inf
    %v3607 = vmax.f32 %v3605, %v3606
    %v3608 = vrot.slane %v3607, 4
    %v3609 = vmax.f32 %v3607, %v3608
    %v3610 = vrot.slane %v3609, 2
    %v3611 = vmax.f32 %v3609, %v3610
    %v3612 = vrot.slane %v3611, 1
    %v3613 = vmax.f32 %v3611, %v3612
    %v3614 = vsel %vm3064, %v3058, -inf
    %v3615 = vsel %vm3064, %v3059, -inf
    %v3616 = vmax.f32 %v3614, %v3615
    %v3617 = vrot.slane %v3616, 4
    %v3618 = vmax.f32 %v3616, %v3617
    %v3619 = vrot.slane %v3618, 2
    %v3620 = vmax.f32 %v3618, %v3619
    %v3621 = vrot.slane %v3620, 1
    %v3622 = vmax.f32 %v3620, %v3621
    %v3623 = vsel %vm3064, %v3060, -inf
    %v3624 = vsel %vm3064, %v3061, -inf
    %v3625 = vmax.f32 %v3623, %v3624
    %v3626 = vrot.slane %v3625, 4
    %v3627 = vmax.f32 %v3625, %v3626
    %v3628 = vrot.slane %v3627, 2
    %v3629 = vmax.f32 %v3627, %v3628
    %v3630 = vrot.slane %v3629, 1
    %v3631 = vmax.f32 %v3629, %v3630
    %v3632 = vsel %vm3064, %v3062, -inf
    %v3633 = vsel %vm3064, %v3063, -inf
    %v3634 = vmax.f32 %v3632, %v3633
    %v3635 = vrot.slane %v3634, 4
    %v3636 = vmax.f32 %v3634, %v3635
    %v3637 = vrot.slane %v3636, 2
    %v3638 = vmax.f32 %v3636, %v3637
    %v3639 = vrot.slane %v3638, 1
    %v3640 = vmax.f32 %v3638, %v3639
    %v3641 = vpack.c.bf16 %v3073, %v3073
    %v3642 = vpack.c.bf16 %v3082, %v3082
    %v3643 = vpack.c.bf16 %v3091, %v3091
    %v3644 = vpack.c.bf16 %v3100, %v3100
    %v3645 = vpack.c.bf16 %v3109, %v3109
    %v3646 = vpack.c.bf16 %v3118, %v3118
    %v3647 = vpack.c.bf16 %v3127, %v3127
    %v3648 = vpack.c.bf16 %v3136, %v3136
    %v3649 = vpack.c.bf16 %v3145, %v3145
    %v3650 = vpack.c.bf16 %v3154, %v3154
    %v3651 = vpack.c.bf16 %v3163, %v3163
    %v3652 = vpack.c.bf16 %v3172, %v3172
    %v3653 = vpack.c.bf16 %v3181, %v3181
    %v3654 = vpack.c.bf16 %v3190, %v3190
    %v3655 = vpack.c.bf16 %v3199, %v3199
    %v3656 = vpack.c.bf16 %v3208, %v3208
    %v3657 = vpack.c.bf16 %v3217, %v3217
    %v3658 = vpack.c.bf16 %v3226, %v3226
    %v3659 = vpack.c.bf16 %v3235, %v3235
    %v3660 = vpack.c.bf16 %v3244, %v3244
    %v3661 = vpack.c.bf16 %v3253, %v3253
    %v3662 = vpack.c.bf16 %v3262, %v3262
    %v3663 = vpack.c.bf16 %v3271, %v3271
    %v3664 = vpack.c.bf16 %v3280, %v3280
    %v3665 = vpack.c.bf16 %v3289, %v3289
    %v3666 = vpack.c.bf16 %v3298, %v3298
    %v3667 = vpack.c.bf16 %v3307, %v3307
    %v3668 = vpack.c.bf16 %v3316, %v3316
    %v3669 = vpack.c.bf16 %v3325, %v3325
    %v3670 = vpack.c.bf16 %v3334, %v3334
    %v3671 = vpack.c.bf16 %v3343, %v3343
    %v3672 = vpack.c.bf16 %v3352, %v3352
    %v3673 = vpack.c.bf16 %v3361, %v3361
    %v3674 = vpack.c.bf16 %v3370, %v3370
    %v3675 = vpack.c.bf16 %v3379, %v3379
    %v3676 = vpack.c.bf16 %v3388, %v3388
    %v3677 = vpack.c.bf16 %v3397, %v3397
    %v3678 = vpack.c.bf16 %v3406, %v3406
    %v3679 = vpack.c.bf16 %v3415, %v3415
    %v3680 = vpack.c.bf16 %v3424, %v3424
    %v3681 = vpack.c.bf16 %v3433, %v3433
    %v3682 = vpack.c.bf16 %v3442, %v3442
    %v3683 = vpack.c.bf16 %v3451, %v3451
    %v3684 = vpack.c.bf16 %v3460, %v3460
    %v3685 = vpack.c.bf16 %v3469, %v3469
    %v3686 = vpack.c.bf16 %v3478, %v3478
    %v3687 = vpack.c.bf16 %v3487, %v3487
    %v3688 = vpack.c.bf16 %v3496, %v3496
    %v3689 = vpack.c.bf16 %v3505, %v3505
    %v3690 = vpack.c.bf16 %v3514, %v3514
    %v3691 = vpack.c.bf16 %v3523, %v3523
    %v3692 = vpack.c.bf16 %v3532, %v3532
    %v3693 = vpack.c.bf16 %v3541, %v3541
    %v3694 = vpack.c.bf16 %v3550, %v3550
    %v3695 = vpack.c.bf16 %v3559, %v3559
    %v3696 = vpack.c.bf16 %v3568, %v3568
    %v3697 = vpack.c.bf16 %v3577, %v3577
    %v3698 = vpack.c.bf16 %v3586, %v3586
    %v3699 = vpack.c.bf16 %v3595, %v3595
    %v3700 = vpack.c.bf16 %v3604, %v3604
    %v3701 = vpack.c.bf16 %v3613, %v3613
    %v3702 = vpack.c.bf16 %v3622, %v3622
    %v3703 = vpack.c.bf16 %v3631, %v3631
    %v3704 = vpack.c.bf16 %v3640, %v3640
    %v3769 = vunpack.c.l.b16 %v3641
    %v3770 = vunpack.c.l.b16 %v3642
    %v3771 = vunpack.c.l.b16 %v3643
    %v3772 = vunpack.c.l.b16 %v3644
    %v3773 = vunpack.c.l.b16 %v3645
    %v3774 = vunpack.c.l.b16 %v3646
    %v3775 = vunpack.c.l.b16 %v3647
    %v3776 = vunpack.c.l.b16 %v3648
    %v3777 = vunpack.c.l.b16 %v3649
    %v3778 = vunpack.c.l.b16 %v3650
    %v3779 = vunpack.c.l.b16 %v3651
    %v3780 = vunpack.c.l.b16 %v3652
    %v3781 = vunpack.c.l.b16 %v3653
    %v3782 = vunpack.c.l.b16 %v3654
    %v3783 = vunpack.c.l.b16 %v3655
    %v3784 = vunpack.c.l.b16 %v3656
    %v3785 = vunpack.c.l.b16 %v3657
    %v3786 = vunpack.c.l.b16 %v3658
    %v3787 = vunpack.c.l.b16 %v3659
    %v3788 = vunpack.c.l.b16 %v3660
    %v3789 = vunpack.c.l.b16 %v3661
    %v3790 = vunpack.c.l.b16 %v3662
    %v3791 = vunpack.c.l.b16 %v3663
    %v3792 = vunpack.c.l.b16 %v3664
    %v3793 = vunpack.c.l.b16 %v3665
    %v3794 = vunpack.c.l.b16 %v3666
    %v3795 = vunpack.c.l.b16 %v3667
    %v3796 = vunpack.c.l.b16 %v3668
    %v3797 = vunpack.c.l.b16 %v3669
    %v3798 = vunpack.c.l.b16 %v3670
    %v3799 = vunpack.c.l.b16 %v3671
    %v3800 = vunpack.c.l.b16 %v3672
    %v3801 = vunpack.c.l.b16 %v3673
    %v3802 = vunpack.c.l.b16 %v3674
    %v3803 = vunpack.c.l.b16 %v3675
    %v3804 = vunpack.c.l.b16 %v3676
    %v3805 = vunpack.c.l.b16 %v3677
    %v3806 = vunpack.c.l.b16 %v3678
    %v3807 = vunpack.c.l.b16 %v3679
    %v3808 = vunpack.c.l.b16 %v3680
    %v3809 = vunpack.c.l.b16 %v3681
    %v3810 = vunpack.c.l.b16 %v3682
    %v3811 = vunpack.c.l.b16 %v3683
    %v3812 = vunpack.c.l.b16 %v3684
    %v3813 = vunpack.c.l.b16 %v3685
    %v3814 = vunpack.c.l.b16 %v3686
    %v3815 = vunpack.c.l.b16 %v3687
    %v3816 = vunpack.c.l.b16 %v3688
    %v3817 = vunpack.c.l.b16 %v3689
    %v3818 = vunpack.c.l.b16 %v3690
    %v3819 = vunpack.c.l.b16 %v3691
    %v3820 = vunpack.c.l.b16 %v3692
    %v3821 = vunpack.c.l.b16 %v3693
    %v3822 = vunpack.c.l.b16 %v3694
    %v3823 = vunpack.c.l.b16 %v3695
    %v3824 = vunpack.c.l.b16 %v3696
    %v3825 = vunpack.c.l.b16 %v3697
    %v3826 = vunpack.c.l.b16 %v3698
    %v3827 = vunpack.c.l.b16 %v3699
    %v3828 = vunpack.c.l.b16 %v3700
    %v3829 = vunpack.c.l.b16 %v3701
    %v3830 = vunpack.c.l.b16 %v3702
    %v3831 = vunpack.c.l.b16 %v3703
    %v3832 = vunpack.c.l.b16 %v3704
    %v3833 = vpack.c.b16 %v3769, %v3769
    %v3834 = vpack.c.b16 %v3770, %v3770
    %v3835 = vpack.c.b16 %v3771, %v3771
    %v3836 = vpack.c.b16 %v3772, %v3772
    %v3837 = vpack.c.b16 %v3773, %v3773
    %v3838 = vpack.c.b16 %v3774, %v3774
    %v3839 = vpack.c.b16 %v3775, %v3775
    %v3840 = vpack.c.b16 %v3776, %v3776
    %v3841 = vpack.c.b16 %v3777, %v3777
    %v3842 = vpack.c.b16 %v3778, %v3778
    %v3843 = vpack.c.b16 %v3779, %v3779
    %v3844 = vpack.c.b16 %v3780, %v3780
    %v3845 = vpack.c.b16 %v3781, %v3781
    %v3846 = vpack.c.b16 %v3782, %v3782
    %v3847 = vpack.c.b16 %v3783, %v3783
    %v3848 = vpack.c.b16 %v3784, %v3784
    %v3849 = vpack.c.b16 %v3785, %v3785
    %v3850 = vpack.c.b16 %v3786, %v3786
    %v3851 = vpack.c.b16 %v3787, %v3787
    %v3852 = vpack.c.b16 %v3788, %v3788
    %v3853 = vpack.c.b16 %v3789, %v3789
    %v3854 = vpack.c.b16 %v3790, %v3790
    %v3855 = vpack.c.b16 %v3791, %v3791
    %v3856 = vpack.c.b16 %v3792, %v3792
    %v3857 = vpack.c.b16 %v3793, %v3793
    %v3858 = vpack.c.b16 %v3794, %v3794
    %v3859 = vpack.c.b16 %v3795, %v3795
    %v3860 = vpack.c.b16 %v3796, %v3796
    %v3861 = vpack.c.b16 %v3797, %v3797
    %v3862 = vpack.c.b16 %v3798, %v3798
    %v3863 = vpack.c.b16 %v3799, %v3799
    %v3864 = vpack.c.b16 %v3800, %v3800
    %v3865 = vpack.c.b16 %v3801, %v3801
    %v3866 = vpack.c.b16 %v3802, %v3802
    %v3867 = vpack.c.b16 %v3803, %v3803
    %v3868 = vpack.c.b16 %v3804, %v3804
    %v3869 = vpack.c.b16 %v3805, %v3805
    %v3870 = vpack.c.b16 %v3806, %v3806
    %v3871 = vpack.c.b16 %v3807, %v3807
    %v3872 = vpack.c.b16 %v3808, %v3808
    %v3873 = vpack.c.b16 %v3809, %v3809
    %v3874 = vpack.c.b16 %v3810, %v3810
    %v3875 = vpack.c.b16 %v3811, %v3811
    %v3876 = vpack.c.b16 %v3812, %v3812
    %v3877 = vpack.c.b16 %v3813, %v3813
    %v3878 = vpack.c.b16 %v3814, %v3814
    %v3879 = vpack.c.b16 %v3815, %v3815
    %v3880 = vpack.c.b16 %v3816, %v3816
    %v3881 = vpack.c.b16 %v3817, %v3817
    %v3882 = vpack.c.b16 %v3818, %v3818
    %v3883 = vpack.c.b16 %v3819, %v3819
    %v3884 = vpack.c.b16 %v3820, %v3820
    %v3885 = vpack.c.b16 %v3821, %v3821
    %v3886 = vpack.c.b16 %v3822, %v3822
    %v3887 = vpack.c.b16 %v3823, %v3823
    %v3888 = vpack.c.b16 %v3824, %v3824
    %v3889 = vpack.c.b16 %v3825, %v3825
    %v3890 = vpack.c.b16 %v3826, %v3826
    %v3891 = vpack.c.b16 %v3827, %v3827
    %v3892 = vpack.c.b16 %v3828, %v3828
    %v3893 = vpack.c.b16 %v3829, %v3829
    %v3894 = vpack.c.b16 %v3830, %v3830
    %v3895 = vpack.c.b16 %v3831, %v3831
    %v3896 = vpack.c.b16 %v3832, %v3832
    %v3897 = vunpack.c.l.b16 %v3833
    %v3898 = vunpack.c.l.b16 %v3834
    %v3899 = vunpack.c.l.b16 %v3835
    %v3900 = vunpack.c.l.b16 %v3836
    %v3901 = vunpack.c.l.b16 %v3837
    %v3902 = vunpack.c.l.b16 %v3838
    %v3903 = vunpack.c.l.b16 %v3839
    %v3904 = vunpack.c.l.b16 %v3840
    %v3905 = vunpack.c.l.b16 %v3841
    %v3906 = vunpack.c.l.b16 %v3842
    %v3907 = vunpack.c.l.b16 %v3843
    %v3908 = vunpack.c.l.b16 %v3844
    %v3909 = vunpack.c.l.b16 %v3845
    %v3910 = vunpack.c.l.b16 %v3846
    %v3911 = vunpack.c.l.b16 %v3847
    %v3912 = vunpack.c.l.b16 %v3848
    %v3913 = vunpack.c.l.b16 %v3849
    %v3914 = vunpack.c.l.b16 %v3850
    %v3915 = vunpack.c.l.b16 %v3851
    %v3916 = vunpack.c.l.b16 %v3852
    %v3917 = vunpack.c.l.b16 %v3853
    %v3918 = vunpack.c.l.b16 %v3854
    %v3919 = vunpack.c.l.b16 %v3855
    %v3920 = vunpack.c.l.b16 %v3856
    %v3921 = vunpack.c.l.b16 %v3857
    %v3922 = vunpack.c.l.b16 %v3858
    %v3923 = vunpack.c.l.b16 %v3859
    %v3924 = vunpack.c.l.b16 %v3860
    %v3925 = vunpack.c.l.b16 %v3861
    %v3926 = vunpack.c.l.b16 %v3862
    %v3927 = vunpack.c.l.b16 %v3863
    %v3928 = vunpack.c.l.b16 %v3864
    %v3929 = vunpack.c.l.b16 %v3865
    %v3930 = vunpack.c.l.b16 %v3866
    %v3931 = vunpack.c.l.b16 %v3867
    %v3932 = vunpack.c.l.b16 %v3868
    %v3933 = vunpack.c.l.b16 %v3869
    %v3934 = vunpack.c.l.b16 %v3870
    %v3935 = vunpack.c.l.b16 %v3871
    %v3936 = vunpack.c.l.b16 %v3872
    %v3937 = vunpack.c.l.b16 %v3873
    %v3938 = vunpack.c.l.b16 %v3874
    %v3939 = vunpack.c.l.b16 %v3875
    %v3940 = vunpack.c.l.b16 %v3876
    %v3941 = vunpack.c.l.b16 %v3877
    %v3942 = vunpack.c.l.b16 %v3878
    %v3943 = vunpack.c.l.b16 %v3879
    %v3944 = vunpack.c.l.b16 %v3880
    %v3945 = vunpack.c.l.b16 %v3881
    %v3946 = vunpack.c.l.b16 %v3882
    %v3947 = vunpack.c.l.b16 %v3883
    %v3948 = vunpack.c.l.b16 %v3884
    %v3949 = vunpack.c.l.b16 %v3885
    %v3950 = vunpack.c.l.b16 %v3886
    %v3951 = vunpack.c.l.b16 %v3887
    %v3952 = vunpack.c.l.b16 %v3888
    %v3953 = vunpack.c.l.b16 %v3889
    %v3954 = vunpack.c.l.b16 %v3890
    %v3955 = vunpack.c.l.b16 %v3891
    %v3956 = vunpack.c.l.b16 %v3892
    %v3957 = vunpack.c.l.b16 %v3893
    %v3958 = vunpack.c.l.b16 %v3894
    %v3959 = vunpack.c.l.b16 %v3895
    %v3960 = vunpack.c.l.b16 %v3896
    %vm3961 = vcmask 1041409
    %v3962 = vsel %vm3961, %v3898, %v3897
    %vm3963 = vcmask 1042434
    %v3964 = vsel %vm3963, %v3899, %v3962
    %vm3965 = vcmask 1043459
    %v3966 = vsel %vm3965, %v3900, %v3964
    %vm3967 = vcmask 1044484
    %v3968 = vsel %vm3967, %v3901, %v3966
    %vm3969 = vcmask 1045509
    %v3970 = vsel %vm3969, %v3902, %v3968
    %vm3971 = vcmask 1046534
    %v3972 = vsel %vm3971, %v3903, %v3970
    %vm3973 = vcmask 1047559
    %v3974 = vsel %vm3973, %v3904, %v3972
    %v3975 = vsel %vm3961, %v3906, %v3905
    %v3976 = vsel %vm3963, %v3907, %v3975
    %v3977 = vsel %vm3965, %v3908, %v3976
    %v3978 = vsel %vm3967, %v3909, %v3977
    %v3979 = vsel %vm3969, %v3910, %v3978
    %v3980 = vsel %vm3971, %v3911, %v3979
    %v3981 = vsel %vm3973, %v3912, %v3980
    %v3982 = vsel %vm3961, %v3914, %v3913
    %v3983 = vsel %vm3963, %v3915, %v3982
    %v3984 = vsel %vm3965, %v3916, %v3983
    %v3985 = vsel %vm3967, %v3917, %v3984
    %v3986 = vsel %vm3969, %v3918, %v3985
    %v3987 = vsel %vm3971, %v3919, %v3986
    %v3988 = vsel %vm3973, %v3920, %v3987
    %v3989 = vsel %vm3961, %v3922, %v3921
    %v3990 = vsel %vm3963, %v3923, %v3989
    %v3991 = vsel %vm3965, %v3924, %v3990
    %v3992 = vsel %vm3967, %v3925, %v3991
    %v3993 = vsel %vm3969, %v3926, %v3992
    %v3994 = vsel %vm3971, %v3927, %v3993
    %v3995 = vsel %vm3973, %v3928, %v3994
    %v3996 = vsel %vm3961, %v3930, %v3929
    %v3997 = vsel %vm3963, %v3931, %v3996
    %v3998 = vsel %vm3965, %v3932, %v3997
    %v3999 = vsel %vm3967, %v3933, %v3998
    %v4000 = vsel %vm3969, %v3934, %v3999
    %v4001 = vsel %vm3971, %v3935, %v4000
    %v4002 = vsel %vm3973, %v3936, %v4001
    %v4003 = vsel %vm3961, %v3938, %v3937
    %v4004 = vsel %vm3963, %v3939, %v4003
    %v4005 = vsel %vm3965, %v3940, %v4004
    %v4006 = vsel %vm3967, %v3941, %v4005
    %v4007 = vsel %vm3969, %v3942, %v4006
    %v4008 = vsel %vm3971, %v3943, %v4007
    %v4009 = vsel %vm3973, %v3944, %v4008
    %v4010 = vsel %vm3961, %v3946, %v3945
    %v4011 = vsel %vm3963, %v3947, %v4010
    %v4012 = vsel %vm3965, %v3948, %v4011
    %v4013 = vsel %vm3967, %v3949, %v4012
    %v4014 = vsel %vm3969, %v3950, %v4013
    %v4015 = vsel %vm3971, %v3951, %v4014
    %v4016 = vsel %vm3973, %v3952, %v4015
    %v4017 = vsel %vm3961, %v3954, %v3953
    %v4018 = vsel %vm3963, %v3955, %v4017
    %v4019 = vsel %vm3965, %v3956, %v4018
    %v4020 = vsel %vm3967, %v3957, %v4019
    %v4021 = vsel %vm3969, %v3958, %v4020
    %v4022 = vsel %vm3971, %v3959, %v4021
    %v4023 = vsel %vm3973, %v3960, %v4022
    %v4024 = vpack.c.b16 %v3974, %v3974
    %v4025 = vpack.c.b16 %v3981, %v3981
    %v4026 = vpack.c.b16 %v3988, %v3988
    %v4027 = vpack.c.b16 %v3995, %v3995
    %v4028 = vpack.c.b16 %v4002, %v4002
    %v4029 = vpack.c.b16 %v4009, %v4009
    %v4030 = vpack.c.b16 %v4016, %v4016
    %v4031 = vpack.c.b16 %v4023, %v4023
    %vm4040 = vcmask 519168
    %4041 = vst.msk [vmem:[#allocation2] sm:$0xf] %vm4040, %v4024
    %4042 = vst.msk [vmem:[#allocation2 + $0x4] sm:$0xf] %vm4040, %v4025
    %4043 = vst.msk [vmem:[#allocation2 + $0x8] sm:$0xf] %vm4040, %v4026
    %4044 = vst.msk [vmem:[#allocation2 + $0xc] sm:$0xf] %vm4040, %v4027
    %4045 = vst.msk [vmem:[#allocation2 + $0x10] sm:$0xf] %vm4040, %v4028
    %4046 = vst.msk [vmem:[#allocation2 + $0x14] sm:$0xf] %vm4040, %v4029
    %4047 = vst.msk [vmem:[#allocation2 + $0x18] sm:$0xf] %vm4040, %v4030
    %4048 = vst.msk [vmem:[#allocation2 + $0x1c] sm:$0xf] %vm4040, %v4031
    // Predicated region
    $region18: #{tpu_custom_call.1} parent=1 // pred_check
      _
    $region19: #{tpu_custom_call.1} parent=1 // pred_check_branch
      %4050 = sbr.rel (0) target = $region21
    $region20: #{tpu_custom_call.1} parent=1 // pred_region
      %s4052 = ssub.s32 512, 512
      %4053 = vsyncadd [#allocation3], %s4052
      %s4054 = sshll.u32 [#allocation2], 4
      %s4055 = int_to_ptr.vmem [resolvable:$true] %s4054
      %4060 = dma.vmem_to_hbm [thread:$0]  %s4055, 512, %s4, [#allocation3], 64, 64, 4
    $region21: #{tpu_custom_call.1} parent=1 // pred_fallthru
      _
    // Predicated region
    $region22: #{tpu_custom_call.1} parent=1 // pred_check
      _
    $region23: #{tpu_custom_call.1} parent=1 // pred_check_branch
      %4062 = sbr.rel (0) target = $region25
    $region24: #{tpu_custom_call.1} parent=1 // pred_region
      %4063 = dma.done [#allocation3], 512
    $region25: #{tpu_custom_call.1} parent=1 // pred_fallthru
      _
    %4064 = vsyncpa [#allocation3], 1

</llo_original>
